<compile_context>
chip_gen: v7x
topology: tpu7x:2x2x1
jax: 0.10.0
libtpu: 0.0.40
codegen_flags: <defaults>
</compile_context>

<pallas_src>
import functools

import jax
import jax.numpy as jnp
from jax import lax
from jax.experimental import pallas as pl
from jax.experimental.pallas import tpu as pltpu


def _round_up(x, m):
    return ((x + m - 1) // m) * m


def _dblock_kernel(x_ref, w1_ref, b1_ref, w2_ref, b2_ref, mask_ref,
                   o_ref, p_ref, y_ref, *,
                   C, M1c, M2c, off, shifts1, shifts2):
    """One (batch, depth-tile) step: two dilated 'same' 3D convs + bias + ReLU, fused.

    x_ref   : (C, X_ext)    bf16  flattened zero-padded input slab (tile_d + 2*halo planes)
    w1_ref  : (C, K^3*C)    bf16  conv1 weights, tap-major / in-channel-minor columns
    b1_ref  : (C, 1)        f32
    w2_ref  : (C, K^3*C)    bf16
    b2_ref  : (C, 1)        f32
    mask_ref: (1, M1c)      f32   1.0 where a conv1 corner-grid column is a real voxel
    o_ref   : (C, M2c)      f32   conv2 output on the tile's (lane-padded) corner grid
    p_ref   : (K^3*C, M1c)  bf16  im2col patch scratch (reused by both convs)
    y_ref   : (C, Y_ext)    bf16  zero-padded intermediate slab, built fully in VMEM
    """

    def fill_patches(src_ref, width, shifts):
        n = len(shifts)
        if C % 16 == 0:
            # C rows are already a whole bf16 sublane tile (16,128) -> plain per-tap stores.
            for t, s in enumerate(shifts):
                p_ref[t * C:(t + 1) * C, :width] = src_ref[:, s:s + width]
        else:
            # Pair taps so each store covers 2*C sublanes (avoids half-tile bf16 RMW stores).
            for t in range(0, n - 1, 2):
                s0, s1 = shifts[t], shifts[t + 1]
                p_ref[t * C:(t + 2) * C, :width] = jnp.concatenate(
                    [src_ref[:, s0:s0 + width], src_ref[:, s1:s1 + width]], axis=0)
            if n % 2:
                s = shifts[n - 1]
                p_ref[(n - 1) * C:n * C, :width] = src_ref[:, s:s + width]

    # ---- conv1: im2col straight from the bf16 input slab, one MXU matmul ----
    fill_patches(x_ref, M1c, shifts1)
    acc1 = jnp.dot(w1_ref[...], p_ref[...], preferred_element_type=jnp.float32)
    h1 = jnp.maximum(acc1 + b1_ref[...], 0.0)
    # where (not multiply) so NaN/Inf garbage in halo columns cannot leak into conv2.
    h1 = jnp.where(mask_ref[...] != 0.0, h1, 0.0)

    # ---- zero-padded intermediate slab (bf16), built in VMEM ----
    # Only the head/tail halo slices need zeroing; the interior window is fully
    # overwritten every step (masked columns already carry conv2's zero padding).
    y_ref[:, :off] = jnp.zeros((C, off), y_ref.dtype)
    tail = y_ref.shape[1] - (off + M1c)
    if tail > 0:
        y_ref[:, off + M1c:] = jnp.zeros((C, tail), y_ref.dtype)
    y_ref[:, off:off + M1c] = h1.astype(y_ref.dtype)   # 128-aligned, full-lane store

    # ---- conv2 ----
    fill_patches(y_ref, M2c, shifts2)
    acc2 = jnp.dot(w2_ref[...], p_ref[:, :M2c], preferred_element_type=jnp.float32)
    o_ref[...] = jnp.maximum(acc2 + b2_ref[...], 0.0)


def _auto_tile_d(D, C, K, pad, Hp, Wp, patch_budget_bytes=28 << 20):
    """Largest depth tile whose bf16 patch buffer fits the budget (v7x-safe), while still
    giving at least two depth tiles so the pipeline has steps to overlap."""
    per_plane = (K ** 3) * C * Hp * Wp * 2            # bf16 bytes per corner-grid plane
    cap = max(1, patch_budget_bytes // per_plane - 2 * pad)
    target = max(1, -(-D // 2))                       # >= 2 tiles whenever D >= 2
    return int(max(1, min(D, cap, target)))


def dblock_com2_forward(x_ncdhw, w1, b1, w2, b2, *, kernel_size=3, dilation=2,
                        tile_d=None):
    """Pallas implementation of DBlock_com2.forward (bias=True, bn=False, act=ReLU)."""
    N, C, D, H, W = x_ncdhw.shape
    K = kernel_size
    assert w1.shape == (C, C, K, K, K) and w2.shape == (C, C, K, K, K), \
        "DBlock_com2 chains conv(in,out) twice, so in_channels must equal out_channels"
    assert K % 2 == 1

    pad = dilation * (K // 2)            # 'same' padding per conv (dilation=2, K=3 -> 2)
    halo = 2 * pad                       # extra corner planes each conv consumes
    Hp, Wp = H + 2 * pad, W + 2 * pad
    HW = Hp * Wp

    if tile_d is None:
        tile_d = _auto_tile_d(D, C, K, pad, Hp, Wp)
    tile_d = max(1, min(int(tile_d), D))
    T = -(-D // tile_d)                  # number of depth tiles

    Td_in = tile_d + 2 * halo            # input slab depth planes per tile
    M1 = (tile_d + halo) * HW            # conv1 corner-grid columns per tile
    M2 = tile_d * HW                     # conv2 (output) corner-grid columns per tile
    M1c = _round_up(M1, 128)             # lane-padded widths (unmasked full-lane stores)
    M2c = _round_up(M2, 128)
    max_shift = dilation * (K - 1) * (HW + Wp + 1)
    X_ext = _round_up(M1c + max_shift, 128)          # flat length of one input slab
    sp_center = pad * Wp + pad                       # in-plane offset of voxel (0,0)
    off = _round_up(max(sp_center, 1), 128)          # 128-aligned placement of h1 in y_ref
    Y_ext = _round_up(max(off + M1c, M2c + max_shift + off - sp_center), 128)

    # Static lane offsets of the K^3 dilated taps on the flattened slabs.
    shifts1 = tuple(dilation * (kd * HW + kh * Wp + kw)
                    for kd in range(K) for kh in range(K) for kw in range(K))
    shifts2 = tuple(s + off - sp_center for s in shifts1)

    # ---- wrapper-side layout plumbing (cheap XLA ops) ----
    xb = x_ncdhw.astype(jnp.bfloat16)
    back_d = halo + (T * tile_d - D)
    xpp = jnp.pad(xb, ((0, 0), (0, 0), (halo, back_d), (pad, pad), (pad, pad)))
    slabs = jnp.stack([xpp[:, :, t * tile_d: t * tile_d + Td_in]
                       for t in range(T)], axis=1)           # (N, T, C, Td_in, Hp, Wp)
    slabs = slabs.reshape(N, T, C, Td_in * HW)
    slabs = jnp.pad(slabs, ((0, 0), (0, 0), (0, 0), (0, X_ext - Td_in * HW)))

    def wmat(w):   # (C, C, K, K, K) -> (C, K^3*C), tap-major / in-channel-minor columns
        return jnp.transpose(w, (0, 2, 3, 4, 1)).reshape(C, K ** 3 * C).astype(jnp.bfloat16)

    w1m, w2m = wmat(w1), wmat(w2)
    b1c = b1.reshape(C, 1).astype(jnp.float32)
    b2c = b2.reshape(C, 1).astype(jnp.float32)

    # Per-tile validity mask of the conv1 corner grid (depth window x (H, W) interior).
    q = jnp.arange(tile_d + halo)
    zglob = q[None, :] + (jnp.arange(T) * tile_d)[:, None] - pad   # global h1 plane index
    dok = ((zglob >= 0) & (zglob < D)).astype(jnp.float32)          # (T, tile_d + halo)
    hwm = jnp.pad(jnp.ones((H, W), jnp.float32), ((0, 2 * pad), (0, 2 * pad)))
    masks = (dok[:, :, None, None] * hwm[None, None]).reshape(T, 1, M1)
    masks = jnp.pad(masks, ((0, 0), (0, 0), (0, M1c - M1)))

    KC = K ** 3 * C
    kernel = functools.partial(_dblock_kernel, C=C, M1c=M1c, M2c=M2c, off=off,
                               shifts1=shifts1, shifts2=shifts2)

    # Explicit VMEM budget (double-buffered blocks + scratch) -> vmem_limit_bytes.
    vmem_est = (2 * C * X_ext * 2          # input slab blocks (bf16, 2 buffers)
                + 2 * C * M2c * 4          # output blocks (f32, 2 buffers)
                + 2 * 2 * C * KC * 2       # both weight matrices
                + 2 * M1c * 4 + 4 * C * 4  # mask + biases
                + KC * M1c * 2             # p_ref scratch (bf16)
                + C * Y_ext * 2)           # y_ref scratch (bf16)
    vmem_limit = int(min(max(2 * vmem_est, 32 << 20), 96 << 20))

    out = pl.pallas_call(
        kernel,
        out_shape=jax.ShapeDtypeStruct((N, T, C, M2c), jnp.float32),
        grid_spec=pltpu.PrefetchScalarGridSpec(
            num_scalar_prefetch=0,
            grid=(N, T),
            in_specs=[
                pl.BlockSpec((None, None, C, X_ext), lambda n, t: (n, t, 0, 0)),
                pl.BlockSpec((C, KC), lambda n, t: (0, 0)),
                pl.BlockSpec((C, 1), lambda n, t: (0, 0)),
                pl.BlockSpec((C, KC), lambda n, t: (0, 0)),
                pl.BlockSpec((C, 1), lambda n, t: (0, 0)),
                pl.BlockSpec((None, 1, M1c), lambda n, t: (t, 0, 0)),
            ],
            out_specs=pl.BlockSpec((None, None, C, M2c), lambda n, t: (n, t, 0, 0)),
            scratch_shapes=[
                pltpu.VMEM((KC, M1c), jnp.bfloat16),   # im2col patches (both convs)
                pltpu.VMEM((C, Y_ext), jnp.bfloat16),  # zero-padded intermediate slab
            ],
        ),
        compiler_params=pltpu.CompilerParams(
            dimension_semantics=("parallel", "parallel"),
            vmem_limit_bytes=vmem_limit,
        ),
    )(slabs, w1m, b1c, w2m, b2c, masks)

    # Crop the per-tile corner grids back to NCDHW (layout plumbing only).
    out = out[..., :M2].reshape(N, T, C, tile_d, Hp, Wp)
    out = jnp.transpose(out, (0, 2, 1, 3, 4, 5)).reshape(N, C, T * tile_d, Hp, Wp)
    return out[:, :, :D, :H, :W]


def _reference(x, w1, b1, w2, b2, *, dilation=2):
    """Pure-JAX reference mirroring the PyTorch module (same bf16 rounding policy)."""
    K = w1.shape[-1]
    pad = dilation * (K // 2)
    rt = lambda a: a.astype(jnp.bfloat16).astype(jnp.float32)

    def conv_relu(inp, w, b):
        y = lax.conv_general_dilated(
            inp, w, window_strides=(1, 1, 1), padding=[(pad, pad)] * 3,
            rhs_dilation=(dilation,) * 3,
            dimension_numbers=("NCDHW", "OIDHW", "NCDHW"))
        return jnp.maximum(y + b.reshape(1, -1, 1, 1, 1).astype(jnp.float32), 0.0)

    h = conv_relu(rt(x), rt(w1), b1)
    h = rt(h)   # kernel stores the intermediate in bf16 before conv2
    return conv_relu(h, rt(w2), b2)


if __name__ == "__main__":
    # Small deterministic problem consistent with the module's forward.
    N, C = 2, 16          # C multiple of 16 -> bf16-tile-aligned im2col slabs
    D, H, W = 8, 8, 8
    K = 3

    key = jax.random.PRNGKey(0)
    kx, kw1, kb1, kw2, kb2 = jax.random.split(key, 5)
    x = jax.random.normal(kx, (N, C, D, H, W), dtype=jnp.float32)
    # Conv3d parameter shapes: weight (Cout, Cin, K, K, K), bias (Cout,)
    w1 = jax.random.normal(kw1, (C, C, K, K, K), dtype=jnp.float32) * 0.1
    b1 = jax.random.normal(kb1, (C,), dtype=jnp.float32) * 0.1
    w2 = jax.random.normal(kw2, (C, C, K, K, K), dtype=jnp.float32) * 0.1
    b2 = jax.random.normal(kb2, (C,), dtype=jnp.float32) * 0.1

    # tile_d=4 -> grid (batch=2, depth_tiles=2) = 4 pipelined steps.
    out = dblock_com2_forward(x, w1, b1, w2, b2, kernel_size=K, dilation=2, tile_d=4)
    out = jax.block_until_ready(out)

    ref = _reference(x, w1, b1, w2, b2, dilation=2)
    assert out.shape == (N, C, D, H, W)
    assert bool(jnp.allclose(out, ref, atol=2e-2, rtol=2e-2)), \
        float(jnp.max(jnp.abs(out - ref)))

    print("KERNEL_OK")
</pallas_src>

<mosaic_0001>
module attributes {stable_mosaic.version = 11 : i64} {
  func.func @_dblock_kernel(%arg0: i32, %arg1: i32, %arg2: memref<1x1x16x1792xbf16, #tpu.memory_space<vmem>>, %arg3: memref<16x432xbf16, #tpu.memory_space<vmem>>, %arg4: memref<16x1xf32, #tpu.memory_space<vmem>>, %arg5: memref<16x432xbf16, #tpu.memory_space<vmem>>, %arg6: memref<16x1xf32, #tpu.memory_space<vmem>>, %arg7: memref<1x1x1152xf32, #tpu.memory_space<vmem>>, %arg8: memref<1x1x16x640xf32, #tpu.memory_space<vmem>>, %arg9: memref<432x1152xbf16, #tpu.memory_space<vmem>>, %arg10: memref<16x1408xbf16, #tpu.memory_space<vmem>>) attributes {dimension_semantics = [#tpu.dimension_semantics<parallel>, #tpu.dimension_semantics<parallel>], iteration_bounds = array<i64: 2, 2>, scalar_prefetch = 0 : i64, scratch_operands = 2 : i64, tpu.core_type = #tpu.core_type<tc>, window_params = [{transform_indices = @transform_0, window_bounds = array<i64: 1, 1, 16, 1792>}, {pipeline_mode = #tpu.pipeline_mode<synchronous>, transform_indices = @transform_1, window_bounds = array<i64: 16, 432>}, {pipeline_mode = #tpu.pipeline_mode<synchronous>, transform_indices = @transform_2, window_bounds = array<i64: 16, 1>}, {pipeline_mode = #tpu.pipeline_mode<synchronous>, transform_indices = @transform_3, window_bounds = array<i64: 16, 432>}, {pipeline_mode = #tpu.pipeline_mode<synchronous>, transform_indices = @transform_4, window_bounds = array<i64: 16, 1>}, {transform_indices = @transform_5, window_bounds = array<i64: 1, 1, 1152>}, {transform_indices = @transform_6, window_bounds = array<i64: 1, 1, 16, 640>}]} {
    %c0 = arith.constant 0 : index
    %c0_0 = arith.constant 0 : index
    %c0_1 = arith.constant 0 : index
    %c0_2 = arith.constant 0 : index
    %0 = vector.load %arg2[%c0, %c0_0, %c0_1, %c0_2] : memref<1x1x16x1792xbf16, #tpu.memory_space<vmem>>, vector<1x1x16x1152xbf16>
    %1 = vector.shape_cast %0 : vector<1x1x16x1152xbf16> to vector<16x1152xbf16>
    %c0_3 = arith.constant 0 : index
    %c0_4 = arith.constant 0 : index
    %2 = vector.load %arg9[%c0_3, %c0_4] : memref<432x1152xbf16, #tpu.memory_space<vmem>>, vector<16x1152xbf16>
    tpu.vector_store %arg9[%c0_3, %c0_4], %1 {strides = array<i32>} : memref<432x1152xbf16, #tpu.memory_space<vmem>>, vector<16x1152xbf16>,
    %c0_5 = arith.constant 0 : index
    %c0_6 = arith.constant 0 : index
    %c0_7 = arith.constant 0 : index
    %c2 = arith.constant 2 : index
    %3 = vector.load %arg2[%c0_5, %c0_6, %c0_7, %c2] : memref<1x1x16x1792xbf16, #tpu.memory_space<vmem>>, vector<1x1x16x1152xbf16>
    %4 = vector.shape_cast %3 : vector<1x1x16x1152xbf16> to vector<16x1152xbf16>
    %c16 = arith.constant 16 : index
    %c0_8 = arith.constant 0 : index
    %5 = vector.load %arg9[%c16, %c0_8] : memref<432x1152xbf16, #tpu.memory_space<vmem>>, vector<16x1152xbf16>
    tpu.vector_store %arg9[%c16, %c0_8], %4 {strides = array<i32>} : memref<432x1152xbf16, #tpu.memory_space<vmem>>, vector<16x1152xbf16>,
    %c0_9 = arith.constant 0 : index
    %c0_10 = arith.constant 0 : index
    %c0_11 = arith.constant 0 : index
    %c4 = arith.constant 4 : index
    %6 = vector.load %arg2[%c0_9, %c0_10, %c0_11, %c4] : memref<1x1x16x1792xbf16, #tpu.memory_space<vmem>>, vector<1x1x16x1152xbf16>
    %7 = vector.shape_cast %6 : vector<1x1x16x1152xbf16> to vector<16x1152xbf16>
    %c32 = arith.constant 32 : index
    %c0_12 = arith.constant 0 : index
    %8 = vector.load %arg9[%c32, %c0_12] : memref<432x1152xbf16, #tpu.memory_space<vmem>>, vector<16x1152xbf16>
    tpu.vector_store %arg9[%c32, %c0_12], %7 {strides = array<i32>} : memref<432x1152xbf16, #tpu.memory_space<vmem>>, vector<16x1152xbf16>,
    %c0_13 = arith.constant 0 : index
    %c0_14 = arith.constant 0 : index
    %c0_15 = arith.constant 0 : index
    %c24 = arith.constant 24 : index
    %9 = vector.load %arg2[%c0_13, %c0_14, %c0_15, %c24] : memref<1x1x16x1792xbf16, #tpu.memory_space<vmem>>, vector<1x1x16x1152xbf16>
    %10 = vector.shape_cast %9 : vector<1x1x16x1152xbf16> to vector<16x1152xbf16>
    %c48 = arith.constant 48 : index
    %c0_16 = arith.constant 0 : index
    %11 = vector.load %arg9[%c48, %c0_16] : memref<432x1152xbf16, #tpu.memory_space<vmem>>, vector<16x1152xbf16>
    tpu.vector_store %arg9[%c48, %c0_16], %10 {strides = array<i32>} : memref<432x1152xbf16, #tpu.memory_space<vmem>>, vector<16x1152xbf16>,
    %c0_17 = arith.constant 0 : index
    %c0_18 = arith.constant 0 : index
    %c0_19 = arith.constant 0 : index
    %c26 = arith.constant 26 : index
    %12 = vector.load %arg2[%c0_17, %c0_18, %c0_19, %c26] : memref<1x1x16x1792xbf16, #tpu.memory_space<vmem>>, vector<1x1x16x1152xbf16>
    %13 = vector.shape_cast %12 : vector<1x1x16x1152xbf16> to vector<16x1152xbf16>
    %c64 = arith.constant 64 : index
    %c0_20 = arith.constant 0 : index
    %14 = vector.load %arg9[%c64, %c0_20] : memref<432x1152xbf16, #tpu.memory_space<vmem>>, vector<16x1152xbf16>
    tpu.vector_store %arg9[%c64, %c0_20], %13 {strides = array<i32>} : memref<432x1152xbf16, #tpu.memory_space<vmem>>, vector<16x1152xbf16>,
    %c0_21 = arith.constant 0 : index
    %c0_22 = arith.constant 0 : index
    %c0_23 = arith.constant 0 : index
    %c28 = arith.constant 28 : index
    %15 = vector.load %arg2[%c0_21, %c0_22, %c0_23, %c28] : memref<1x1x16x1792xbf16, #tpu.memory_space<vmem>>, vector<1x1x16x1152xbf16>
    %16 = vector.shape_cast %15 : vector<1x1x16x1152xbf16> to vector<16x1152xbf16>
    %c80 = arith.constant 80 : index
    %c0_24 = arith.constant 0 : index
    %17 = vector.load %arg9[%c80, %c0_24] : memref<432x1152xbf16, #tpu.memory_space<vmem>>, vector<16x1152xbf16>
    tpu.vector_store %arg9[%c80, %c0_24], %16 {strides = array<i32>} : memref<432x1152xbf16, #tpu.memory_space<vmem>>, vector<16x1152xbf16>,
    %c0_25 = arith.constant 0 : index
    %c0_26 = arith.constant 0 : index
    %c0_27 = arith.constant 0 : index
    %c48_28 = arith.constant 48 : index
    %18 = vector.load %arg2[%c0_25, %c0_26, %c0_27, %c48_28] : memref<1x1x16x1792xbf16, #tpu.memory_space<vmem>>, vector<1x1x16x1152xbf16>
    %19 = vector.shape_cast %18 : vector<1x1x16x1152xbf16> to vector<16x1152xbf16>
    %c96 = arith.constant 96 : index
    %c0_29 = arith.constant 0 : index
    %20 = vector.load %arg9[%c96, %c0_29] : memref<432x1152xbf16, #tpu.memory_space<vmem>>, vector<16x1152xbf16>
    tpu.vector_store %arg9[%c96, %c0_29], %19 {strides = array<i32>} : memref<432x1152xbf16, #tpu.memory_space<vmem>>, vector<16x1152xbf16>,
    %c0_30 = arith.constant 0 : index
    %c0_31 = arith.constant 0 : index
    %c0_32 = arith.constant 0 : index
    %c50 = arith.constant 50 : index
    %21 = vector.load %arg2[%c0_30, %c0_31, %c0_32, %c50] : memref<1x1x16x1792xbf16, #tpu.memory_space<vmem>>, vector<1x1x16x1152xbf16>
    %22 = vector.shape_cast %21 : vector<1x1x16x1152xbf16> to vector<16x1152xbf16>
    %c112 = arith.constant 112 : index
    %c0_33 = arith.constant 0 : index
    %23 = vector.load %arg9[%c112, %c0_33] : memref<432x1152xbf16, #tpu.memory_space<vmem>>, vector<16x1152xbf16>
    tpu.vector_store %arg9[%c112, %c0_33], %22 {strides = array<i32>} : memref<432x1152xbf16, #tpu.memory_space<vmem>>, vector<16x1152xbf16>,
    %c0_34 = arith.constant 0 : index
    %c0_35 = arith.constant 0 : index
    %c0_36 = arith.constant 0 : index
    %c52 = arith.constant 52 : index
    %24 = vector.load %arg2[%c0_34, %c0_35, %c0_36, %c52] : memref<1x1x16x1792xbf16, #tpu.memory_space<vmem>>, vector<1x1x16x1152xbf16>
    %25 = vector.shape_cast %24 : vector<1x1x16x1152xbf16> to vector<16x1152xbf16>
    %c128 = arith.constant 128 : index
    %c0_37 = arith.constant 0 : index
    %26 = vector.load %arg9[%c128, %c0_37] : memref<432x1152xbf16, #tpu.memory_space<vmem>>, vector<16x1152xbf16>
    tpu.vector_store %arg9[%c128, %c0_37], %25 {strides = array<i32>} : memref<432x1152xbf16, #tpu.memory_space<vmem>>, vector<16x1152xbf16>,
    %c0_38 = arith.constant 0 : index
    %c0_39 = arith.constant 0 : index
    %c0_40 = arith.constant 0 : index
    %c288 = arith.constant 288 : index
    %27 = vector.load %arg2[%c0_38, %c0_39, %c0_40, %c288] : memref<1x1x16x1792xbf16, #tpu.memory_space<vmem>>, vector<1x1x16x1152xbf16>
    %28 = vector.shape_cast %27 : vector<1x1x16x1152xbf16> to vector<16x1152xbf16>
    %c144 = arith.constant 144 : index
    %c0_41 = arith.constant 0 : index
    %29 = vector.load %arg9[%c144, %c0_41] : memref<432x1152xbf16, #tpu.memory_space<vmem>>, vector<16x1152xbf16>
    tpu.vector_store %arg9[%c144, %c0_41], %28 {strides = array<i32>} : memref<432x1152xbf16, #tpu.memory_space<vmem>>, vector<16x1152xbf16>,
    %c0_42 = arith.constant 0 : index
    %c0_43 = arith.constant 0 : index
    %c0_44 = arith.constant 0 : index
    %c290 = arith.constant 290 : index
    %30 = vector.load %arg2[%c0_42, %c0_43, %c0_44, %c290] : memref<1x1x16x1792xbf16, #tpu.memory_space<vmem>>, vector<1x1x16x1152xbf16>
    %31 = vector.shape_cast %30 : vector<1x1x16x1152xbf16> to vector<16x1152xbf16>
    %c160 = arith.constant 160 : index
    %c0_45 = arith.constant 0 : index
    %32 = vector.load %arg9[%c160, %c0_45] : memref<432x1152xbf16, #tpu.memory_space<vmem>>, vector<16x1152xbf16>
    tpu.vector_store %arg9[%c160, %c0_45], %31 {strides = array<i32>} : memref<432x1152xbf16, #tpu.memory_space<vmem>>, vector<16x1152xbf16>,
    %c0_46 = arith.constant 0 : index
    %c0_47 = arith.constant 0 : index
    %c0_48 = arith.constant 0 : index
    %c292 = arith.constant 292 : index
    %33 = vector.load %arg2[%c0_46, %c0_47, %c0_48, %c292] : memref<1x1x16x1792xbf16, #tpu.memory_space<vmem>>, vector<1x1x16x1152xbf16>
    %34 = vector.shape_cast %33 : vector<1x1x16x1152xbf16> to vector<16x1152xbf16>
    %c176 = arith.constant 176 : index
    %c0_49 = arith.constant 0 : index
    %35 = vector.load %arg9[%c176, %c0_49] : memref<432x1152xbf16, #tpu.memory_space<vmem>>, vector<16x1152xbf16>
    tpu.vector_store %arg9[%c176, %c0_49], %34 {strides = array<i32>} : memref<432x1152xbf16, #tpu.memory_space<vmem>>, vector<16x1152xbf16>,
    %c0_50 = arith.constant 0 : index
    %c0_51 = arith.constant 0 : index
    %c0_52 = arith.constant 0 : index
    %c312 = arith.constant 312 : index
    %36 = vector.load %arg2[%c0_50, %c0_51, %c0_52, %c312] : memref<1x1x16x1792xbf16, #tpu.memory_space<vmem>>, vector<1x1x16x1152xbf16>
    %37 = vector.shape_cast %36 : vector<1x1x16x1152xbf16> to vector<16x1152xbf16>
    %c192 = arith.constant 192 : index
    %c0_53 = arith.constant 0 : index
    %38 = vector.load %arg9[%c192, %c0_53] : memref<432x1152xbf16, #tpu.memory_space<vmem>>, vector<16x1152xbf16>
    tpu.vector_store %arg9[%c192, %c0_53], %37 {strides = array<i32>} : memref<432x1152xbf16, #tpu.memory_space<vmem>>, vector<16x1152xbf16>,
    %c0_54 = arith.constant 0 : index
    %c0_55 = arith.constant 0 : index
    %c0_56 = arith.constant 0 : index
    %c314 = arith.constant 314 : index
    %39 = vector.load %arg2[%c0_54, %c0_55, %c0_56, %c314] : memref<1x1x16x1792xbf16, #tpu.memory_space<vmem>>, vector<1x1x16x1152xbf16>
    %40 = vector.shape_cast %39 : vector<1x1x16x1152xbf16> to vector<16x1152xbf16>
    %c208 = arith.constant 208 : index
    %c0_57 = arith.constant 0 : index
    %41 = vector.load %arg9[%c208, %c0_57] : memref<432x1152xbf16, #tpu.memory_space<vmem>>, vector<16x1152xbf16>
    tpu.vector_store %arg9[%c208, %c0_57], %40 {strides = array<i32>} : memref<432x1152xbf16, #tpu.memory_space<vmem>>, vector<16x1152xbf16>,
    %c0_58 = arith.constant 0 : index
    %c0_59 = arith.constant 0 : index
    %c0_60 = arith.constant 0 : index
    %c316 = arith.constant 316 : index
    %42 = vector.load %arg2[%c0_58, %c0_59, %c0_60, %c316] : memref<1x1x16x1792xbf16, #tpu.memory_space<vmem>>, vector<1x1x16x1152xbf16>
    %43 = vector.shape_cast %42 : vector<1x1x16x1152xbf16> to vector<16x1152xbf16>
    %c224 = arith.constant 224 : index
    %c0_61 = arith.constant 0 : index
    %44 = vector.load %arg9[%c224, %c0_61] : memref<432x1152xbf16, #tpu.memory_space<vmem>>, vector<16x1152xbf16>
    tpu.vector_store %arg9[%c224, %c0_61], %43 {strides = array<i32>} : memref<432x1152xbf16, #tpu.memory_space<vmem>>, vector<16x1152xbf16>,
    %c0_62 = arith.constant 0 : index
    %c0_63 = arith.constant 0 : index
    %c0_64 = arith.constant 0 : index
    %c336 = arith.constant 336 : index
    %45 = vector.load %arg2[%c0_62, %c0_63, %c0_64, %c336] : memref<1x1x16x1792xbf16, #tpu.memory_space<vmem>>, vector<1x1x16x1152xbf16>
    %46 = vector.shape_cast %45 : vector<1x1x16x1152xbf16> to vector<16x1152xbf16>
    %c240 = arith.constant 240 : index
    %c0_65 = arith.constant 0 : index
    %47 = vector.load %arg9[%c240, %c0_65] : memref<432x1152xbf16, #tpu.memory_space<vmem>>, vector<16x1152xbf16>
    tpu.vector_store %arg9[%c240, %c0_65], %46 {strides = array<i32>} : memref<432x1152xbf16, #tpu.memory_space<vmem>>, vector<16x1152xbf16>,
    %c0_66 = arith.constant 0 : index
    %c0_67 = arith.constant 0 : index
    %c0_68 = arith.constant 0 : index
    %c338 = arith.constant 338 : index
    %48 = vector.load %arg2[%c0_66, %c0_67, %c0_68, %c338] : memref<1x1x16x1792xbf16, #tpu.memory_space<vmem>>, vector<1x1x16x1152xbf16>
    %49 = vector.shape_cast %48 : vector<1x1x16x1152xbf16> to vector<16x1152xbf16>
    %c256 = arith.constant 256 : index
    %c0_69 = arith.constant 0 : index
    %50 = vector.load %arg9[%c256, %c0_69] : memref<432x1152xbf16, #tpu.memory_space<vmem>>, vector<16x1152xbf16>
    tpu.vector_store %arg9[%c256, %c0_69], %49 {strides = array<i32>} : memref<432x1152xbf16, #tpu.memory_space<vmem>>, vector<16x1152xbf16>,
    %c0_70 = arith.constant 0 : index
    %c0_71 = arith.constant 0 : index
    %c0_72 = arith.constant 0 : index
    %c340 = arith.constant 340 : index
    %51 = vector.load %arg2[%c0_70, %c0_71, %c0_72, %c340] : memref<1x1x16x1792xbf16, #tpu.memory_space<vmem>>, vector<1x1x16x1152xbf16>
    %52 = vector.shape_cast %51 : vector<1x1x16x1152xbf16> to vector<16x1152xbf16>
    %c272 = arith.constant 272 : index
    %c0_73 = arith.constant 0 : index
    %53 = vector.load %arg9[%c272, %c0_73] : memref<432x1152xbf16, #tpu.memory_space<vmem>>, vector<16x1152xbf16>
    tpu.vector_store %arg9[%c272, %c0_73], %52 {strides = array<i32>} : memref<432x1152xbf16, #tpu.memory_space<vmem>>, vector<16x1152xbf16>,
    %c0_74 = arith.constant 0 : index
    %c0_75 = arith.constant 0 : index
    %c0_76 = arith.constant 0 : index
    %c576 = arith.constant 576 : index
    %54 = vector.load %arg2[%c0_74, %c0_75, %c0_76, %c576] : memref<1x1x16x1792xbf16, #tpu.memory_space<vmem>>, vector<1x1x16x1152xbf16>
    %55 = vector.shape_cast %54 : vector<1x1x16x1152xbf16> to vector<16x1152xbf16>
    %c288_77 = arith.constant 288 : index
    %c0_78 = arith.constant 0 : index
    %56 = vector.load %arg9[%c288_77, %c0_78] : memref<432x1152xbf16, #tpu.memory_space<vmem>>, vector<16x1152xbf16>
    tpu.vector_store %arg9[%c288_77, %c0_78], %55 {strides = array<i32>} : memref<432x1152xbf16, #tpu.memory_space<vmem>>, vector<16x1152xbf16>,
    %c0_79 = arith.constant 0 : index
    %c0_80 = arith.constant 0 : index
    %c0_81 = arith.constant 0 : index
    %c578 = arith.constant 578 : index
    %57 = vector.load %arg2[%c0_79, %c0_80, %c0_81, %c578] : memref<1x1x16x1792xbf16, #tpu.memory_space<vmem>>, vector<1x1x16x1152xbf16>
    %58 = vector.shape_cast %57 : vector<1x1x16x1152xbf16> to vector<16x1152xbf16>
    %c304 = arith.constant 304 : index
    %c0_82 = arith.constant 0 : index
    %59 = vector.load %arg9[%c304, %c0_82] : memref<432x1152xbf16, #tpu.memory_space<vmem>>, vector<16x1152xbf16>
    tpu.vector_store %arg9[%c304, %c0_82], %58 {strides = array<i32>} : memref<432x1152xbf16, #tpu.memory_space<vmem>>, vector<16x1152xbf16>,
    %c0_83 = arith.constant 0 : index
    %c0_84 = arith.constant 0 : index
    %c0_85 = arith.constant 0 : index
    %c580 = arith.constant 580 : index
    %60 = vector.load %arg2[%c0_83, %c0_84, %c0_85, %c580] : memref<1x1x16x1792xbf16, #tpu.memory_space<vmem>>, vector<1x1x16x1152xbf16>
    %61 = vector.shape_cast %60 : vector<1x1x16x1152xbf16> to vector<16x1152xbf16>
    %c320 = arith.constant 320 : index
    %c0_86 = arith.constant 0 : index
    %62 = vector.load %arg9[%c320, %c0_86] : memref<432x1152xbf16, #tpu.memory_space<vmem>>, vector<16x1152xbf16>
    tpu.vector_store %arg9[%c320, %c0_86], %61 {strides = array<i32>} : memref<432x1152xbf16, #tpu.memory_space<vmem>>, vector<16x1152xbf16>,
    %c0_87 = arith.constant 0 : index
    %c0_88 = arith.constant 0 : index
    %c0_89 = arith.constant 0 : index
    %c600 = arith.constant 600 : index
    %63 = vector.load %arg2[%c0_87, %c0_88, %c0_89, %c600] : memref<1x1x16x1792xbf16, #tpu.memory_space<vmem>>, vector<1x1x16x1152xbf16>
    %64 = vector.shape_cast %63 : vector<1x1x16x1152xbf16> to vector<16x1152xbf16>
    %c336_90 = arith.constant 336 : index
    %c0_91 = arith.constant 0 : index
    %65 = vector.load %arg9[%c336_90, %c0_91] : memref<432x1152xbf16, #tpu.memory_space<vmem>>, vector<16x1152xbf16>
    tpu.vector_store %arg9[%c336_90, %c0_91], %64 {strides = array<i32>} : memref<432x1152xbf16, #tpu.memory_space<vmem>>, vector<16x1152xbf16>,
    %c0_92 = arith.constant 0 : index
    %c0_93 = arith.constant 0 : index
    %c0_94 = arith.constant 0 : index
    %c602 = arith.constant 602 : index
    %66 = vector.load %arg2[%c0_92, %c0_93, %c0_94, %c602] : memref<1x1x16x1792xbf16, #tpu.memory_space<vmem>>, vector<1x1x16x1152xbf16>
    %67 = vector.shape_cast %66 : vector<1x1x16x1152xbf16> to vector<16x1152xbf16>
    %c352 = arith.constant 352 : index
    %c0_95 = arith.constant 0 : index
    %68 = vector.load %arg9[%c352, %c0_95] : memref<432x1152xbf16, #tpu.memory_space<vmem>>, vector<16x1152xbf16>
    tpu.vector_store %arg9[%c352, %c0_95], %67 {strides = array<i32>} : memref<432x1152xbf16, #tpu.memory_space<vmem>>, vector<16x1152xbf16>,
    %c0_96 = arith.constant 0 : index
    %c0_97 = arith.constant 0 : index
    %c0_98 = arith.constant 0 : index
    %c604 = arith.constant 604 : index
    %69 = vector.load %arg2[%c0_96, %c0_97, %c0_98, %c604] : memref<1x1x16x1792xbf16, #tpu.memory_space<vmem>>, vector<1x1x16x1152xbf16>
    %70 = vector.shape_cast %69 : vector<1x1x16x1152xbf16> to vector<16x1152xbf16>
    %c368 = arith.constant 368 : index
    %c0_99 = arith.constant 0 : index
    %71 = vector.load %arg9[%c368, %c0_99] : memref<432x1152xbf16, #tpu.memory_space<vmem>>, vector<16x1152xbf16>
    tpu.vector_store %arg9[%c368, %c0_99], %70 {strides = array<i32>} : memref<432x1152xbf16, #tpu.memory_space<vmem>>, vector<16x1152xbf16>,
    %c0_100 = arith.constant 0 : index
    %c0_101 = arith.constant 0 : index
    %c0_102 = arith.constant 0 : index
    %c624 = arith.constant 624 : index
    %72 = vector.load %arg2[%c0_100, %c0_101, %c0_102, %c624] : memref<1x1x16x1792xbf16, #tpu.memory_space<vmem>>, vector<1x1x16x1152xbf16>
    %73 = vector.shape_cast %72 : vector<1x1x16x1152xbf16> to vector<16x1152xbf16>
    %c384 = arith.constant 384 : index
    %c0_103 = arith.constant 0 : index
    %74 = vector.load %arg9[%c384, %c0_103] : memref<432x1152xbf16, #tpu.memory_space<vmem>>, vector<16x1152xbf16>
    tpu.vector_store %arg9[%c384, %c0_103], %73 {strides = array<i32>} : memref<432x1152xbf16, #tpu.memory_space<vmem>>, vector<16x1152xbf16>,
    %c0_104 = arith.constant 0 : index
    %c0_105 = arith.constant 0 : index
    %c0_106 = arith.constant 0 : index
    %c626 = arith.constant 626 : index
    %75 = vector.load %arg2[%c0_104, %c0_105, %c0_106, %c626] : memref<1x1x16x1792xbf16, #tpu.memory_space<vmem>>, vector<1x1x16x1152xbf16>
    %76 = vector.shape_cast %75 : vector<1x1x16x1152xbf16> to vector<16x1152xbf16>
    %c400 = arith.constant 400 : index
    %c0_107 = arith.constant 0 : index
    %77 = vector.load %arg9[%c400, %c0_107] : memref<432x1152xbf16, #tpu.memory_space<vmem>>, vector<16x1152xbf16>
    tpu.vector_store %arg9[%c400, %c0_107], %76 {strides = array<i32>} : memref<432x1152xbf16, #tpu.memory_space<vmem>>, vector<16x1152xbf16>,
    %c0_108 = arith.constant 0 : index
    %c0_109 = arith.constant 0 : index
    %c0_110 = arith.constant 0 : index
    %c628 = arith.constant 628 : index
    %78 = vector.load %arg2[%c0_108, %c0_109, %c0_110, %c628] : memref<1x1x16x1792xbf16, #tpu.memory_space<vmem>>, vector<1x1x16x1152xbf16>
    %79 = vector.shape_cast %78 : vector<1x1x16x1152xbf16> to vector<16x1152xbf16>
    %c416 = arith.constant 416 : index
    %c0_111 = arith.constant 0 : index
    %80 = vector.load %arg9[%c416, %c0_111] : memref<432x1152xbf16, #tpu.memory_space<vmem>>, vector<16x1152xbf16>
    tpu.vector_store %arg9[%c416, %c0_111], %79 {strides = array<i32>} : memref<432x1152xbf16, #tpu.memory_space<vmem>>, vector<16x1152xbf16>,
    %c0_112 = arith.constant 0 : index
    %c0_113 = arith.constant 0 : index
    %81 = vector.load %arg3[%c0_112, %c0_113] : memref<16x432xbf16, #tpu.memory_space<vmem>>, vector<16x432xbf16>
    %c0_114 = arith.constant 0 : index
    %c0_115 = arith.constant 0 : index
    %82 = vector.load %arg9[%c0_114, %c0_115] : memref<432x1152xbf16, #tpu.memory_space<vmem>>, vector<432x1152xbf16>
    %cst = arith.constant dense<0.000000e+00> : vector<16x1152xf32>
    %83 = tpu.matmul %81, %82, %cst {dimension_numbers = #tpu.dot_dimension_numbers<[1], [0], [0], [1], [0, 0, 1, 1], [], []>} : vector<16x432xbf16>, vector<432x1152xbf16>, vector<16x1152xf32> -> vector<16x1152xf32>
    %c0_116 = arith.constant 0 : index
    %c0_117 = arith.constant 0 : index
    %84 = vector.load %arg4[%c0_116, %c0_117] : memref<16x1xf32, #tpu.memory_space<vmem>>, vector<16x1xf32>
    %85 = vector.broadcast %84 : vector<16x1xf32> to vector<16x1152xf32>
    %86 = arith.addf %83, %85 : vector<16x1152xf32>
    %cst_118 = arith.constant 0.000000e+00 : f32
    %87 = vector.broadcast %cst_118 : f32 to vector<16x1152xf32>
    %88 = arith.maximumf %86, %87 : vector<16x1152xf32>
    %c0_119 = arith.constant 0 : index
    %c0_120 = arith.constant 0 : index
    %c0_121 = arith.constant 0 : index
    %89 = vector.load %arg7[%c0_119, %c0_120, %c0_121] : memref<1x1x1152xf32, #tpu.memory_space<vmem>>, vector<1x1x1152xf32>
    %90 = vector.shape_cast %89 : vector<1x1x1152xf32> to vector<1x1152xf32>
    %cst_122 = arith.constant 0.000000e+00 : f32
    %91 = vector.broadcast %cst_122 : f32 to vector<1x1152xf32>
    %92 = arith.cmpf one, %90, %91 : vector<1x1152xf32>
    %cst_123 = arith.constant 0.000000e+00 : f32
    %93 = vector.shape_cast %92 : vector<1x1152xi1> to vector<1x1152xi1>
    %94 = vector.broadcast %93 : vector<1x1152xi1> to vector<16x1152xi1>
    %95 = vector.broadcast %cst_123 : f32 to vector<16x1152xf32>
    %96 = arith.select %94, %88, %95 : vector<16x1152xi1>, vector<16x1152xf32>
    %cst_124 = arith.constant 0.000000e+00 : bf16
    %97 = vector.broadcast %cst_124 : bf16 to vector<16x128xbf16>
    %c0_125 = arith.constant 0 : index
    %c0_126 = arith.constant 0 : index
    %98 = vector.load %arg10[%c0_125, %c0_126] : memref<16x1408xbf16, #tpu.memory_space<vmem>>, vector<16x128xbf16>
    tpu.vector_store %arg10[%c0_125, %c0_126], %97 {strides = array<i32>} : memref<16x1408xbf16, #tpu.memory_space<vmem>>, vector<16x128xbf16>,
    %cst_127 = arith.constant 0.000000e+00 : bf16
    %99 = vector.broadcast %cst_127 : bf16 to vector<16x128xbf16>
    %c0_128 = arith.constant 0 : index
    %c1280 = arith.constant 1280 : index
    %100 = vector.load %arg10[%c0_128, %c1280] : memref<16x1408xbf16, #tpu.memory_space<vmem>>, vector<16x128xbf16>
    tpu.vector_store %arg10[%c0_128, %c1280], %99 {strides = array<i32>} : memref<16x1408xbf16, #tpu.memory_space<vmem>>, vector<16x128xbf16>,
    %101 = arith.truncf %96 : vector<16x1152xf32> to vector<16x1152xbf16>
    %c0_129 = arith.constant 0 : index
    %c128_130 = arith.constant 128 : index
    %102 = vector.load %arg10[%c0_129, %c128_130] : memref<16x1408xbf16, #tpu.memory_space<vmem>>, vector<16x1152xbf16>
    tpu.vector_store %arg10[%c0_129, %c128_130], %101 {strides = array<i32>} : memref<16x1408xbf16, #tpu.memory_space<vmem>>, vector<16x1152xbf16>,
    %c0_131 = arith.constant 0 : index
    %c102 = arith.constant 102 : index
    %103 = vector.load %arg10[%c0_131, %c102] : memref<16x1408xbf16, #tpu.memory_space<vmem>>, vector<16x640xbf16>
    %c0_132 = arith.constant 0 : index
    %c0_133 = arith.constant 0 : index
    %104 = vector.load %arg9[%c0_132, %c0_133] : memref<432x1152xbf16, #tpu.memory_space<vmem>>, vector<16x640xbf16>
    tpu.vector_store %arg9[%c0_132, %c0_133], %103 {strides = array<i32>} : memref<432x1152xbf16, #tpu.memory_space<vmem>>, vector<16x640xbf16>,
    %c0_134 = arith.constant 0 : index
    %c104 = arith.constant 104 : index
    %105 = vector.load %arg10[%c0_134, %c104] : memref<16x1408xbf16, #tpu.memory_space<vmem>>, vector<16x640xbf16>
    %c16_135 = arith.constant 16 : index
    %c0_136 = arith.constant 0 : index
    %106 = vector.load %arg9[%c16_135, %c0_136] : memref<432x1152xbf16, #tpu.memory_space<vmem>>, vector<16x640xbf16>
    tpu.vector_store %arg9[%c16_135, %c0_136], %105 {strides = array<i32>} : memref<432x1152xbf16, #tpu.memory_space<vmem>>, vector<16x640xbf16>,
    %c0_137 = arith.constant 0 : index
    %c106 = arith.constant 106 : index
    %107 = vector.load %arg10[%c0_137, %c106] : memref<16x1408xbf16, #tpu.memory_space<vmem>>, vector<16x640xbf16>
    %c32_138 = arith.constant 32 : index
    %c0_139 = arith.constant 0 : index
    %108 = vector.load %arg9[%c32_138, %c0_139] : memref<432x1152xbf16, #tpu.memory_space<vmem>>, vector<16x640xbf16>
    tpu.vector_store %arg9[%c32_138, %c0_139], %107 {strides = array<i32>} : memref<432x1152xbf16, #tpu.memory_space<vmem>>, vector<16x640xbf16>,
    %c0_140 = arith.constant 0 : index
    %c126 = arith.constant 126 : index
    %109 = vector.load %arg10[%c0_140, %c126] : memref<16x1408xbf16, #tpu.memory_space<vmem>>, vector<16x640xbf16>
    %c48_141 = arith.constant 48 : index
    %c0_142 = arith.constant 0 : index
    %110 = vector.load %arg9[%c48_141, %c0_142] : memref<432x1152xbf16, #tpu.memory_space<vmem>>, vector<16x640xbf16>
    tpu.vector_store %arg9[%c48_141, %c0_142], %109 {strides = array<i32>} : memref<432x1152xbf16, #tpu.memory_space<vmem>>, vector<16x640xbf16>,
    %c0_143 = arith.constant 0 : index
    %c128_144 = arith.constant 128 : index
    %111 = vector.load %arg10[%c0_143, %c128_144] : memref<16x1408xbf16, #tpu.memory_space<vmem>>, vector<16x640xbf16>
    %c64_145 = arith.constant 64 : index
    %c0_146 = arith.constant 0 : index
    %112 = vector.load %arg9[%c64_145, %c0_146] : memref<432x1152xbf16, #tpu.memory_space<vmem>>, vector<16x640xbf16>
    tpu.vector_store %arg9[%c64_145, %c0_146], %111 {strides = array<i32>} : memref<432x1152xbf16, #tpu.memory_space<vmem>>, vector<16x640xbf16>,
    %c0_147 = arith.constant 0 : index
    %c130 = arith.constant 130 : index
    %113 = vector.load %arg10[%c0_147, %c130] : memref<16x1408xbf16, #tpu.memory_space<vmem>>, vector<16x640xbf16>
    %c80_148 = arith.constant 80 : index
    %c0_149 = arith.constant 0 : index
    %114 = vector.load %arg9[%c80_148, %c0_149] : memref<432x1152xbf16, #tpu.memory_space<vmem>>, vector<16x640xbf16>
    tpu.vector_store %arg9[%c80_148, %c0_149], %113 {strides = array<i32>} : memref<432x1152xbf16, #tpu.memory_space<vmem>>, vector<16x640xbf16>,
    %c0_150 = arith.constant 0 : index
    %c150 = arith.constant 150 : index
    %115 = vector.load %arg10[%c0_150, %c150] : memref<16x1408xbf16, #tpu.memory_space<vmem>>, vector<16x640xbf16>
    %c96_151 = arith.constant 96 : index
    %c0_152 = arith.constant 0 : index
    %116 = vector.load %arg9[%c96_151, %c0_152] : memref<432x1152xbf16, #tpu.memory_space<vmem>>, vector<16x640xbf16>
    tpu.vector_store %arg9[%c96_151, %c0_152], %115 {strides = array<i32>} : memref<432x1152xbf16, #tpu.memory_space<vmem>>, vector<16x640xbf16>,
    %c0_153 = arith.constant 0 : index
    %c152 = arith.constant 152 : index
    %117 = vector.load %arg10[%c0_153, %c152] : memref<16x1408xbf16, #tpu.memory_space<vmem>>, vector<16x640xbf16>
    %c112_154 = arith.constant 112 : index
    %c0_155 = arith.constant 0 : index
    %118 = vector.load %arg9[%c112_154, %c0_155] : memref<432x1152xbf16, #tpu.memory_space<vmem>>, vector<16x640xbf16>
    tpu.vector_store %arg9[%c112_154, %c0_155], %117 {strides = array<i32>} : memref<432x1152xbf16, #tpu.memory_space<vmem>>, vector<16x640xbf16>,
    %c0_156 = arith.constant 0 : index
    %c154 = arith.constant 154 : index
    %119 = vector.load %arg10[%c0_156, %c154] : memref<16x1408xbf16, #tpu.memory_space<vmem>>, vector<16x640xbf16>
    %c128_157 = arith.constant 128 : index
    %c0_158 = arith.constant 0 : index
    %120 = vector.load %arg9[%c128_157, %c0_158] : memref<432x1152xbf16, #tpu.memory_space<vmem>>, vector<16x640xbf16>
    tpu.vector_store %arg9[%c128_157, %c0_158], %119 {strides = array<i32>} : memref<432x1152xbf16, #tpu.memory_space<vmem>>, vector<16x640xbf16>,
    %c0_159 = arith.constant 0 : index
    %c390 = arith.constant 390 : index
    %121 = vector.load %arg10[%c0_159, %c390] : memref<16x1408xbf16, #tpu.memory_space<vmem>>, vector<16x640xbf16>
    %c144_160 = arith.constant 144 : index
    %c0_161 = arith.constant 0 : index
    %122 = vector.load %arg9[%c144_160, %c0_161] : memref<432x1152xbf16, #tpu.memory_space<vmem>>, vector<16x640xbf16>
    tpu.vector_store %arg9[%c144_160, %c0_161], %121 {strides = array<i32>} : memref<432x1152xbf16, #tpu.memory_space<vmem>>, vector<16x640xbf16>,
    %c0_162 = arith.constant 0 : index
    %c392 = arith.constant 392 : index
    %123 = vector.load %arg10[%c0_162, %c392] : memref<16x1408xbf16, #tpu.memory_space<vmem>>, vector<16x640xbf16>
    %c160_163 = arith.constant 160 : index
    %c0_164 = arith.constant 0 : index
    %124 = vector.load %arg9[%c160_163, %c0_164] : memref<432x1152xbf16, #tpu.memory_space<vmem>>, vector<16x640xbf16>
    tpu.vector_store %arg9[%c160_163, %c0_164], %123 {strides = array<i32>} : memref<432x1152xbf16, #tpu.memory_space<vmem>>, vector<16x640xbf16>,
    %c0_165 = arith.constant 0 : index
    %c394 = arith.constant 394 : index
    %125 = vector.load %arg10[%c0_165, %c394] : memref<16x1408xbf16, #tpu.memory_space<vmem>>, vector<16x640xbf16>
    %c176_166 = arith.constant 176 : index
    %c0_167 = arith.constant 0 : index
    %126 = vector.load %arg9[%c176_166, %c0_167] : memref<432x1152xbf16, #tpu.memory_space<vmem>>, vector<16x640xbf16>
    tpu.vector_store %arg9[%c176_166, %c0_167], %125 {strides = array<i32>} : memref<432x1152xbf16, #tpu.memory_space<vmem>>, vector<16x640xbf16>,
    %c0_168 = arith.constant 0 : index
    %c414 = arith.constant 414 : index
    %127 = vector.load %arg10[%c0_168, %c414] : memref<16x1408xbf16, #tpu.memory_space<vmem>>, vector<16x640xbf16>
    %c192_169 = arith.constant 192 : index
    %c0_170 = arith.constant 0 : index
    %128 = vector.load %arg9[%c192_169, %c0_170] : memref<432x1152xbf16, #tpu.memory_space<vmem>>, vector<16x640xbf16>
    tpu.vector_store %arg9[%c192_169, %c0_170], %127 {strides = array<i32>} : memref<432x1152xbf16, #tpu.memory_space<vmem>>, vector<16x640xbf16>,
    %c0_171 = arith.constant 0 : index
    %c416_172 = arith.constant 416 : index
    %129 = vector.load %arg10[%c0_171, %c416_172] : memref<16x1408xbf16, #tpu.memory_space<vmem>>, vector<16x640xbf16>
    %c208_173 = arith.constant 208 : index
    %c0_174 = arith.constant 0 : index
    %130 = vector.load %arg9[%c208_173, %c0_174] : memref<432x1152xbf16, #tpu.memory_space<vmem>>, vector<16x640xbf16>
    tpu.vector_store %arg9[%c208_173, %c0_174], %129 {strides = array<i32>} : memref<432x1152xbf16, #tpu.memory_space<vmem>>, vector<16x640xbf16>,
    %c0_175 = arith.constant 0 : index
    %c418 = arith.constant 418 : index
    %131 = vector.load %arg10[%c0_175, %c418] : memref<16x1408xbf16, #tpu.memory_space<vmem>>, vector<16x640xbf16>
    %c224_176 = arith.constant 224 : index
    %c0_177 = arith.constant 0 : index
    %132 = vector.load %arg9[%c224_176, %c0_177] : memref<432x1152xbf16, #tpu.memory_space<vmem>>, vector<16x640xbf16>
    tpu.vector_store %arg9[%c224_176, %c0_177], %131 {strides = array<i32>} : memref<432x1152xbf16, #tpu.memory_space<vmem>>, vector<16x640xbf16>,
    %c0_178 = arith.constant 0 : index
    %c438 = arith.constant 438 : index
    %133 = vector.load %arg10[%c0_178, %c438] : memref<16x1408xbf16, #tpu.memory_space<vmem>>, vector<16x640xbf16>
    %c240_179 = arith.constant 240 : index
    %c0_180 = arith.constant 0 : index
    %134 = vector.load %arg9[%c240_179, %c0_180] : memref<432x1152xbf16, #tpu.memory_space<vmem>>, vector<16x640xbf16>
    tpu.vector_store %arg9[%c240_179, %c0_180], %133 {strides = array<i32>} : memref<432x1152xbf16, #tpu.memory_space<vmem>>, vector<16x640xbf16>,
    %c0_181 = arith.constant 0 : index
    %c440 = arith.constant 440 : index
    %135 = vector.load %arg10[%c0_181, %c440] : memref<16x1408xbf16, #tpu.memory_space<vmem>>, vector<16x640xbf16>
    %c256_182 = arith.constant 256 : index
    %c0_183 = arith.constant 0 : index
    %136 = vector.load %arg9[%c256_182, %c0_183] : memref<432x1152xbf16, #tpu.memory_space<vmem>>, vector<16x640xbf16>
    tpu.vector_store %arg9[%c256_182, %c0_183], %135 {strides = array<i32>} : memref<432x1152xbf16, #tpu.memory_space<vmem>>, vector<16x640xbf16>,
    %c0_184 = arith.constant 0 : index
    %c442 = arith.constant 442 : index
    %137 = vector.load %arg10[%c0_184, %c442] : memref<16x1408xbf16, #tpu.memory_space<vmem>>, vector<16x640xbf16>
    %c272_185 = arith.constant 272 : index
    %c0_186 = arith.constant 0 : index
    %138 = vector.load %arg9[%c272_185, %c0_186] : memref<432x1152xbf16, #tpu.memory_space<vmem>>, vector<16x640xbf16>
    tpu.vector_store %arg9[%c272_185, %c0_186], %137 {strides = array<i32>} : memref<432x1152xbf16, #tpu.memory_space<vmem>>, vector<16x640xbf16>,
    %c0_187 = arith.constant 0 : index
    %c678 = arith.constant 678 : index
    %139 = vector.load %arg10[%c0_187, %c678] : memref<16x1408xbf16, #tpu.memory_space<vmem>>, vector<16x640xbf16>
    %c288_188 = arith.constant 288 : index
    %c0_189 = arith.constant 0 : index
    %140 = vector.load %arg9[%c288_188, %c0_189] : memref<432x1152xbf16, #tpu.memory_space<vmem>>, vector<16x640xbf16>
    tpu.vector_store %arg9[%c288_188, %c0_189], %139 {strides = array<i32>} : memref<432x1152xbf16, #tpu.memory_space<vmem>>, vector<16x640xbf16>,
    %c0_190 = arith.constant 0 : index
    %c680 = arith.constant 680 : index
    %141 = vector.load %arg10[%c0_190, %c680] : memref<16x1408xbf16, #tpu.memory_space<vmem>>, vector<16x640xbf16>
    %c304_191 = arith.constant 304 : index
    %c0_192 = arith.constant 0 : index
    %142 = vector.load %arg9[%c304_191, %c0_192] : memref<432x1152xbf16, #tpu.memory_space<vmem>>, vector<16x640xbf16>
    tpu.vector_store %arg9[%c304_191, %c0_192], %141 {strides = array<i32>} : memref<432x1152xbf16, #tpu.memory_space<vmem>>, vector<16x640xbf16>,
    %c0_193 = arith.constant 0 : index
    %c682 = arith.constant 682 : index
    %143 = vector.load %arg10[%c0_193, %c682] : memref<16x1408xbf16, #tpu.memory_space<vmem>>, vector<16x640xbf16>
    %c320_194 = arith.constant 320 : index
    %c0_195 = arith.constant 0 : index
    %144 = vector.load %arg9[%c320_194, %c0_195] : memref<432x1152xbf16, #tpu.memory_space<vmem>>, vector<16x640xbf16>
    tpu.vector_store %arg9[%c320_194, %c0_195], %143 {strides = array<i32>} : memref<432x1152xbf16, #tpu.memory_space<vmem>>, vector<16x640xbf16>,
    %c0_196 = arith.constant 0 : index
    %c702 = arith.constant 702 : index
    %145 = vector.load %arg10[%c0_196, %c702] : memref<16x1408xbf16, #tpu.memory_space<vmem>>, vector<16x640xbf16>
    %c336_197 = arith.constant 336 : index
    %c0_198 = arith.constant 0 : index
    %146 = vector.load %arg9[%c336_197, %c0_198] : memref<432x1152xbf16, #tpu.memory_space<vmem>>, vector<16x640xbf16>
    tpu.vector_store %arg9[%c336_197, %c0_198], %145 {strides = array<i32>} : memref<432x1152xbf16, #tpu.memory_space<vmem>>, vector<16x640xbf16>,
    %c0_199 = arith.constant 0 : index
    %c704 = arith.constant 704 : index
    %147 = vector.load %arg10[%c0_199, %c704] : memref<16x1408xbf16, #tpu.memory_space<vmem>>, vector<16x640xbf16>
    %c352_200 = arith.constant 352 : index
    %c0_201 = arith.constant 0 : index
    %148 = vector.load %arg9[%c352_200, %c0_201] : memref<432x1152xbf16, #tpu.memory_space<vmem>>, vector<16x640xbf16>
    tpu.vector_store %arg9[%c352_200, %c0_201], %147 {strides = array<i32>} : memref<432x1152xbf16, #tpu.memory_space<vmem>>, vector<16x640xbf16>,
    %c0_202 = arith.constant 0 : index
    %c706 = arith.constant 706 : index
    %149 = vector.load %arg10[%c0_202, %c706] : memref<16x1408xbf16, #tpu.memory_space<vmem>>, vector<16x640xbf16>
    %c368_203 = arith.constant 368 : index
    %c0_204 = arith.constant 0 : index
    %150 = vector.load %arg9[%c368_203, %c0_204] : memref<432x1152xbf16, #tpu.memory_space<vmem>>, vector<16x640xbf16>
    tpu.vector_store %arg9[%c368_203, %c0_204], %149 {strides = array<i32>} : memref<432x1152xbf16, #tpu.memory_space<vmem>>, vector<16x640xbf16>,
    %c0_205 = arith.constant 0 : index
    %c726 = arith.constant 726 : index
    %151 = vector.load %arg10[%c0_205, %c726] : memref<16x1408xbf16, #tpu.memory_space<vmem>>, vector<16x640xbf16>
    %c384_206 = arith.constant 384 : index
    %c0_207 = arith.constant 0 : index
    %152 = vector.load %arg9[%c384_206, %c0_207] : memref<432x1152xbf16, #tpu.memory_space<vmem>>, vector<16x640xbf16>
    tpu.vector_store %arg9[%c384_206, %c0_207], %151 {strides = array<i32>} : memref<432x1152xbf16, #tpu.memory_space<vmem>>, vector<16x640xbf16>,
    %c0_208 = arith.constant 0 : index
    %c728 = arith.constant 728 : index
    %153 = vector.load %arg10[%c0_208, %c728] : memref<16x1408xbf16, #tpu.memory_space<vmem>>, vector<16x640xbf16>
    %c400_209 = arith.constant 400 : index
    %c0_210 = arith.constant 0 : index
    %154 = vector.load %arg9[%c400_209, %c0_210] : memref<432x1152xbf16, #tpu.memory_space<vmem>>, vector<16x640xbf16>
    tpu.vector_store %arg9[%c400_209, %c0_210], %153 {strides = array<i32>} : memref<432x1152xbf16, #tpu.memory_space<vmem>>, vector<16x640xbf16>,
    %c0_211 = arith.constant 0 : index
    %c730 = arith.constant 730 : index
    %155 = vector.load %arg10[%c0_211, %c730] : memref<16x1408xbf16, #tpu.memory_space<vmem>>, vector<16x640xbf16>
    %c416_212 = arith.constant 416 : index
    %c0_213 = arith.constant 0 : index
    %156 = vector.load %arg9[%c416_212, %c0_213] : memref<432x1152xbf16, #tpu.memory_space<vmem>>, vector<16x640xbf16>
    tpu.vector_store %arg9[%c416_212, %c0_213], %155 {strides = array<i32>} : memref<432x1152xbf16, #tpu.memory_space<vmem>>, vector<16x640xbf16>,
    %c0_214 = arith.constant 0 : index
    %c0_215 = arith.constant 0 : index
    %157 = vector.load %arg5[%c0_214, %c0_215] : memref<16x432xbf16, #tpu.memory_space<vmem>>, vector<16x432xbf16>
    %c0_216 = arith.constant 0 : index
    %c0_217 = arith.constant 0 : index
    %158 = vector.load %arg9[%c0_216, %c0_217] : memref<432x1152xbf16, #tpu.memory_space<vmem>>, vector<432x640xbf16>
    %cst_218 = arith.constant dense<0.000000e+00> : vector<16x640xf32>
    %159 = tpu.matmul %157, %158, %cst_218 {dimension_numbers = #tpu.dot_dimension_numbers<[1], [0], [0], [1], [0, 0, 1, 1], [], []>} : vector<16x432xbf16>, vector<432x640xbf16>, vector<16x640xf32> -> vector<16x640xf32>
    %c0_219 = arith.constant 0 : index
    %c0_220 = arith.constant 0 : index
    %160 = vector.load %arg6[%c0_219, %c0_220] : memref<16x1xf32, #tpu.memory_space<vmem>>, vector<16x1xf32>
    %161 = vector.broadcast %160 : vector<16x1xf32> to vector<16x640xf32>
    %162 = arith.addf %159, %161 : vector<16x640xf32>
    %cst_221 = arith.constant 0.000000e+00 : f32
    %163 = vector.broadcast %cst_221 : f32 to vector<16x640xf32>
    %164 = arith.maximumf %162, %163 : vector<16x640xf32>
    %c0_222 = arith.constant 0 : index
    %c0_223 = arith.constant 0 : index
    %c0_224 = arith.constant 0 : index
    %c0_225 = arith.constant 0 : index
    %165 = vector.load %arg8[%c0_222, %c0_223, %c0_224, %c0_225] : memref<1x1x16x640xf32, #tpu.memory_space<vmem>>, vector<1x1x16x640xf32>
    %166 = vector.shape_cast %165 : vector<1x1x16x640xf32> to vector<16x640xf32>
    %167 = vector.shape_cast %164 : vector<16x640xf32> to vector<1x1x16x640xf32>
    tpu.vector_store %arg8[%c0_222, %c0_223, %c0_224, %c0_225], %167 {strides = array<i32>} : memref<1x1x16x640xf32, #tpu.memory_space<vmem>>, vector<1x1x16x640xf32>,
    return
  }
  func.func @transform_0(%arg0: i32, %arg1: i32) -> (i32, i32, i32, i32) {
    %c0_i32 = arith.constant 0 : i32
    %c0_i32_0 = arith.constant 0 : i32
    %c0_i32_1 = arith.constant 0 : i32
    return %arg0, %arg1, %c0_i32, %c0_i32_0 : i32, i32, i32, i32
  }
  func.func @transform_1(%arg0: i32, %arg1: i32) -> (i32, i32) {
    %c0_i32 = arith.constant 0 : i32
    %c0_i32_0 = arith.constant 0 : i32
    %c0_i32_1 = arith.constant 0 : i32
    return %c0_i32, %c0_i32_0 : i32, i32
  }
  func.func @transform_2(%arg0: i32, %arg1: i32) -> (i32, i32) {
    %c0_i32 = arith.constant 0 : i32
    %c0_i32_0 = arith.constant 0 : i32
    %c0_i32_1 = arith.constant 0 : i32
    return %c0_i32, %c0_i32_0 : i32, i32
  }
  func.func @transform_3(%arg0: i32, %arg1: i32) -> (i32, i32) {
    %c0_i32 = arith.constant 0 : i32
    %c0_i32_0 = arith.constant 0 : i32
    %c0_i32_1 = arith.constant 0 : i32
    return %c0_i32, %c0_i32_0 : i32, i32
  }
  func.func @transform_4(%arg0: i32, %arg1: i32) -> (i32, i32) {
    %c0_i32 = arith.constant 0 : i32
    %c0_i32_0 = arith.constant 0 : i32
    %c0_i32_1 = arith.constant 0 : i32
    return %c0_i32, %c0_i32_0 : i32, i32
  }
  func.func @transform_5(%arg0: i32, %arg1: i32) -> (i32, i32, i32) {
    %c0_i32 = arith.constant 0 : i32
    %c0_i32_0 = arith.constant 0 : i32
    %c0_i32_1 = arith.constant 0 : i32
    return %arg1, %c0_i32, %c0_i32_0 : i32, i32, i32
  }
  func.func @transform_6(%arg0: i32, %arg1: i32) -> (i32, i32, i32, i32) {
    %c0_i32 = arith.constant 0 : i32
    %c0_i32_0 = arith.constant 0 : i32
    %c0_i32_1 = arith.constant 0 : i32
    return %arg0, %arg1, %c0_i32, %c0_i32_0 : i32, i32, i32, i32
  }
}

</mosaic_0001>

<llo_original>
// kernel: tpu_custom_call.1
$region0: #{tpu_custom_call.1}
  #allocation0 [shape = 'u32[]', space=smem, size = 0x4, offset = 0x4, fixed_abs, tag = 'smem constant byte address 0x4 - core index']
  #allocation1 [shape = 'u32[144,128]{1,0:T(1,128)}', space=vmem, size = 0x12000, scoped, tag = 'internal scratch']
  #allocation2 [shape = 'bf16[432,1152]{1,0:T(16,128)(2,1)}', space=vmem, size = 0xf3000, scoped, tag = 'scratch operand']
  #allocation3 [shape = 'bf16[16,1408]{1,0:T(16,128)(2,1)}', space=vmem, size = 0xb000, scoped, tag = 'scratch operand']
  %s0 = inlined_call_operand.hbm [shape: bf16[2,2,16,1792], index: 0, kind: input, shape index: {}]
  %s1 = inlined_call_operand.vmem [shape: bf16[16,432], index: 1, kind: input, shape index: {}]
  %s2 = inlined_call_operand.vmem [shape: f32[16,1], index: 2, kind: input, shape index: {}]
  %s3 = inlined_call_operand.hbm [shape: bf16[16,432], index: 3, kind: input, shape index: {}]
  %s4 = inlined_call_operand.vmem [shape: f32[16,1], index: 4, kind: input, shape index: {}]
  %s5 = inlined_call_operand.vmem [shape: f32[2,1,1152], index: 5, kind: input, shape index: {}]
  %s6 = inlined_call_operand.hbm [shape: f32[2,2,16,640], index: 6, kind: output, shape index: {}]
  %s7 = sld [smem:[#allocation0]]
  $region65: #{tpu_custom_call.1} parent=0
    _
  %s9 = ssub.s32 1, %s7
  %s10 = scalar_select 0, %s9, %s7
  $region1: #{tpu_custom_call.1} parent=0
    #allocation4 [shape = 'u8[114688]{0}', space=vmem, size = 0x1c000, scoped, tag = 'input window, operand 0']
    #allocation5 [shape = 's32[2]{0}', space=sflag, size = 0x8, scoped, tag = 'scoped memory for tpu_custom_call.1']
    #allocation6 [shape = 's32[2]{0}', space=sflag, size = 0x8, scoped, tag = 'scoped memory for tpu_custom_call.1']
    #allocation7 [shape = 'u8[16384]{0}', space=vmem, size = 0x4000, scoped, tag = 'input window, operand 3, single buffered']
    #allocation8 [shape = 's32[1]{0}', space=sflag, size = 0x4, scoped, tag = 'scoped memory for tpu_custom_call.1']
    #allocation9 [shape = 'u8[81920]{0}', space=vmem, size = 0x14000, scoped, tag = 'output window, operand 0']
    %11 = vsyncpa [#allocation5], 0
    %s12 = scalar_lea.sflag [#allocation5], 1
    %13 = vsyncpa %s12, 0
    %14 = vsyncpa [#allocation8], 0
    %15 = vsyncpa [#allocation6], 0
    %s16 = scalar_lea.sflag [#allocation6], 1
    %17 = vsyncpa %s16, 0
    loop: start=0, step=1, limit=6
    $region2: #{tpu_custom_call.1} parent=1 // loop_pre_header
      _
    $region3: #{tpu_custom_call.1} parent=1 // loop_header
      %s19 = sphi 0, %s23
      %p20 = scmp.ge.s32.totalorder %s19, 6
      %s26 = sphi 0, %s38
      %s27 = sphi 0, %s34
      %s28 = sphi 0, %s26
      %s29 = sphi 0, %s27
      %s30 = sphi 0, %s28
      %s31 = sphi 0, %s29
      %s43 = sphi 0, %s45
      %s46 = sphi 0, %s43
      %s47 = sphi 0, %s46
      %s63 = sphi 0, %s47
      %s67 = sphi 0, %s67
      %s69 = sphi 0, %s67
      %s70 = sphi 0, %s69
      %s84 = sphi 0, %s70
      %s88 = sphi 0, %s88
      %s90 = sphi 0, %s88
      %s91 = sphi 0, %s90
      %s105 = sphi 0, %s91
      %s109 = sphi 0, %s109
      %s111 = sphi 0, %s109
      %s112 = sphi 0, %s111
      %s126 = sphi 0, %s112
      %s130 = sphi 0, %s130
      %s132 = sphi 0, %s130
      %s133 = sphi 0, %s132
      %s147 = sphi 0, %s133
      %s153 = sphi 0, %s155
      %s156 = sphi 0, %s153
      %s157 = sphi 0, %s156
      %s173 = sphi 0, %s157
      %s181 = sphi 0, %s183
      %s184 = sphi 0, %s181
      %s185 = sphi 0, %s184
      %s201 = sphi 0, %s185
    $region4: #{tpu_custom_call.1} parent=1 // loop_header_branch
      %22 = sbr.rel (%p20) target = $region8
    $region5: #{tpu_custom_call.1} parent=1 // loop_body
      %s24 = ssub.s32 %s19, 1
      %s25 = ssub.s32 %s19, 2
      %s32 = sadd.s32 1, %s27
      %p33 = scmp.ge.s32.totalorder %s32, 2
      %s34 = scalar_select %p33, 0, %s32
      %s35 = sadd.s32 1, %s26
      %s36 = scalar_select %p33, %s35, %s26
      %p37 = scmp.ge.s32.totalorder %s36, 2
      %s38 = scalar_select %p37, 0, %s36
      %s39 = ssub.s32 %s26, %s38
      %s40 = ssub.s32 %s27, %s34
      %s41 = sor.u32 %s39, %s40
      %p42 = scmp.eq.s32.totalorder %s41, 0
      %s44 = sadd.s32 %s43, 1
      %s45 = scalar_select %p42, %s43, %s44
      %p48 = pneg %p42
      %p49 = scmp.eq.s32.totalorder %s19, 3
      %p50 = por %p48, %p49
      %p51 = scmp.ne.s32.totalorder %s43, %s46
      %p52 = scmp.eq.s32.totalorder %s19, 0
      %p53 = por %p51, %p52
      %p54 = scmp.ne.s32.totalorder %s43, %s46
      %p55 = scmp.eq.s32.totalorder %s24, 3
      %p56 = por %p54, %p55
      %p57 = scmp.ne.s32.totalorder %s46, %s47
      %p58 = scmp.eq.s32.totalorder %s24, 0
      %p59 = por %p57, %p58
      %p60 = scmp.ne.s32.totalorder %s46, %s47
      %p61 = scmp.eq.s32.totalorder %s25, 3
      %p62 = por %p60, %p61
      %p64 = scmp.ne.s32.totalorder %s47, %s63
      %p65 = scmp.eq.s32.totalorder %s25, 0
      %p66 = por %p64, %p65
      %s68 = sadd.s32 %s67, 1
      %p71 = scmp.eq.s32.totalorder %s19, 3
      %p72 = scmp.ne.s32.totalorder %s67, %s69
      %p73 = scmp.eq.s32.totalorder %s19, 0
      %p74 = por %p72, %p73
      %p75 = scmp.ne.s32.totalorder %s67, %s69
      %p76 = scmp.eq.s32.totalorder %s24, 3
      %p77 = por %p75, %p76
      %p78 = scmp.ne.s32.totalorder %s69, %s70
      %p79 = scmp.eq.s32.totalorder %s24, 0
      %p80 = por %p78, %p79
      %p81 = scmp.ne.s32.totalorder %s69, %s70
      %p82 = scmp.eq.s32.totalorder %s25, 3
      %p83 = por %p81, %p82
      %p85 = scmp.ne.s32.totalorder %s70, %s84
      %p86 = scmp.eq.s32.totalorder %s25, 0
      %p87 = por %p85, %p86
      %s89 = sadd.s32 %s88, 1
      %p92 = scmp.eq.s32.totalorder %s19, 3
      %p93 = scmp.ne.s32.totalorder %s88, %s90
      %p94 = scmp.eq.s32.totalorder %s19, 0
      %p95 = por %p93, %p94
      %p96 = scmp.ne.s32.totalorder %s88, %s90
      %p97 = scmp.eq.s32.totalorder %s24, 3
      %p98 = por %p96, %p97
      %p99 = scmp.ne.s32.totalorder %s90, %s91
      %p100 = scmp.eq.s32.totalorder %s24, 0
      %p101 = por %p99, %p100
      %p102 = scmp.ne.s32.totalorder %s90, %s91
      %p103 = scmp.eq.s32.totalorder %s25, 3
      %p104 = por %p102, %p103
      %p106 = scmp.ne.s32.totalorder %s91, %s105
      %p107 = scmp.eq.s32.totalorder %s25, 0
      %p108 = por %p106, %p107
      %s110 = sadd.s32 %s109, 1
      %p113 = scmp.eq.s32.totalorder %s19, 3
      %p114 = scmp.ne.s32.totalorder %s109, %s111
      %p115 = scmp.eq.s32.totalorder %s19, 0
      %p116 = por %p114, %p115
      %p117 = scmp.ne.s32.totalorder %s109, %s111
      %p118 = scmp.eq.s32.totalorder %s24, 3
      %p119 = por %p117, %p118
      %p120 = scmp.ne.s32.totalorder %s111, %s112
      %p121 = scmp.eq.s32.totalorder %s24, 0
      %p122 = por %p120, %p121
      %p123 = scmp.ne.s32.totalorder %s111, %s112
      %p124 = scmp.eq.s32.totalorder %s25, 3
      %p125 = por %p123, %p124
      %p127 = scmp.ne.s32.totalorder %s112, %s126
      %p128 = scmp.eq.s32.totalorder %s25, 0
      %p129 = por %p127, %p128
      %s131 = sadd.s32 %s130, 1
      %p134 = scmp.eq.s32.totalorder %s19, 3
      %p135 = scmp.ne.s32.totalorder %s130, %s132
      %p136 = scmp.eq.s32.totalorder %s19, 0
      %p137 = por %p135, %p136
      %p138 = scmp.ne.s32.totalorder %s130, %s132
      %p139 = scmp.eq.s32.totalorder %s24, 3
      %p140 = por %p138, %p139
      %p141 = scmp.ne.s32.totalorder %s132, %s133
      %p142 = scmp.eq.s32.totalorder %s24, 0
      %p143 = por %p141, %p142
      %p144 = scmp.ne.s32.totalorder %s132, %s133
      %p145 = scmp.eq.s32.totalorder %s25, 3
      %p146 = por %p144, %p145
      %p148 = scmp.ne.s32.totalorder %s133, %s147
      %p149 = scmp.eq.s32.totalorder %s25, 0
      %p150 = por %p148, %p149
      %s151 = ssub.s32 %s27, %s34
      %p152 = scmp.eq.s32.totalorder %s151, 0
      %s154 = sadd.s32 %s153, 1
      %s155 = scalar_select %p152, %s153, %s154
      %p158 = pneg %p152
      %p159 = scmp.eq.s32.totalorder %s19, 3
      %p160 = por %p158, %p159
      %p161 = scmp.ne.s32.totalorder %s153, %s156
      %p162 = scmp.eq.s32.totalorder %s19, 0
      %p163 = por %p161, %p162
      %p164 = scmp.ne.s32.totalorder %s153, %s156
      %p165 = scmp.eq.s32.totalorder %s24, 3
      %p166 = por %p164, %p165
      %p167 = scmp.ne.s32.totalorder %s156, %s157
      %p168 = scmp.eq.s32.totalorder %s24, 0
      %p169 = por %p167, %p168
      %p170 = scmp.ne.s32.totalorder %s156, %s157
      %p171 = scmp.eq.s32.totalorder %s25, 3
      %p172 = por %p170, %p171
      %p174 = scmp.ne.s32.totalorder %s157, %s173
      %p175 = scmp.eq.s32.totalorder %s25, 0
      %p176 = por %p174, %p175
      %s177 = ssub.s32 %s26, %s38
      %s178 = ssub.s32 %s27, %s34
      %s179 = sor.u32 %s177, %s178
      %p180 = scmp.eq.s32.totalorder %s179, 0
      %s182 = sadd.s32 %s181, 1
      %s183 = scalar_select %p180, %s181, %s182
      %p186 = pneg %p180
      %p187 = scmp.eq.s32.totalorder %s19, 3
      %p188 = por %p186, %p187
      %p189 = scmp.ne.s32.totalorder %s181, %s184
      %p190 = scmp.eq.s32.totalorder %s19, 0
      %p191 = por %p189, %p190
      %p192 = scmp.ne.s32.totalorder %s181, %s184
      %p193 = scmp.eq.s32.totalorder %s24, 3
      %p194 = por %p192, %p193
      %p195 = scmp.ne.s32.totalorder %s184, %s185
      %p196 = scmp.eq.s32.totalorder %s24, 0
      %p197 = por %p195, %p196
      %p198 = scmp.ne.s32.totalorder %s184, %s185
      %p199 = scmp.eq.s32.totalorder %s25, 3
      %p200 = por %p198, %p199
      %p202 = scmp.ne.s32.totalorder %s185, %s201
      %p203 = scmp.eq.s32.totalorder %s25, 0
      %p204 = por %p202, %p203
      %p205 = scmp.le.s32.totalorder 1, %s19
      %p206 = scmp.lt.s32.totalorder %s19, 5
      %p207 = pnand %p205, %p206
      %p208 = pneg %p207
      // Predicated region
      $region9: #{tpu_custom_call.1} parent=5 // pred_check
        _
      $region10: #{tpu_custom_call.1} parent=5 // pred_check_branch
        %210 = sbr.rel (%p207) target = $region12
      $region11: #{tpu_custom_call.1} parent=5 // pred_region
        %s211 = ssub.s32 %s19, 1
        // Predicated region
        $region13: #{tpu_custom_call.1} parent=11 // pred_check
          %p212 = pneg %p80
        $region14: #{tpu_custom_call.1} parent=11 // pred_check_branch
          %214 = sbr.rel (%p212) target = $region16
        $region15: #{tpu_custom_call.1} parent=11 // pred_region
          _
        $region16: #{tpu_custom_call.1} parent=11 // pred_fallthru
          _
        // Predicated region
        $region17: #{tpu_custom_call.1} parent=11 // pred_check
          %p215 = pneg %p101
        $region18: #{tpu_custom_call.1} parent=11 // pred_check_branch
          %217 = sbr.rel (%p215) target = $region20
        $region19: #{tpu_custom_call.1} parent=11 // pred_region
          _
        $region20: #{tpu_custom_call.1} parent=11 // pred_fallthru
          _
        // Predicated region
        $region21: #{tpu_custom_call.1} parent=11 // pred_check
          %p218 = pneg %p122
        $region22: #{tpu_custom_call.1} parent=11 // pred_check_branch
          %220 = sbr.rel (%p218) target = $region24
        $region23: #{tpu_custom_call.1} parent=11 // pred_region
          %s222 = ssub.s32 512, 512
          %223 = vsyncadd [#allocation8], %s222
          %s224 = sshll.u32 [#allocation7], 4
          %s225 = int_to_ptr.vmem [resolvable:$true] %s224
          %230 = dma.hbm_to_vmem [thread:$0]  %s3, 512, %s225, [#allocation8], 256, 256, 16
        $region24: #{tpu_custom_call.1} parent=11 // pred_fallthru
          _
        // Predicated region
        $region25: #{tpu_custom_call.1} parent=11 // pred_check
          %p231 = pneg %p143
        $region26: #{tpu_custom_call.1} parent=11 // pred_check_branch
          %233 = sbr.rel (%p231) target = $region28
        $region27: #{tpu_custom_call.1} parent=11 // pred_region
          _
        $region28: #{tpu_custom_call.1} parent=11 // pred_fallthru
          _
      $region12: #{tpu_custom_call.1} parent=5 // pred_fallthru
        _
      %p234 = scmp.lt.s32.totalorder %s19, 4
      // Predicated region
      $region29: #{tpu_custom_call.1} parent=5 // pred_check
        %p235 = pneg %p234
      $region30: #{tpu_custom_call.1} parent=5 // pred_check_branch
        %237 = sbr.rel (%p235) target = $region32
      $region31: #{tpu_custom_call.1} parent=5 // pred_region
        // Predicated region
        $region33: #{tpu_custom_call.1} parent=31 // pred_check
          %p238 = pneg %p53
        $region34: #{tpu_custom_call.1} parent=31 // pred_check_branch
          %240 = sbr.rel (%p238) target = $region36
        $region35: #{tpu_custom_call.1} parent=31 // pred_region
          %s241 = sand.u32 %s43, 1
          %s242 = scalar_lea.sflag [#allocation5], %s241
          %s243 = sand.u32 %s43, 1
          %s244 = smul.addr %s243, 112
          %s245 = scalar_lea.vmem [#allocation4], %s244
          %s247 = ssub.s32 1792, 1792
          %248 = vsyncadd %s242, %s247
          %s249 = smul.addr %s27, 28
          %s250 = smul.addr %s26, 56
          %s251 = sadd.s32 %s249, %s250
          %s252 = smul.addr %s251, 64
          %s253 = scalar_lea.hbm %s0, %s252
          %s254 = sshll.u32 %s245, 4
          %s255 = int_to_ptr.vmem [resolvable:$true] %s254
          %260 = dma.hbm_to_vmem [thread:$0]  %s253, 1792, %s255, %s242, 896, 896, 56
        $region36: #{tpu_custom_call.1} parent=31 // pred_fallthru
          _
        // Predicated region
        $region37: #{tpu_custom_call.1} parent=31 // pred_check
          %p261 = pneg %p163
        $region38: #{tpu_custom_call.1} parent=31 // pred_check_branch
          %263 = sbr.rel (%p261) target = $region40
        $region39: #{tpu_custom_call.1} parent=31 // pred_region
          %p264 = scmp.lt.s32.totalorder %s27, 1
          %s265 = scalar_select %p264, %s27, 1
          %s266 = smul.addr %s265, 9
          %s267 = scalar_lea.vmem %s5, %s266
        $region40: #{tpu_custom_call.1} parent=31 // pred_fallthru
          _
      $region32: #{tpu_custom_call.1} parent=5 // pred_fallthru
        _
      %p268 = scmp.le.s32.totalorder 1, %s19
      %p269 = scmp.lt.s32.totalorder %s19, 5
      %p270 = pnand %p268, %p269
      %p271 = pneg %p270
      // Predicated region
      $region41: #{tpu_custom_call.1} parent=5 // pred_check
        _
      $region42: #{tpu_custom_call.1} parent=5 // pred_check_branch
        %273 = sbr.rel (%p270) target = $region44
      $region43: #{tpu_custom_call.1} parent=5 // pred_region
        %s274 = ssub.s32 %s19, 1
        %s275 = sand.u32 %s46, 1
        %s276 = scalar_lea.sflag [#allocation5], %s275
        %s277 = sand.u32 %s46, 1
        %s278 = smul.addr %s277, 112
        %s279 = scalar_lea.vmem [#allocation4], %s278
        // Predicated region
        $region45: #{tpu_custom_call.1} parent=43 // pred_check
          %p280 = pneg %p59
        $region46: #{tpu_custom_call.1} parent=43 // pred_check_branch
          %282 = sbr.rel (%p280) target = $region48
        $region47: #{tpu_custom_call.1} parent=43 // pred_region
          %283 = dma.done %s276, 1792
        $region48: #{tpu_custom_call.1} parent=43 // pred_fallthru
          _
        // Predicated region
        $region49: #{tpu_custom_call.1} parent=43 // pred_check
          %p284 = pneg %p122
        $region50: #{tpu_custom_call.1} parent=43 // pred_check_branch
          %286 = sbr.rel (%p284) target = $region52
        $region51: #{tpu_custom_call.1} parent=43 // pred_region
          %287 = dma.done [#allocation8], 512
        $region52: #{tpu_custom_call.1} parent=43 // pred_fallthru
          _
        %s288 = sand.u32 %s46, 1
        %s289 = scalar_lea.sflag [#allocation5], %s288
        %s290 = sand.u32 %s46, 1
        %s291 = smul.addr %s290, 112
        %s292 = scalar_lea.vmem [#allocation4], %s291
        %p293 = pneg %p59
        %p294 = pneg %p56
        %p295 = pneg %p80
        %p296 = pneg %p77
        %p297 = pneg %p101
        %p298 = pneg %p98
        %p299 = pneg %p122
        %p300 = pneg %p119
        %p301 = pneg %p143
        %p302 = pneg %p140
        %p303 = scmp.lt.s32.totalorder %s29, 1
        %s304 = scalar_select %p303, %s29, 1
        %s305 = smul.addr %s304, 9
        %s306 = scalar_lea.vmem %s5, %s305
        %p307 = pneg %p169
        %p308 = pneg %p166
        %p309 = pneg %p197
        %p310 = pneg %p194
        %s311 = sand.u32 %s184, 1
        %s312 = scalar_lea.sflag [#allocation6], %s311
        %s313 = sand.u32 %s184, 1
        %s314 = smul.addr %s313, 80
        %s315 = scalar_lea.vmem [#allocation9], %s314
        %p316 = scmp.lt.s32.totalorder %s29, 1
        %s317 = scalar_select %p316, %s29, 1
        %s318 = smul.addr %s317, 9
        %s319 = scalar_lea.vmem %s5, %s318
        %v321 = vld [vmem:[%s279] sm:$0xff]
        %v322 = vld [vmem:[%s279 + $0x8] sm:$0xff]
        %v323 = vld [vmem:[%s279 + $0x10] sm:$0xff]
        %v324 = vld [vmem:[%s279 + $0x18] sm:$0xff]
        %v325 = vld [vmem:[%s279 + $0x20] sm:$0xf]
        %v326 = vld [vmem:[%s279 + $0x38] sm:$0xff]
        %v327 = vld [vmem:[%s279 + $0x40] sm:$0xff]
        %v328 = vld [vmem:[%s279 + $0x48] sm:$0xff]
        %v329 = vld [vmem:[%s279 + $0x50] sm:$0xff]
        %v330 = vld [vmem:[%s279 + $0x58] sm:$0xf]
        %v341 = vunpack.c.l.b16 %v321
        %v342 = vunpack.c.h.b16 %v321
        %v343 = vunpack.c.l.b16 %v322
        %v344 = vunpack.c.h.b16 %v322
        %v345 = vunpack.c.l.b16 %v323
        %v346 = vunpack.c.h.b16 %v323
        %v347 = vunpack.c.l.b16 %v324
        %v348 = vunpack.c.h.b16 %v324
        %v349 = vunpack.c.l.b16 %v325
        %v350 = vunpack.c.l.b16 %v326
        %v351 = vunpack.c.h.b16 %v326
        %v352 = vunpack.c.l.b16 %v327
        %v353 = vunpack.c.h.b16 %v327
        %v354 = vunpack.c.l.b16 %v328
        %v355 = vunpack.c.h.b16 %v328
        %v356 = vunpack.c.l.b16 %v329
        %v357 = vunpack.c.h.b16 %v329
        %v358 = vunpack.c.l.b16 %v330
        %v359 = vpack.c.b16 %v350, %v341
        %v360 = vpack.c.b16 %v351, %v342
        %v361 = vpack.c.b16 %v352, %v343
        %v362 = vpack.c.b16 %v353, %v344
        %v363 = vpack.c.b16 %v354, %v345
        %v364 = vpack.c.b16 %v355, %v346
        %v365 = vpack.c.b16 %v356, %v347
        %v366 = vpack.c.b16 %v357, %v348
        %v367 = vpack.c.b16 %v358, %v349
        %377 = vst [vmem:[#allocation2] sm:$0xff] %v359
        %378 = vst [vmem:[#allocation2 + $0x8] sm:$0xff] %v360
        %379 = vst [vmem:[#allocation2 + $0x10] sm:$0xff] %v361
        %380 = vst [vmem:[#allocation2 + $0x18] sm:$0xff] %v362
        %381 = vst [vmem:[#allocation2 + $0x20] sm:$0xff] %v363
        %382 = vst [vmem:[#allocation2 + $0x28] sm:$0xff] %v364
        %383 = vst [vmem:[#allocation2 + $0x30] sm:$0xff] %v365
        %384 = vst [vmem:[#allocation2 + $0x38] sm:$0xff] %v366
        %385 = vst [vmem:[#allocation2 + $0x40] sm:$0xff] %v367
        %v386 = vld [vmem:[%s279] sm:$0xff]
        %v387 = vld [vmem:[%s279 + $0x8] sm:$0xff]
        %v388 = vld [vmem:[%s279 + $0x10] sm:$0xff]
        %v389 = vld [vmem:[%s279 + $0x18] sm:$0xff]
        %v390 = vld [vmem:[%s279 + $0x20] sm:$0xff]
        %v391 = vld [vmem:[%s279 + $0x38] sm:$0xff]
        %v392 = vld [vmem:[%s279 + $0x40] sm:$0xff]
        %v393 = vld [vmem:[%s279 + $0x48] sm:$0xff]
        %v394 = vld [vmem:[%s279 + $0x50] sm:$0xff]
        %v395 = vld [vmem:[%s279 + $0x58] sm:$0xff]
        %v406 = vunpack.c.l.b16 %v386
        %v407 = vunpack.c.h.b16 %v386
        %v408 = vunpack.c.l.b16 %v387
        %v409 = vunpack.c.h.b16 %v387
        %v410 = vunpack.c.l.b16 %v388
        %v411 = vunpack.c.h.b16 %v388
        %v412 = vunpack.c.l.b16 %v389
        %v413 = vunpack.c.h.b16 %v389
        %v414 = vunpack.c.l.b16 %v390
        %v415 = vunpack.c.h.b16 %v390
        %v416 = vunpack.c.l.b16 %v391
        %v417 = vunpack.c.h.b16 %v391
        %v418 = vunpack.c.l.b16 %v392
        %v419 = vunpack.c.h.b16 %v392
        %v420 = vunpack.c.l.b16 %v393
        %v421 = vunpack.c.h.b16 %v393
        %v422 = vunpack.c.l.b16 %v394
        %v423 = vunpack.c.h.b16 %v394
        %v424 = vunpack.c.l.b16 %v395
        %v425 = vunpack.c.h.b16 %v395
        %v426 = vpack.c.b16 %v416, %v406
        %v427 = vpack.c.b16 %v417, %v407
        %v428 = vpack.c.b16 %v418, %v408
        %v429 = vpack.c.b16 %v419, %v409
        %v430 = vpack.c.b16 %v420, %v410
        %v431 = vpack.c.b16 %v421, %v411
        %v432 = vpack.c.b16 %v422, %v412
        %v433 = vpack.c.b16 %v423, %v413
        %v434 = vpack.c.b16 %v424, %v414
        %v435 = vpack.c.b16 %v425, %v415
        %436 = vrot.lane.b32.xlu0 %v426, 126
        %v437 = vpop.permute.xlu0 %436
        %438 = vrot.lane.b32.xlu0 %v427, 126
        %v439 = vpop.permute.xlu0 %438
        %440 = vrot.lane.b32.xlu0 %v428, 126
        %v441 = vpop.permute.xlu0 %440
        %442 = vrot.lane.b32.xlu0 %v429, 126
        %v443 = vpop.permute.xlu0 %442
        %444 = vrot.lane.b32.xlu0 %v430, 126
        %v445 = vpop.permute.xlu0 %444
        %446 = vrot.lane.b32.xlu0 %v431, 126
        %v447 = vpop.permute.xlu0 %446
        %448 = vrot.lane.b32.xlu0 %v432, 126
        %v449 = vpop.permute.xlu0 %448
        %450 = vrot.lane.b32.xlu0 %v433, 126
        %v451 = vpop.permute.xlu0 %450
        %452 = vrot.lane.b32.xlu0 %v434, 126
        %v453 = vpop.permute.xlu0 %452
        %454 = vrot.lane.b32.xlu0 %v435, 126
        %v455 = vpop.permute.xlu0 %454
        %vm456 = vcmask 1031168
        %v457 = vsel %vm456, %v437, %v439
        %v458 = vsel %vm456, %v439, %v441
        %v459 = vsel %vm456, %v441, %v443
        %v460 = vsel %vm456, %v443, %v445
        %v461 = vsel %vm456, %v445, %v447
        %v462 = vsel %vm456, %v447, %v449
        %v463 = vsel %vm456, %v449, %v451
        %v464 = vsel %vm456, %v451, %v453
        %v465 = vsel %vm456, %v453, %v455
        %475 = vst [vmem:[#allocation2 + $0x48] sm:$0xff] %v457
        %476 = vst [vmem:[#allocation2 + $0x50] sm:$0xff] %v458
        %477 = vst [vmem:[#allocation2 + $0x58] sm:$0xff] %v459
        %478 = vst [vmem:[#allocation2 + $0x60] sm:$0xff] %v460
        %479 = vst [vmem:[#allocation2 + $0x68] sm:$0xff] %v461
        %480 = vst [vmem:[#allocation2 + $0x70] sm:$0xff] %v462
        %481 = vst [vmem:[#allocation2 + $0x78] sm:$0xff] %v463
        %482 = vst [vmem:[#allocation2 + $0x80] sm:$0xff] %v464
        %483 = vst [vmem:[#allocation2 + $0x88] sm:$0xff] %v465
        %v484 = vld [vmem:[%s279] sm:$0xff]
        %v485 = vld [vmem:[%s279 + $0x8] sm:$0xff]
        %v486 = vld [vmem:[%s279 + $0x10] sm:$0xff]
        %v487 = vld [vmem:[%s279 + $0x18] sm:$0xff]
        %v488 = vld [vmem:[%s279 + $0x20] sm:$0xff]
        %v489 = vld [vmem:[%s279 + $0x38] sm:$0xff]
        %v490 = vld [vmem:[%s279 + $0x40] sm:$0xff]
        %v491 = vld [vmem:[%s279 + $0x48] sm:$0xff]
        %v492 = vld [vmem:[%s279 + $0x50] sm:$0xff]
        %v493 = vld [vmem:[%s279 + $0x58] sm:$0xff]
        %v504 = vunpack.c.l.b16 %v484
        %v505 = vunpack.c.h.b16 %v484
        %v506 = vunpack.c.l.b16 %v485
        %v507 = vunpack.c.h.b16 %v485
        %v508 = vunpack.c.l.b16 %v486
        %v509 = vunpack.c.h.b16 %v486
        %v510 = vunpack.c.l.b16 %v487
        %v511 = vunpack.c.h.b16 %v487
        %v512 = vunpack.c.l.b16 %v488
        %v513 = vunpack.c.h.b16 %v488
        %v514 = vunpack.c.l.b16 %v489
        %v515 = vunpack.c.h.b16 %v489
        %v516 = vunpack.c.l.b16 %v490
        %v517 = vunpack.c.h.b16 %v490
        %v518 = vunpack.c.l.b16 %v491
        %v519 = vunpack.c.h.b16 %v491
        %v520 = vunpack.c.l.b16 %v492
        %v521 = vunpack.c.h.b16 %v492
        %v522 = vunpack.c.l.b16 %v493
        %v523 = vunpack.c.h.b16 %v493
        %v524 = vpack.c.b16 %v514, %v504
        %v525 = vpack.c.b16 %v515, %v505
        %v526 = vpack.c.b16 %v516, %v506
        %v527 = vpack.c.b16 %v517, %v507
        %v528 = vpack.c.b16 %v518, %v508
        %v529 = vpack.c.b16 %v519, %v509
        %v530 = vpack.c.b16 %v520, %v510
        %v531 = vpack.c.b16 %v521, %v511
        %v532 = vpack.c.b16 %v522, %v512
        %v533 = vpack.c.b16 %v523, %v513
        %534 = vrot.lane.b32.xlu0 %v524, 124
        %v535 = vpop.permute.xlu0 %534
        %536 = vrot.lane.b32.xlu0 %v525, 124
        %v537 = vpop.permute.xlu0 %536
        %538 = vrot.lane.b32.xlu0 %v526, 124
        %v539 = vpop.permute.xlu0 %538
        %540 = vrot.lane.b32.xlu0 %v527, 124
        %v541 = vpop.permute.xlu0 %540
        %542 = vrot.lane.b32.xlu0 %v528, 124
        %v543 = vpop.permute.xlu0 %542
        %544 = vrot.lane.b32.xlu0 %v529, 124
        %v545 = vpop.permute.xlu0 %544
        %546 = vrot.lane.b32.xlu0 %v530, 124
        %v547 = vpop.permute.xlu0 %546
        %548 = vrot.lane.b32.xlu0 %v531, 124
        %v549 = vpop.permute.xlu0 %548
        %550 = vrot.lane.b32.xlu0 %v532, 124
        %v551 = vpop.permute.xlu0 %550
        %552 = vrot.lane.b32.xlu0 %v533, 124
        %v553 = vpop.permute.xlu0 %552
        %vm554 = vcmask 1014784
        %v555 = vsel %vm554, %v535, %v537
        %v556 = vsel %vm554, %v537, %v539
        %v557 = vsel %vm554, %v539, %v541
        %v558 = vsel %vm554, %v541, %v543
        %v559 = vsel %vm554, %v543, %v545
        %v560 = vsel %vm554, %v545, %v547
        %v561 = vsel %vm554, %v547, %v549
        %v562 = vsel %vm554, %v549, %v551
        %v563 = vsel %vm554, %v551, %v553
        %573 = vst [vmem:[#allocation2 + $0x90] sm:$0xff] %v555
        %574 = vst [vmem:[#allocation2 + $0x98] sm:$0xff] %v556
        %575 = vst [vmem:[#allocation2 + $0xa0] sm:$0xff] %v557
        %576 = vst [vmem:[#allocation2 + $0xa8] sm:$0xff] %v558
        %577 = vst [vmem:[#allocation2 + $0xb0] sm:$0xff] %v559
        %578 = vst [vmem:[#allocation2 + $0xb8] sm:$0xff] %v560
        %579 = vst [vmem:[#allocation2 + $0xc0] sm:$0xff] %v561
        %580 = vst [vmem:[#allocation2 + $0xc8] sm:$0xff] %v562
        %581 = vst [vmem:[#allocation2 + $0xd0] sm:$0xff] %v563
        %v582 = vld [vmem:[%s279] sm:$0xff]
        %v583 = vld [vmem:[%s279 + $0x8] sm:$0xff]
        %v584 = vld [vmem:[%s279 + $0x10] sm:$0xff]
        %v585 = vld [vmem:[%s279 + $0x18] sm:$0xff]
        %v586 = vld [vmem:[%s279 + $0x20] sm:$0xff]
        %v587 = vld [vmem:[%s279 + $0x38] sm:$0xff]
        %v588 = vld [vmem:[%s279 + $0x40] sm:$0xff]
        %v589 = vld [vmem:[%s279 + $0x48] sm:$0xff]
        %v590 = vld [vmem:[%s279 + $0x50] sm:$0xff]
        %v591 = vld [vmem:[%s279 + $0x58] sm:$0xff]
        %v602 = vunpack.c.l.b16 %v582
        %v603 = vunpack.c.h.b16 %v582
        %v604 = vunpack.c.l.b16 %v583
        %v605 = vunpack.c.h.b16 %v583
        %v606 = vunpack.c.l.b16 %v584
        %v607 = vunpack.c.h.b16 %v584
        %v608 = vunpack.c.l.b16 %v585
        %v609 = vunpack.c.h.b16 %v585
        %v610 = vunpack.c.l.b16 %v586
        %v611 = vunpack.c.h.b16 %v586
        %v612 = vunpack.c.l.b16 %v587
        %v613 = vunpack.c.h.b16 %v587
        %v614 = vunpack.c.l.b16 %v588
        %v615 = vunpack.c.h.b16 %v588
        %v616 = vunpack.c.l.b16 %v589
        %v617 = vunpack.c.h.b16 %v589
        %v618 = vunpack.c.l.b16 %v590
        %v619 = vunpack.c.h.b16 %v590
        %v620 = vunpack.c.l.b16 %v591
        %v621 = vunpack.c.h.b16 %v591
        %v622 = vpack.c.b16 %v612, %v602
        %v623 = vpack.c.b16 %v613, %v603
        %v624 = vpack.c.b16 %v614, %v604
        %v625 = vpack.c.b16 %v615, %v605
        %v626 = vpack.c.b16 %v616, %v606
        %v627 = vpack.c.b16 %v617, %v607
        %v628 = vpack.c.b16 %v618, %v608
        %v629 = vpack.c.b16 %v619, %v609
        %v630 = vpack.c.b16 %v620, %v610
        %v631 = vpack.c.b16 %v621, %v611
        %632 = vrot.lane.b32.xlu0 %v622, 104
        %v633 = vpop.permute.xlu0 %632
        %634 = vrot.lane.b32.xlu0 %v623, 104
        %v635 = vpop.permute.xlu0 %634
        %636 = vrot.lane.b32.xlu0 %v624, 104
        %v637 = vpop.permute.xlu0 %636
        %638 = vrot.lane.b32.xlu0 %v625, 104
        %v639 = vpop.permute.xlu0 %638
        %640 = vrot.lane.b32.xlu0 %v626, 104
        %v641 = vpop.permute.xlu0 %640
        %642 = vrot.lane.b32.xlu0 %v627, 104
        %v643 = vpop.permute.xlu0 %642
        %644 = vrot.lane.b32.xlu0 %v628, 104
        %v645 = vpop.permute.xlu0 %644
        %646 = vrot.lane.b32.xlu0 %v629, 104
        %v647 = vpop.permute.xlu0 %646
        %648 = vrot.lane.b32.xlu0 %v630, 104
        %v649 = vpop.permute.xlu0 %648
        %650 = vrot.lane.b32.xlu0 %v631, 104
        %v651 = vpop.permute.xlu0 %650
        %vm652 = vcmask 850944
        %v653 = vsel %vm652, %v633, %v635
        %v654 = vsel %vm652, %v635, %v637
        %v655 = vsel %vm652, %v637, %v639
        %v656 = vsel %vm652, %v639, %v641
        %v657 = vsel %vm652, %v641, %v643
        %v658 = vsel %vm652, %v643, %v645
        %v659 = vsel %vm652, %v645, %v647
        %v660 = vsel %vm652, %v647, %v649
        %v661 = vsel %vm652, %v649, %v651
        %671 = vst [vmem:[#allocation2 + $0xd8] sm:$0xff] %v653
        %672 = vst [vmem:[#allocation2 + $0xe0] sm:$0xff] %v654
        %673 = vst [vmem:[#allocation2 + $0xe8] sm:$0xff] %v655
        %674 = vst [vmem:[#allocation2 + $0xf0] sm:$0xff] %v656
        %675 = vst [vmem:[#allocation2 + $0xf8] sm:$0xff] %v657
        %676 = vst [vmem:[#allocation2 + $0x100] sm:$0xff] %v658
        %677 = vst [vmem:[#allocation2 + $0x108] sm:$0xff] %v659
        %678 = vst [vmem:[#allocation2 + $0x110] sm:$0xff] %v660
        %679 = vst [vmem:[#allocation2 + $0x118] sm:$0xff] %v661
        %v680 = vld [vmem:[%s279] sm:$0xff]
        %v681 = vld [vmem:[%s279 + $0x8] sm:$0xff]
        %v682 = vld [vmem:[%s279 + $0x10] sm:$0xff]
        %v683 = vld [vmem:[%s279 + $0x18] sm:$0xff]
        %v684 = vld [vmem:[%s279 + $0x20] sm:$0xff]
        %v685 = vld [vmem:[%s279 + $0x38] sm:$0xff]
        %v686 = vld [vmem:[%s279 + $0x40] sm:$0xff]
        %v687 = vld [vmem:[%s279 + $0x48] sm:$0xff]
        %v688 = vld [vmem:[%s279 + $0x50] sm:$0xff]
        %v689 = vld [vmem:[%s279 + $0x58] sm:$0xff]
        %v700 = vunpack.c.l.b16 %v680
        %v701 = vunpack.c.h.b16 %v680
        %v702 = vunpack.c.l.b16 %v681
        %v703 = vunpack.c.h.b16 %v681
        %v704 = vunpack.c.l.b16 %v682
        %v705 = vunpack.c.h.b16 %v682
        %v706 = vunpack.c.l.b16 %v683
        %v707 = vunpack.c.h.b16 %v683
        %v708 = vunpack.c.l.b16 %v684
        %v709 = vunpack.c.h.b16 %v684
        %v710 = vunpack.c.l.b16 %v685
        %v711 = vunpack.c.h.b16 %v685
        %v712 = vunpack.c.l.b16 %v686
        %v713 = vunpack.c.h.b16 %v686
        %v714 = vunpack.c.l.b16 %v687
        %v715 = vunpack.c.h.b16 %v687
        %v716 = vunpack.c.l.b16 %v688
        %v717 = vunpack.c.h.b16 %v688
        %v718 = vunpack.c.l.b16 %v689
        %v719 = vunpack.c.h.b16 %v689
        %v720 = vpack.c.b16 %v710, %v700
        %v721 = vpack.c.b16 %v711, %v701
        %v722 = vpack.c.b16 %v712, %v702
        %v723 = vpack.c.b16 %v713, %v703
        %v724 = vpack.c.b16 %v714, %v704
        %v725 = vpack.c.b16 %v715, %v705
        %v726 = vpack.c.b16 %v716, %v706
        %v727 = vpack.c.b16 %v717, %v707
        %v728 = vpack.c.b16 %v718, %v708
        %v729 = vpack.c.b16 %v719, %v709
        %730 = vrot.lane.b32.xlu0 %v720, 102
        %v731 = vpop.permute.xlu0 %730
        %732 = vrot.lane.b32.xlu0 %v721, 102
        %v733 = vpop.permute.xlu0 %732
        %734 = vrot.lane.b32.xlu0 %v722, 102
        %v735 = vpop.permute.xlu0 %734
        %736 = vrot.lane.b32.xlu0 %v723, 102
        %v737 = vpop.permute.xlu0 %736
        %738 = vrot.lane.b32.xlu0 %v724, 102
        %v739 = vpop.permute.xlu0 %738
        %740 = vrot.lane.b32.xlu0 %v725, 102
        %v741 = vpop.permute.xlu0 %740
        %742 = vrot.lane.b32.xlu0 %v726, 102
        %v743 = vpop.permute.xlu0 %742
        %744 = vrot.lane.b32.xlu0 %v727, 102
        %v745 = vpop.permute.xlu0 %744
        %746 = vrot.lane.b32.xlu0 %v728, 102
        %v747 = vpop.permute.xlu0 %746
        %748 = vrot.lane.b32.xlu0 %v729, 102
        %v749 = vpop.permute.xlu0 %748
        %vm750 = vcmask 834560
        %v751 = vsel %vm750, %v731, %v733
        %v752 = vsel %vm750, %v733, %v735
        %v753 = vsel %vm750, %v735, %v737
        %v754 = vsel %vm750, %v737, %v739
        %v755 = vsel %vm750, %v739, %v741
        %v756 = vsel %vm750, %v741, %v743
        %v757 = vsel %vm750, %v743, %v745
        %v758 = vsel %vm750, %v745, %v747
        %v759 = vsel %vm750, %v747, %v749
        %769 = vst [vmem:[#allocation2 + $0x120] sm:$0xff] %v751
        %770 = vst [vmem:[#allocation2 + $0x128] sm:$0xff] %v752
        %771 = vst [vmem:[#allocation2 + $0x130] sm:$0xff] %v753
        %772 = vst [vmem:[#allocation2 + $0x138] sm:$0xff] %v754
        %773 = vst [vmem:[#allocation2 + $0x140] sm:$0xff] %v755
        %774 = vst [vmem:[#allocation2 + $0x148] sm:$0xff] %v756
        %775 = vst [vmem:[#allocation2 + $0x150] sm:$0xff] %v757
        %776 = vst [vmem:[#allocation2 + $0x158] sm:$0xff] %v758
        %777 = vst [vmem:[#allocation2 + $0x160] sm:$0xff] %v759
        %v778 = vld [vmem:[%s279] sm:$0xff]
        %v779 = vld [vmem:[%s279 + $0x8] sm:$0xff]
        %v780 = vld [vmem:[%s279 + $0x10] sm:$0xff]
        %v781 = vld [vmem:[%s279 + $0x18] sm:$0xff]
        %v782 = vld [vmem:[%s279 + $0x20] sm:$0xff]
        %v783 = vld [vmem:[%s279 + $0x38] sm:$0xff]
        %v784 = vld [vmem:[%s279 + $0x40] sm:$0xff]
        %v785 = vld [vmem:[%s279 + $0x48] sm:$0xff]
        %v786 = vld [vmem:[%s279 + $0x50] sm:$0xff]
        %v787 = vld [vmem:[%s279 + $0x58] sm:$0xff]
        %v798 = vunpack.c.l.b16 %v778
        %v799 = vunpack.c.h.b16 %v778
        %v800 = vunpack.c.l.b16 %v779
        %v801 = vunpack.c.h.b16 %v779
        %v802 = vunpack.c.l.b16 %v780
        %v803 = vunpack.c.h.b16 %v780
        %v804 = vunpack.c.l.b16 %v781
        %v805 = vunpack.c.h.b16 %v781
        %v806 = vunpack.c.l.b16 %v782
        %v807 = vunpack.c.h.b16 %v782
        %v808 = vunpack.c.l.b16 %v783
        %v809 = vunpack.c.h.b16 %v783
        %v810 = vunpack.c.l.b16 %v784
        %v811 = vunpack.c.h.b16 %v784
        %v812 = vunpack.c.l.b16 %v785
        %v813 = vunpack.c.h.b16 %v785
        %v814 = vunpack.c.l.b16 %v786
        %v815 = vunpack.c.h.b16 %v786
        %v816 = vunpack.c.l.b16 %v787
        %v817 = vunpack.c.h.b16 %v787
        %v818 = vpack.c.b16 %v808, %v798
        %v819 = vpack.c.b16 %v809, %v799
        %v820 = vpack.c.b16 %v810, %v800
        %v821 = vpack.c.b16 %v811, %v801
        %v822 = vpack.c.b16 %v812, %v802
        %v823 = vpack.c.b16 %v813, %v803
        %v824 = vpack.c.b16 %v814, %v804
        %v825 = vpack.c.b16 %v815, %v805
        %v826 = vpack.c.b16 %v816, %v806
        %v827 = vpack.c.b16 %v817, %v807
        %828 = vrot.lane.b32.xlu0 %v818, 100
        %v829 = vpop.permute.xlu0 %828
        %830 = vrot.lane.b32.xlu0 %v819, 100
        %v831 = vpop.permute.xlu0 %830
        %832 = vrot.lane.b32.xlu0 %v820, 100
        %v833 = vpop.permute.xlu0 %832
        %834 = vrot.lane.b32.xlu0 %v821, 100
        %v835 = vpop.permute.xlu0 %834
        %836 = vrot.lane.b32.xlu0 %v822, 100
        %v837 = vpop.permute.xlu0 %836
        %838 = vrot.lane.b32.xlu0 %v823, 100
        %v839 = vpop.permute.xlu0 %838
        %840 = vrot.lane.b32.xlu0 %v824, 100
        %v841 = vpop.permute.xlu0 %840
        %842 = vrot.lane.b32.xlu0 %v825, 100
        %v843 = vpop.permute.xlu0 %842
        %844 = vrot.lane.b32.xlu0 %v826, 100
        %v845 = vpop.permute.xlu0 %844
        %846 = vrot.lane.b32.xlu0 %v827, 100
        %v847 = vpop.permute.xlu0 %846
        %vm848 = vcmask 818176
        %v849 = vsel %vm848, %v829, %v831
        %v850 = vsel %vm848, %v831, %v833
        %v851 = vsel %vm848, %v833, %v835
        %v852 = vsel %vm848, %v835, %v837
        %v853 = vsel %vm848, %v837, %v839
        %v854 = vsel %vm848, %v839, %v841
        %v855 = vsel %vm848, %v841, %v843
        %v856 = vsel %vm848, %v843, %v845
        %v857 = vsel %vm848, %v845, %v847
        %867 = vst [vmem:[#allocation2 + $0x168] sm:$0xff] %v849
        %868 = vst [vmem:[#allocation2 + $0x170] sm:$0xff] %v850
        %869 = vst [vmem:[#allocation2 + $0x178] sm:$0xff] %v851
        %870 = vst [vmem:[#allocation2 + $0x180] sm:$0xff] %v852
        %871 = vst [vmem:[#allocation2 + $0x188] sm:$0xff] %v853
        %872 = vst [vmem:[#allocation2 + $0x190] sm:$0xff] %v854
        %873 = vst [vmem:[#allocation2 + $0x198] sm:$0xff] %v855
        %874 = vst [vmem:[#allocation2 + $0x1a0] sm:$0xff] %v856
        %875 = vst [vmem:[#allocation2 + $0x1a8] sm:$0xff] %v857
        %v876 = vld [vmem:[%s279] sm:$0xff]
        %v877 = vld [vmem:[%s279 + $0x8] sm:$0xff]
        %v878 = vld [vmem:[%s279 + $0x10] sm:$0xff]
        %v879 = vld [vmem:[%s279 + $0x18] sm:$0xff]
        %v880 = vld [vmem:[%s279 + $0x20] sm:$0xff]
        %v881 = vld [vmem:[%s279 + $0x38] sm:$0xff]
        %v882 = vld [vmem:[%s279 + $0x40] sm:$0xff]
        %v883 = vld [vmem:[%s279 + $0x48] sm:$0xff]
        %v884 = vld [vmem:[%s279 + $0x50] sm:$0xff]
        %v885 = vld [vmem:[%s279 + $0x58] sm:$0xff]
        %v896 = vunpack.c.l.b16 %v876
        %v897 = vunpack.c.h.b16 %v876
        %v898 = vunpack.c.l.b16 %v877
        %v899 = vunpack.c.h.b16 %v877
        %v900 = vunpack.c.l.b16 %v878
        %v901 = vunpack.c.h.b16 %v878
        %v902 = vunpack.c.l.b16 %v879
        %v903 = vunpack.c.h.b16 %v879
        %v904 = vunpack.c.l.b16 %v880
        %v905 = vunpack.c.h.b16 %v880
        %v906 = vunpack.c.l.b16 %v881
        %v907 = vunpack.c.h.b16 %v881
        %v908 = vunpack.c.l.b16 %v882
        %v909 = vunpack.c.h.b16 %v882
        %v910 = vunpack.c.l.b16 %v883
        %v911 = vunpack.c.h.b16 %v883
        %v912 = vunpack.c.l.b16 %v884
        %v913 = vunpack.c.h.b16 %v884
        %v914 = vunpack.c.l.b16 %v885
        %v915 = vunpack.c.h.b16 %v885
        %v916 = vpack.c.b16 %v906, %v896
        %v917 = vpack.c.b16 %v907, %v897
        %v918 = vpack.c.b16 %v908, %v898
        %v919 = vpack.c.b16 %v909, %v899
        %v920 = vpack.c.b16 %v910, %v900
        %v921 = vpack.c.b16 %v911, %v901
        %v922 = vpack.c.b16 %v912, %v902
        %v923 = vpack.c.b16 %v913, %v903
        %v924 = vpack.c.b16 %v914, %v904
        %v925 = vpack.c.b16 %v915, %v905
        %926 = vrot.lane.b32.xlu0 %v916, 80
        %v927 = vpop.permute.xlu0 %926
        %928 = vrot.lane.b32.xlu0 %v917, 80
        %v929 = vpop.permute.xlu0 %928
        %930 = vrot.lane.b32.xlu0 %v918, 80
        %v931 = vpop.permute.xlu0 %930
        %932 = vrot.lane.b32.xlu0 %v919, 80
        %v933 = vpop.permute.xlu0 %932
        %934 = vrot.lane.b32.xlu0 %v920, 80
        %v935 = vpop.permute.xlu0 %934
        %936 = vrot.lane.b32.xlu0 %v921, 80
        %v937 = vpop.permute.xlu0 %936
        %938 = vrot.lane.b32.xlu0 %v922, 80
        %v939 = vpop.permute.xlu0 %938
        %940 = vrot.lane.b32.xlu0 %v923, 80
        %v941 = vpop.permute.xlu0 %940
        %942 = vrot.lane.b32.xlu0 %v924, 80
        %v943 = vpop.permute.xlu0 %942
        %944 = vrot.lane.b32.xlu0 %v925, 80
        %v945 = vpop.permute.xlu0 %944
        %vm946 = vcmask 654336
        %v947 = vsel %vm946, %v927, %v929
        %v948 = vsel %vm946, %v929, %v931
        %v949 = vsel %vm946, %v931, %v933
        %v950 = vsel %vm946, %v933, %v935
        %v951 = vsel %vm946, %v935, %v937
        %v952 = vsel %vm946, %v937, %v939
        %v953 = vsel %vm946, %v939, %v941
        %v954 = vsel %vm946, %v941, %v943
        %v955 = vsel %vm946, %v943, %v945
        %965 = vst [vmem:[#allocation2 + $0x1b0] sm:$0xff] %v947
        %966 = vst [vmem:[#allocation2 + $0x1b8] sm:$0xff] %v948
        %967 = vst [vmem:[#allocation2 + $0x1c0] sm:$0xff] %v949
        %968 = vst [vmem:[#allocation2 + $0x1c8] sm:$0xff] %v950
        %969 = vst [vmem:[#allocation2 + $0x1d0] sm:$0xff] %v951
        %970 = vst [vmem:[#allocation2 + $0x1d8] sm:$0xff] %v952
        %971 = vst [vmem:[#allocation2 + $0x1e0] sm:$0xff] %v953
        %972 = vst [vmem:[#allocation2 + $0x1e8] sm:$0xff] %v954
        %973 = vst [vmem:[#allocation2 + $0x1f0] sm:$0xff] %v955
        %v974 = vld [vmem:[%s279] sm:$0xff]
        %v975 = vld [vmem:[%s279 + $0x8] sm:$0xff]
        %v976 = vld [vmem:[%s279 + $0x10] sm:$0xff]
        %v977 = vld [vmem:[%s279 + $0x18] sm:$0xff]
        %v978 = vld [vmem:[%s279 + $0x20] sm:$0xff]
        %v979 = vld [vmem:[%s279 + $0x38] sm:$0xff]
        %v980 = vld [vmem:[%s279 + $0x40] sm:$0xff]
        %v981 = vld [vmem:[%s279 + $0x48] sm:$0xff]
        %v982 = vld [vmem:[%s279 + $0x50] sm:$0xff]
        %v983 = vld [vmem:[%s279 + $0x58] sm:$0xff]
        %v994 = vunpack.c.l.b16 %v974
        %v995 = vunpack.c.h.b16 %v974
        %v996 = vunpack.c.l.b16 %v975
        %v997 = vunpack.c.h.b16 %v975
        %v998 = vunpack.c.l.b16 %v976
        %v999 = vunpack.c.h.b16 %v976
        %v1000 = vunpack.c.l.b16 %v977
        %v1001 = vunpack.c.h.b16 %v977
        %v1002 = vunpack.c.l.b16 %v978
        %v1003 = vunpack.c.h.b16 %v978
        %v1004 = vunpack.c.l.b16 %v979
        %v1005 = vunpack.c.h.b16 %v979
        %v1006 = vunpack.c.l.b16 %v980
        %v1007 = vunpack.c.h.b16 %v980
        %v1008 = vunpack.c.l.b16 %v981
        %v1009 = vunpack.c.h.b16 %v981
        %v1010 = vunpack.c.l.b16 %v982
        %v1011 = vunpack.c.h.b16 %v982
        %v1012 = vunpack.c.l.b16 %v983
        %v1013 = vunpack.c.h.b16 %v983
        %v1014 = vpack.c.b16 %v1004, %v994
        %v1015 = vpack.c.b16 %v1005, %v995
        %v1016 = vpack.c.b16 %v1006, %v996
        %v1017 = vpack.c.b16 %v1007, %v997
        %v1018 = vpack.c.b16 %v1008, %v998
        %v1019 = vpack.c.b16 %v1009, %v999
        %v1020 = vpack.c.b16 %v1010, %v1000
        %v1021 = vpack.c.b16 %v1011, %v1001
        %v1022 = vpack.c.b16 %v1012, %v1002
        %v1023 = vpack.c.b16 %v1013, %v1003
        %1024 = vrot.lane.b32.xlu0 %v1014, 78
        %v1025 = vpop.permute.xlu0 %1024
        %1026 = vrot.lane.b32.xlu0 %v1015, 78
        %v1027 = vpop.permute.xlu0 %1026
        %1028 = vrot.lane.b32.xlu0 %v1016, 78
        %v1029 = vpop.permute.xlu0 %1028
        %1030 = vrot.lane.b32.xlu0 %v1017, 78
        %v1031 = vpop.permute.xlu0 %1030
        %1032 = vrot.lane.b32.xlu0 %v1018, 78
        %v1033 = vpop.permute.xlu0 %1032
        %1034 = vrot.lane.b32.xlu0 %v1019, 78
        %v1035 = vpop.permute.xlu0 %1034
        %1036 = vrot.lane.b32.xlu0 %v1020, 78
        %v1037 = vpop.permute.xlu0 %1036
        %1038 = vrot.lane.b32.xlu0 %v1021, 78
        %v1039 = vpop.permute.xlu0 %1038
        %1040 = vrot.lane.b32.xlu0 %v1022, 78
        %v1041 = vpop.permute.xlu0 %1040
        %1042 = vrot.lane.b32.xlu0 %v1023, 78
        %v1043 = vpop.permute.xlu0 %1042
        %vm1044 = vcmask 637952
        %v1045 = vsel %vm1044, %v1025, %v1027
        %v1046 = vsel %vm1044, %v1027, %v1029
        %v1047 = vsel %vm1044, %v1029, %v1031
        %v1048 = vsel %vm1044, %v1031, %v1033
        %v1049 = vsel %vm1044, %v1033, %v1035
        %v1050 = vsel %vm1044, %v1035, %v1037
        %v1051 = vsel %vm1044, %v1037, %v1039
        %v1052 = vsel %vm1044, %v1039, %v1041
        %v1053 = vsel %vm1044, %v1041, %v1043
        %1063 = vst [vmem:[#allocation2 + $0x1f8] sm:$0xff] %v1045
        %1064 = vst [vmem:[#allocation2 + $0x200] sm:$0xff] %v1046
        %1065 = vst [vmem:[#allocation2 + $0x208] sm:$0xff] %v1047
        %1066 = vst [vmem:[#allocation2 + $0x210] sm:$0xff] %v1048
        %1067 = vst [vmem:[#allocation2 + $0x218] sm:$0xff] %v1049
        %1068 = vst [vmem:[#allocation2 + $0x220] sm:$0xff] %v1050
        %1069 = vst [vmem:[#allocation2 + $0x228] sm:$0xff] %v1051
        %1070 = vst [vmem:[#allocation2 + $0x230] sm:$0xff] %v1052
        %1071 = vst [vmem:[#allocation2 + $0x238] sm:$0xff] %v1053
        %v1072 = vld [vmem:[%s279] sm:$0xff]
        %v1073 = vld [vmem:[%s279 + $0x8] sm:$0xff]
        %v1074 = vld [vmem:[%s279 + $0x10] sm:$0xff]
        %v1075 = vld [vmem:[%s279 + $0x18] sm:$0xff]
        %v1076 = vld [vmem:[%s279 + $0x20] sm:$0xff]
        %v1077 = vld [vmem:[%s279 + $0x38] sm:$0xff]
        %v1078 = vld [vmem:[%s279 + $0x40] sm:$0xff]
        %v1079 = vld [vmem:[%s279 + $0x48] sm:$0xff]
        %v1080 = vld [vmem:[%s279 + $0x50] sm:$0xff]
        %v1081 = vld [vmem:[%s279 + $0x58] sm:$0xff]
        %v1092 = vunpack.c.l.b16 %v1072
        %v1093 = vunpack.c.h.b16 %v1072
        %v1094 = vunpack.c.l.b16 %v1073
        %v1095 = vunpack.c.h.b16 %v1073
        %v1096 = vunpack.c.l.b16 %v1074
        %v1097 = vunpack.c.h.b16 %v1074
        %v1098 = vunpack.c.l.b16 %v1075
        %v1099 = vunpack.c.h.b16 %v1075
        %v1100 = vunpack.c.l.b16 %v1076
        %v1101 = vunpack.c.h.b16 %v1076
        %v1102 = vunpack.c.l.b16 %v1077
        %v1103 = vunpack.c.h.b16 %v1077
        %v1104 = vunpack.c.l.b16 %v1078
        %v1105 = vunpack.c.h.b16 %v1078
        %v1106 = vunpack.c.l.b16 %v1079
        %v1107 = vunpack.c.h.b16 %v1079
        %v1108 = vunpack.c.l.b16 %v1080
        %v1109 = vunpack.c.h.b16 %v1080
        %v1110 = vunpack.c.l.b16 %v1081
        %v1111 = vunpack.c.h.b16 %v1081
        %v1112 = vpack.c.b16 %v1102, %v1092
        %v1113 = vpack.c.b16 %v1103, %v1093
        %v1114 = vpack.c.b16 %v1104, %v1094
        %v1115 = vpack.c.b16 %v1105, %v1095
        %v1116 = vpack.c.b16 %v1106, %v1096
        %v1117 = vpack.c.b16 %v1107, %v1097
        %v1118 = vpack.c.b16 %v1108, %v1098
        %v1119 = vpack.c.b16 %v1109, %v1099
        %v1120 = vpack.c.b16 %v1110, %v1100
        %v1121 = vpack.c.b16 %v1111, %v1101
        %1122 = vrot.lane.b32.xlu0 %v1112, 76
        %v1123 = vpop.permute.xlu0 %1122
        %1124 = vrot.lane.b32.xlu0 %v1113, 76
        %v1125 = vpop.permute.xlu0 %1124
        %1126 = vrot.lane.b32.xlu0 %v1114, 76
        %v1127 = vpop.permute.xlu0 %1126
        %1128 = vrot.lane.b32.xlu0 %v1115, 76
        %v1129 = vpop.permute.xlu0 %1128
        %1130 = vrot.lane.b32.xlu0 %v1116, 76
        %v1131 = vpop.permute.xlu0 %1130
        %1132 = vrot.lane.b32.xlu0 %v1117, 76
        %v1133 = vpop.permute.xlu0 %1132
        %1134 = vrot.lane.b32.xlu0 %v1118, 76
        %v1135 = vpop.permute.xlu0 %1134
        %1136 = vrot.lane.b32.xlu0 %v1119, 76
        %v1137 = vpop.permute.xlu0 %1136
        %1138 = vrot.lane.b32.xlu0 %v1120, 76
        %v1139 = vpop.permute.xlu0 %1138
        %1140 = vrot.lane.b32.xlu0 %v1121, 76
        %v1141 = vpop.permute.xlu0 %1140
        %vm1142 = vcmask 621568
        %v1143 = vsel %vm1142, %v1123, %v1125
        %v1144 = vsel %vm1142, %v1125, %v1127
        %v1145 = vsel %vm1142, %v1127, %v1129
        %v1146 = vsel %vm1142, %v1129, %v1131
        %v1147 = vsel %vm1142, %v1131, %v1133
        %v1148 = vsel %vm1142, %v1133, %v1135
        %v1149 = vsel %vm1142, %v1135, %v1137
        %v1150 = vsel %vm1142, %v1137, %v1139
        %v1151 = vsel %vm1142, %v1139, %v1141
        %1161 = vst [vmem:[#allocation2 + $0x240] sm:$0xff] %v1143
        %1162 = vst [vmem:[#allocation2 + $0x248] sm:$0xff] %v1144
        %1163 = vst [vmem:[#allocation2 + $0x250] sm:$0xff] %v1145
        %1164 = vst [vmem:[#allocation2 + $0x258] sm:$0xff] %v1146
        %1165 = vst [vmem:[#allocation2 + $0x260] sm:$0xff] %v1147
        %1166 = vst [vmem:[#allocation2 + $0x268] sm:$0xff] %v1148
        %1167 = vst [vmem:[#allocation2 + $0x270] sm:$0xff] %v1149
        %1168 = vst [vmem:[#allocation2 + $0x278] sm:$0xff] %v1150
        %1169 = vst [vmem:[#allocation2 + $0x280] sm:$0xff] %v1151
        %v1170 = vld [vmem:[%s279 + $0x8] sm:$0xff]
        %v1171 = vld [vmem:[%s279 + $0x10] sm:$0xff]
        %v1172 = vld [vmem:[%s279 + $0x18] sm:$0xff]
        %v1173 = vld [vmem:[%s279 + $0x20] sm:$0xff]
        %v1174 = vld [vmem:[%s279 + $0x28] sm:$0xff]
        %v1175 = vld [vmem:[%s279 + $0x40] sm:$0xff]
        %v1176 = vld [vmem:[%s279 + $0x48] sm:$0xff]
        %v1177 = vld [vmem:[%s279 + $0x50] sm:$0xff]
        %v1178 = vld [vmem:[%s279 + $0x58] sm:$0xff]
        %v1179 = vld [vmem:[%s279 + $0x60] sm:$0xff]
        %v1190 = vunpack.c.l.b16 %v1170
        %v1191 = vunpack.c.h.b16 %v1170
        %v1192 = vunpack.c.l.b16 %v1171
        %v1193 = vunpack.c.h.b16 %v1171
        %v1194 = vunpack.c.l.b16 %v1172
        %v1195 = vunpack.c.h.b16 %v1172
        %v1196 = vunpack.c.l.b16 %v1173
        %v1197 = vunpack.c.h.b16 %v1173
        %v1198 = vunpack.c.l.b16 %v1174
        %v1199 = vunpack.c.h.b16 %v1174
        %v1200 = vunpack.c.l.b16 %v1175
        %v1201 = vunpack.c.h.b16 %v1175
        %v1202 = vunpack.c.l.b16 %v1176
        %v1203 = vunpack.c.h.b16 %v1176
        %v1204 = vunpack.c.l.b16 %v1177
        %v1205 = vunpack.c.h.b16 %v1177
        %v1206 = vunpack.c.l.b16 %v1178
        %v1207 = vunpack.c.h.b16 %v1178
        %v1208 = vunpack.c.l.b16 %v1179
        %v1209 = vunpack.c.h.b16 %v1179
        %v1210 = vpack.c.b16 %v1200, %v1190
        %v1211 = vpack.c.b16 %v1201, %v1191
        %v1212 = vpack.c.b16 %v1202, %v1192
        %v1213 = vpack.c.b16 %v1203, %v1193
        %v1214 = vpack.c.b16 %v1204, %v1194
        %v1215 = vpack.c.b16 %v1205, %v1195
        %v1216 = vpack.c.b16 %v1206, %v1196
        %v1217 = vpack.c.b16 %v1207, %v1197
        %v1218 = vpack.c.b16 %v1208, %v1198
        %v1219 = vpack.c.b16 %v1209, %v1199
        %1220 = vrot.lane.b32.xlu0 %v1210, 96
        %v1221 = vpop.permute.xlu0 %1220
        %1222 = vrot.lane.b32.xlu0 %v1211, 96
        %v1223 = vpop.permute.xlu0 %1222
        %1224 = vrot.lane.b32.xlu0 %v1212, 96
        %v1225 = vpop.permute.xlu0 %1224
        %1226 = vrot.lane.b32.xlu0 %v1213, 96
        %v1227 = vpop.permute.xlu0 %1226
        %1228 = vrot.lane.b32.xlu0 %v1214, 96
        %v1229 = vpop.permute.xlu0 %1228
        %1230 = vrot.lane.b32.xlu0 %v1215, 96
        %v1231 = vpop.permute.xlu0 %1230
        %1232 = vrot.lane.b32.xlu0 %v1216, 96
        %v1233 = vpop.permute.xlu0 %1232
        %1234 = vrot.lane.b32.xlu0 %v1217, 96
        %v1235 = vpop.permute.xlu0 %1234
        %1236 = vrot.lane.b32.xlu0 %v1218, 96
        %v1237 = vpop.permute.xlu0 %1236
        %1238 = vrot.lane.b32.xlu0 %v1219, 96
        %v1239 = vpop.permute.xlu0 %1238
        %vm1240 = vcmask 785408
        %v1241 = vsel %vm1240, %v1221, %v1223
        %v1242 = vsel %vm1240, %v1223, %v1225
        %v1243 = vsel %vm1240, %v1225, %v1227
        %v1244 = vsel %vm1240, %v1227, %v1229
        %v1245 = vsel %vm1240, %v1229, %v1231
        %v1246 = vsel %vm1240, %v1231, %v1233
        %v1247 = vsel %vm1240, %v1233, %v1235
        %v1248 = vsel %vm1240, %v1235, %v1237
        %v1249 = vsel %vm1240, %v1237, %v1239
        %1259 = vst [vmem:[#allocation2 + $0x288] sm:$0xff] %v1241
        %1260 = vst [vmem:[#allocation2 + $0x290] sm:$0xff] %v1242
        %1261 = vst [vmem:[#allocation2 + $0x298] sm:$0xff] %v1243
        %1262 = vst [vmem:[#allocation2 + $0x2a0] sm:$0xff] %v1244
        %1263 = vst [vmem:[#allocation2 + $0x2a8] sm:$0xff] %v1245
        %1264 = vst [vmem:[#allocation2 + $0x2b0] sm:$0xff] %v1246
        %1265 = vst [vmem:[#allocation2 + $0x2b8] sm:$0xff] %v1247
        %1266 = vst [vmem:[#allocation2 + $0x2c0] sm:$0xff] %v1248
        %1267 = vst [vmem:[#allocation2 + $0x2c8] sm:$0xff] %v1249
        %v1268 = vld [vmem:[%s279 + $0x8] sm:$0xff]
        %v1269 = vld [vmem:[%s279 + $0x10] sm:$0xff]
        %v1270 = vld [vmem:[%s279 + $0x18] sm:$0xff]
        %v1271 = vld [vmem:[%s279 + $0x20] sm:$0xff]
        %v1272 = vld [vmem:[%s279 + $0x28] sm:$0xff]
        %v1273 = vld [vmem:[%s279 + $0x40] sm:$0xff]
        %v1274 = vld [vmem:[%s279 + $0x48] sm:$0xff]
        %v1275 = vld [vmem:[%s279 + $0x50] sm:$0xff]
        %v1276 = vld [vmem:[%s279 + $0x58] sm:$0xff]
        %v1277 = vld [vmem:[%s279 + $0x60] sm:$0xff]
        %v1288 = vunpack.c.l.b16 %v1268
        %v1289 = vunpack.c.h.b16 %v1268
        %v1290 = vunpack.c.l.b16 %v1269
        %v1291 = vunpack.c.h.b16 %v1269
        %v1292 = vunpack.c.l.b16 %v1270
        %v1293 = vunpack.c.h.b16 %v1270
        %v1294 = vunpack.c.l.b16 %v1271
        %v1295 = vunpack.c.h.b16 %v1271
        %v1296 = vunpack.c.l.b16 %v1272
        %v1297 = vunpack.c.h.b16 %v1272
        %v1298 = vunpack.c.l.b16 %v1273
        %v1299 = vunpack.c.h.b16 %v1273
        %v1300 = vunpack.c.l.b16 %v1274
        %v1301 = vunpack.c.h.b16 %v1274
        %v1302 = vunpack.c.l.b16 %v1275
        %v1303 = vunpack.c.h.b16 %v1275
        %v1304 = vunpack.c.l.b16 %v1276
        %v1305 = vunpack.c.h.b16 %v1276
        %v1306 = vunpack.c.l.b16 %v1277
        %v1307 = vunpack.c.h.b16 %v1277
        %v1308 = vpack.c.b16 %v1298, %v1288
        %v1309 = vpack.c.b16 %v1299, %v1289
        %v1310 = vpack.c.b16 %v1300, %v1290
        %v1311 = vpack.c.b16 %v1301, %v1291
        %v1312 = vpack.c.b16 %v1302, %v1292
        %v1313 = vpack.c.b16 %v1303, %v1293
        %v1314 = vpack.c.b16 %v1304, %v1294
        %v1315 = vpack.c.b16 %v1305, %v1295
        %v1316 = vpack.c.b16 %v1306, %v1296
        %v1317 = vpack.c.b16 %v1307, %v1297
        %1318 = vrot.lane.b32.xlu0 %v1308, 94
        %v1319 = vpop.permute.xlu0 %1318
        %1320 = vrot.lane.b32.xlu0 %v1309, 94
        %v1321 = vpop.permute.xlu0 %1320
        %1322 = vrot.lane.b32.xlu0 %v1310, 94
        %v1323 = vpop.permute.xlu0 %1322
        %1324 = vrot.lane.b32.xlu0 %v1311, 94
        %v1325 = vpop.permute.xlu0 %1324
        %1326 = vrot.lane.b32.xlu0 %v1312, 94
        %v1327 = vpop.permute.xlu0 %1326
        %1328 = vrot.lane.b32.xlu0 %v1313, 94
        %v1329 = vpop.permute.xlu0 %1328
        %1330 = vrot.lane.b32.xlu0 %v1314, 94
        %v1331 = vpop.permute.xlu0 %1330
        %1332 = vrot.lane.b32.xlu0 %v1315, 94
        %v1333 = vpop.permute.xlu0 %1332
        %1334 = vrot.lane.b32.xlu0 %v1316, 94
        %v1335 = vpop.permute.xlu0 %1334
        %1336 = vrot.lane.b32.xlu0 %v1317, 94
        %v1337 = vpop.permute.xlu0 %1336
        %vm1338 = vcmask 769024
        %v1339 = vsel %vm1338, %v1319, %v1321
        %v1340 = vsel %vm1338, %v1321, %v1323
        %v1341 = vsel %vm1338, %v1323, %v1325
        %v1342 = vsel %vm1338, %v1325, %v1327
        %v1343 = vsel %vm1338, %v1327, %v1329
        %v1344 = vsel %vm1338, %v1329, %v1331
        %v1345 = vsel %vm1338, %v1331, %v1333
        %v1346 = vsel %vm1338, %v1333, %v1335
        %v1347 = vsel %vm1338, %v1335, %v1337
        %1357 = vst [vmem:[#allocation2 + $0x2d0] sm:$0xff] %v1339
        %1358 = vst [vmem:[#allocation2 + $0x2d8] sm:$0xff] %v1340
        %1359 = vst [vmem:[#allocation2 + $0x2e0] sm:$0xff] %v1341
        %1360 = vst [vmem:[#allocation2 + $0x2e8] sm:$0xff] %v1342
        %1361 = vst [vmem:[#allocation2 + $0x2f0] sm:$0xff] %v1343
        %1362 = vst [vmem:[#allocation2 + $0x2f8] sm:$0xff] %v1344
        %1363 = vst [vmem:[#allocation2 + $0x300] sm:$0xff] %v1345
        %1364 = vst [vmem:[#allocation2 + $0x308] sm:$0xff] %v1346
        %1365 = vst [vmem:[#allocation2 + $0x310] sm:$0xff] %v1347
        %v1366 = vld [vmem:[%s279 + $0x8] sm:$0xff]
        %v1367 = vld [vmem:[%s279 + $0x10] sm:$0xff]
        %v1368 = vld [vmem:[%s279 + $0x18] sm:$0xff]
        %v1369 = vld [vmem:[%s279 + $0x20] sm:$0xff]
        %v1370 = vld [vmem:[%s279 + $0x28] sm:$0xff]
        %v1371 = vld [vmem:[%s279 + $0x40] sm:$0xff]
        %v1372 = vld [vmem:[%s279 + $0x48] sm:$0xff]
        %v1373 = vld [vmem:[%s279 + $0x50] sm:$0xff]
        %v1374 = vld [vmem:[%s279 + $0x58] sm:$0xff]
        %v1375 = vld [vmem:[%s279 + $0x60] sm:$0xff]
        %v1386 = vunpack.c.l.b16 %v1366
        %v1387 = vunpack.c.h.b16 %v1366
        %v1388 = vunpack.c.l.b16 %v1367
        %v1389 = vunpack.c.h.b16 %v1367
        %v1390 = vunpack.c.l.b16 %v1368
        %v1391 = vunpack.c.h.b16 %v1368
        %v1392 = vunpack.c.l.b16 %v1369
        %v1393 = vunpack.c.h.b16 %v1369
        %v1394 = vunpack.c.l.b16 %v1370
        %v1395 = vunpack.c.h.b16 %v1370
        %v1396 = vunpack.c.l.b16 %v1371
        %v1397 = vunpack.c.h.b16 %v1371
        %v1398 = vunpack.c.l.b16 %v1372
        %v1399 = vunpack.c.h.b16 %v1372
        %v1400 = vunpack.c.l.b16 %v1373
        %v1401 = vunpack.c.h.b16 %v1373
        %v1402 = vunpack.c.l.b16 %v1374
        %v1403 = vunpack.c.h.b16 %v1374
        %v1404 = vunpack.c.l.b16 %v1375
        %v1405 = vunpack.c.h.b16 %v1375
        %v1406 = vpack.c.b16 %v1396, %v1386
        %v1407 = vpack.c.b16 %v1397, %v1387
        %v1408 = vpack.c.b16 %v1398, %v1388
        %v1409 = vpack.c.b16 %v1399, %v1389
        %v1410 = vpack.c.b16 %v1400, %v1390
        %v1411 = vpack.c.b16 %v1401, %v1391
        %v1412 = vpack.c.b16 %v1402, %v1392
        %v1413 = vpack.c.b16 %v1403, %v1393
        %v1414 = vpack.c.b16 %v1404, %v1394
        %v1415 = vpack.c.b16 %v1405, %v1395
        %1416 = vrot.lane.b32.xlu0 %v1406, 92
        %v1417 = vpop.permute.xlu0 %1416
        %1418 = vrot.lane.b32.xlu0 %v1407, 92
        %v1419 = vpop.permute.xlu0 %1418
        %1420 = vrot.lane.b32.xlu0 %v1408, 92
        %v1421 = vpop.permute.xlu0 %1420
        %1422 = vrot.lane.b32.xlu0 %v1409, 92
        %v1423 = vpop.permute.xlu0 %1422
        %1424 = vrot.lane.b32.xlu0 %v1410, 92
        %v1425 = vpop.permute.xlu0 %1424
        %1426 = vrot.lane.b32.xlu0 %v1411, 92
        %v1427 = vpop.permute.xlu0 %1426
        %1428 = vrot.lane.b32.xlu0 %v1412, 92
        %v1429 = vpop.permute.xlu0 %1428
        %1430 = vrot.lane.b32.xlu0 %v1413, 92
        %v1431 = vpop.permute.xlu0 %1430
        %1432 = vrot.lane.b32.xlu0 %v1414, 92
        %v1433 = vpop.permute.xlu0 %1432
        %1434 = vrot.lane.b32.xlu0 %v1415, 92
        %v1435 = vpop.permute.xlu0 %1434
        %vm1436 = vcmask 752640
        %v1437 = vsel %vm1436, %v1417, %v1419
        %v1438 = vsel %vm1436, %v1419, %v1421
        %v1439 = vsel %vm1436, %v1421, %v1423
        %v1440 = vsel %vm1436, %v1423, %v1425
        %v1441 = vsel %vm1436, %v1425, %v1427
        %v1442 = vsel %vm1436, %v1427, %v1429
        %v1443 = vsel %vm1436, %v1429, %v1431
        %v1444 = vsel %vm1436, %v1431, %v1433
        %v1445 = vsel %vm1436, %v1433, %v1435
        %1455 = vst [vmem:[#allocation2 + $0x318] sm:$0xff] %v1437
        %1456 = vst [vmem:[#allocation2 + $0x320] sm:$0xff] %v1438
        %1457 = vst [vmem:[#allocation2 + $0x328] sm:$0xff] %v1439
        %1458 = vst [vmem:[#allocation2 + $0x330] sm:$0xff] %v1440
        %1459 = vst [vmem:[#allocation2 + $0x338] sm:$0xff] %v1441
        %1460 = vst [vmem:[#allocation2 + $0x340] sm:$0xff] %v1442
        %1461 = vst [vmem:[#allocation2 + $0x348] sm:$0xff] %v1443
        %1462 = vst [vmem:[#allocation2 + $0x350] sm:$0xff] %v1444
        %1463 = vst [vmem:[#allocation2 + $0x358] sm:$0xff] %v1445
        %v1464 = vld [vmem:[%s279 + $0x8] sm:$0xff]
        %v1465 = vld [vmem:[%s279 + $0x10] sm:$0xff]
        %v1466 = vld [vmem:[%s279 + $0x18] sm:$0xff]
        %v1467 = vld [vmem:[%s279 + $0x20] sm:$0xff]
        %v1468 = vld [vmem:[%s279 + $0x28] sm:$0xff]
        %v1469 = vld [vmem:[%s279 + $0x40] sm:$0xff]
        %v1470 = vld [vmem:[%s279 + $0x48] sm:$0xff]
        %v1471 = vld [vmem:[%s279 + $0x50] sm:$0xff]
        %v1472 = vld [vmem:[%s279 + $0x58] sm:$0xff]
        %v1473 = vld [vmem:[%s279 + $0x60] sm:$0xff]
        %v1484 = vunpack.c.l.b16 %v1464
        %v1485 = vunpack.c.h.b16 %v1464
        %v1486 = vunpack.c.l.b16 %v1465
        %v1487 = vunpack.c.h.b16 %v1465
        %v1488 = vunpack.c.l.b16 %v1466
        %v1489 = vunpack.c.h.b16 %v1466
        %v1490 = vunpack.c.l.b16 %v1467
        %v1491 = vunpack.c.h.b16 %v1467
        %v1492 = vunpack.c.l.b16 %v1468
        %v1493 = vunpack.c.h.b16 %v1468
        %v1494 = vunpack.c.l.b16 %v1469
        %v1495 = vunpack.c.h.b16 %v1469
        %v1496 = vunpack.c.l.b16 %v1470
        %v1497 = vunpack.c.h.b16 %v1470
        %v1498 = vunpack.c.l.b16 %v1471
        %v1499 = vunpack.c.h.b16 %v1471
        %v1500 = vunpack.c.l.b16 %v1472
        %v1501 = vunpack.c.h.b16 %v1472
        %v1502 = vunpack.c.l.b16 %v1473
        %v1503 = vunpack.c.h.b16 %v1473
        %v1504 = vpack.c.b16 %v1494, %v1484
        %v1505 = vpack.c.b16 %v1495, %v1485
        %v1506 = vpack.c.b16 %v1496, %v1486
        %v1507 = vpack.c.b16 %v1497, %v1487
        %v1508 = vpack.c.b16 %v1498, %v1488
        %v1509 = vpack.c.b16 %v1499, %v1489
        %v1510 = vpack.c.b16 %v1500, %v1490
        %v1511 = vpack.c.b16 %v1501, %v1491
        %v1512 = vpack.c.b16 %v1502, %v1492
        %v1513 = vpack.c.b16 %v1503, %v1493
        %1514 = vrot.lane.b32.xlu0 %v1504, 72
        %v1515 = vpop.permute.xlu0 %1514
        %1516 = vrot.lane.b32.xlu0 %v1505, 72
        %v1517 = vpop.permute.xlu0 %1516
        %1518 = vrot.lane.b32.xlu0 %v1506, 72
        %v1519 = vpop.permute.xlu0 %1518
        %1520 = vrot.lane.b32.xlu0 %v1507, 72
        %v1521 = vpop.permute.xlu0 %1520
        %1522 = vrot.lane.b32.xlu0 %v1508, 72
        %v1523 = vpop.permute.xlu0 %1522
        %1524 = vrot.lane.b32.xlu0 %v1509, 72
        %v1525 = vpop.permute.xlu0 %1524
        %1526 = vrot.lane.b32.xlu0 %v1510, 72
        %v1527 = vpop.permute.xlu0 %1526
        %1528 = vrot.lane.b32.xlu0 %v1511, 72
        %v1529 = vpop.permute.xlu0 %1528
        %1530 = vrot.lane.b32.xlu0 %v1512, 72
        %v1531 = vpop.permute.xlu0 %1530
        %1532 = vrot.lane.b32.xlu0 %v1513, 72
        %v1533 = vpop.permute.xlu0 %1532
        %vm1534 = vcmask 588800
        %v1535 = vsel %vm1534, %v1515, %v1517
        %v1536 = vsel %vm1534, %v1517, %v1519
        %v1537 = vsel %vm1534, %v1519, %v1521
        %v1538 = vsel %vm1534, %v1521, %v1523
        %v1539 = vsel %vm1534, %v1523, %v1525
        %v1540 = vsel %vm1534, %v1525, %v1527
        %v1541 = vsel %vm1534, %v1527, %v1529
        %v1542 = vsel %vm1534, %v1529, %v1531
        %v1543 = vsel %vm1534, %v1531, %v1533
        %1553 = vst [vmem:[#allocation2 + $0x360] sm:$0xff] %v1535
        %1554 = vst [vmem:[#allocation2 + $0x368] sm:$0xff] %v1536
        %1555 = vst [vmem:[#allocation2 + $0x370] sm:$0xff] %v1537
        %1556 = vst [vmem:[#allocation2 + $0x378] sm:$0xff] %v1538
        %1557 = vst [vmem:[#allocation2 + $0x380] sm:$0xff] %v1539
        %1558 = vst [vmem:[#allocation2 + $0x388] sm:$0xff] %v1540
        %1559 = vst [vmem:[#allocation2 + $0x390] sm:$0xff] %v1541
        %1560 = vst [vmem:[#allocation2 + $0x398] sm:$0xff] %v1542
        %1561 = vst [vmem:[#allocation2 + $0x3a0] sm:$0xff] %v1543
        %v1562 = vld [vmem:[%s279 + $0x8] sm:$0xff]
        %v1563 = vld [vmem:[%s279 + $0x10] sm:$0xff]
        %v1564 = vld [vmem:[%s279 + $0x18] sm:$0xff]
        %v1565 = vld [vmem:[%s279 + $0x20] sm:$0xff]
        %v1566 = vld [vmem:[%s279 + $0x28] sm:$0xff]
        %v1567 = vld [vmem:[%s279 + $0x40] sm:$0xff]
        %v1568 = vld [vmem:[%s279 + $0x48] sm:$0xff]
        %v1569 = vld [vmem:[%s279 + $0x50] sm:$0xff]
        %v1570 = vld [vmem:[%s279 + $0x58] sm:$0xff]
        %v1571 = vld [vmem:[%s279 + $0x60] sm:$0xff]
        %v1582 = vunpack.c.l.b16 %v1562
        %v1583 = vunpack.c.h.b16 %v1562
        %v1584 = vunpack.c.l.b16 %v1563
        %v1585 = vunpack.c.h.b16 %v1563
        %v1586 = vunpack.c.l.b16 %v1564
        %v1587 = vunpack.c.h.b16 %v1564
        %v1588 = vunpack.c.l.b16 %v1565
        %v1589 = vunpack.c.h.b16 %v1565
        %v1590 = vunpack.c.l.b16 %v1566
        %v1591 = vunpack.c.h.b16 %v1566
        %v1592 = vunpack.c.l.b16 %v1567
        %v1593 = vunpack.c.h.b16 %v1567
        %v1594 = vunpack.c.l.b16 %v1568
        %v1595 = vunpack.c.h.b16 %v1568
        %v1596 = vunpack.c.l.b16 %v1569
        %v1597 = vunpack.c.h.b16 %v1569
        %v1598 = vunpack.c.l.b16 %v1570
        %v1599 = vunpack.c.h.b16 %v1570
        %v1600 = vunpack.c.l.b16 %v1571
        %v1601 = vunpack.c.h.b16 %v1571
        %v1602 = vpack.c.b16 %v1592, %v1582
        %v1603 = vpack.c.b16 %v1593, %v1583
        %v1604 = vpack.c.b16 %v1594, %v1584
        %v1605 = vpack.c.b16 %v1595, %v1585
        %v1606 = vpack.c.b16 %v1596, %v1586
        %v1607 = vpack.c.b16 %v1597, %v1587
        %v1608 = vpack.c.b16 %v1598, %v1588
        %v1609 = vpack.c.b16 %v1599, %v1589
        %v1610 = vpack.c.b16 %v1600, %v1590
        %v1611 = vpack.c.b16 %v1601, %v1591
        %1612 = vrot.lane.b32.xlu0 %v1602, 70
        %v1613 = vpop.permute.xlu0 %1612
        %1614 = vrot.lane.b32.xlu0 %v1603, 70
        %v1615 = vpop.permute.xlu0 %1614
        %1616 = vrot.lane.b32.xlu0 %v1604, 70
        %v1617 = vpop.permute.xlu0 %1616
        %1618 = vrot.lane.b32.xlu0 %v1605, 70
        %v1619 = vpop.permute.xlu0 %1618
        %1620 = vrot.lane.b32.xlu0 %v1606, 70
        %v1621 = vpop.permute.xlu0 %1620
        %1622 = vrot.lane.b32.xlu0 %v1607, 70
        %v1623 = vpop.permute.xlu0 %1622
        %1624 = vrot.lane.b32.xlu0 %v1608, 70
        %v1625 = vpop.permute.xlu0 %1624
        %1626 = vrot.lane.b32.xlu0 %v1609, 70
        %v1627 = vpop.permute.xlu0 %1626
        %1628 = vrot.lane.b32.xlu0 %v1610, 70
        %v1629 = vpop.permute.xlu0 %1628
        %1630 = vrot.lane.b32.xlu0 %v1611, 70
        %v1631 = vpop.permute.xlu0 %1630
        %vm1632 = vcmask 572416
        %v1633 = vsel %vm1632, %v1613, %v1615
        %v1634 = vsel %vm1632, %v1615, %v1617
        %v1635 = vsel %vm1632, %v1617, %v1619
        %v1636 = vsel %vm1632, %v1619, %v1621
        %v1637 = vsel %vm1632, %v1621, %v1623
        %v1638 = vsel %vm1632, %v1623, %v1625
        %v1639 = vsel %vm1632, %v1625, %v1627
        %v1640 = vsel %vm1632, %v1627, %v1629
        %v1641 = vsel %vm1632, %v1629, %v1631
        %1651 = vst [vmem:[#allocation2 + $0x3a8] sm:$0xff] %v1633
        %1652 = vst [vmem:[#allocation2 + $0x3b0] sm:$0xff] %v1634
        %1653 = vst [vmem:[#allocation2 + $0x3b8] sm:$0xff] %v1635
        %1654 = vst [vmem:[#allocation2 + $0x3c0] sm:$0xff] %v1636
        %1655 = vst [vmem:[#allocation2 + $0x3c8] sm:$0xff] %v1637
        %1656 = vst [vmem:[#allocation2 + $0x3d0] sm:$0xff] %v1638
        %1657 = vst [vmem:[#allocation2 + $0x3d8] sm:$0xff] %v1639
        %1658 = vst [vmem:[#allocation2 + $0x3e0] sm:$0xff] %v1640
        %1659 = vst [vmem:[#allocation2 + $0x3e8] sm:$0xff] %v1641
        %v1660 = vld [vmem:[%s279 + $0x8] sm:$0xff]
        %v1661 = vld [vmem:[%s279 + $0x10] sm:$0xff]
        %v1662 = vld [vmem:[%s279 + $0x18] sm:$0xff]
        %v1663 = vld [vmem:[%s279 + $0x20] sm:$0xff]
        %v1664 = vld [vmem:[%s279 + $0x28] sm:$0xff]
        %v1665 = vld [vmem:[%s279 + $0x40] sm:$0xff]
        %v1666 = vld [vmem:[%s279 + $0x48] sm:$0xff]
        %v1667 = vld [vmem:[%s279 + $0x50] sm:$0xff]
        %v1668 = vld [vmem:[%s279 + $0x58] sm:$0xff]
        %v1669 = vld [vmem:[%s279 + $0x60] sm:$0xff]
        %v1680 = vunpack.c.l.b16 %v1660
        %v1681 = vunpack.c.h.b16 %v1660
        %v1682 = vunpack.c.l.b16 %v1661
        %v1683 = vunpack.c.h.b16 %v1661
        %v1684 = vunpack.c.l.b16 %v1662
        %v1685 = vunpack.c.h.b16 %v1662
        %v1686 = vunpack.c.l.b16 %v1663
        %v1687 = vunpack.c.h.b16 %v1663
        %v1688 = vunpack.c.l.b16 %v1664
        %v1689 = vunpack.c.h.b16 %v1664
        %v1690 = vunpack.c.l.b16 %v1665
        %v1691 = vunpack.c.h.b16 %v1665
        %v1692 = vunpack.c.l.b16 %v1666
        %v1693 = vunpack.c.h.b16 %v1666
        %v1694 = vunpack.c.l.b16 %v1667
        %v1695 = vunpack.c.h.b16 %v1667
        %v1696 = vunpack.c.l.b16 %v1668
        %v1697 = vunpack.c.h.b16 %v1668
        %v1698 = vunpack.c.l.b16 %v1669
        %v1699 = vunpack.c.h.b16 %v1669
        %v1700 = vpack.c.b16 %v1690, %v1680
        %v1701 = vpack.c.b16 %v1691, %v1681
        %v1702 = vpack.c.b16 %v1692, %v1682
        %v1703 = vpack.c.b16 %v1693, %v1683
        %v1704 = vpack.c.b16 %v1694, %v1684
        %v1705 = vpack.c.b16 %v1695, %v1685
        %v1706 = vpack.c.b16 %v1696, %v1686
        %v1707 = vpack.c.b16 %v1697, %v1687
        %v1708 = vpack.c.b16 %v1698, %v1688
        %v1709 = vpack.c.b16 %v1699, %v1689
        %1710 = vrot.lane.b32.xlu0 %v1700, 68
        %v1711 = vpop.permute.xlu0 %1710
        %1712 = vrot.lane.b32.xlu0 %v1701, 68
        %v1713 = vpop.permute.xlu0 %1712
        %1714 = vrot.lane.b32.xlu0 %v1702, 68
        %v1715 = vpop.permute.xlu0 %1714
        %1716 = vrot.lane.b32.xlu0 %v1703, 68
        %v1717 = vpop.permute.xlu0 %1716
        %1718 = vrot.lane.b32.xlu0 %v1704, 68
        %v1719 = vpop.permute.xlu0 %1718
        %1720 = vrot.lane.b32.xlu0 %v1705, 68
        %v1721 = vpop.permute.xlu0 %1720
        %1722 = vrot.lane.b32.xlu0 %v1706, 68
        %v1723 = vpop.permute.xlu0 %1722
        %1724 = vrot.lane.b32.xlu0 %v1707, 68
        %v1725 = vpop.permute.xlu0 %1724
        %1726 = vrot.lane.b32.xlu0 %v1708, 68
        %v1727 = vpop.permute.xlu0 %1726
        %1728 = vrot.lane.b32.xlu0 %v1709, 68
        %v1729 = vpop.permute.xlu0 %1728
        %vm1730 = vcmask 556032
        %v1731 = vsel %vm1730, %v1711, %v1713
        %v1732 = vsel %vm1730, %v1713, %v1715
        %v1733 = vsel %vm1730, %v1715, %v1717
        %v1734 = vsel %vm1730, %v1717, %v1719
        %v1735 = vsel %vm1730, %v1719, %v1721
        %v1736 = vsel %vm1730, %v1721, %v1723
        %v1737 = vsel %vm1730, %v1723, %v1725
        %v1738 = vsel %vm1730, %v1725, %v1727
        %v1739 = vsel %vm1730, %v1727, %v1729
        %1749 = vst [vmem:[#allocation2 + $0x3f0] sm:$0xff] %v1731
        %1750 = vst [vmem:[#allocation2 + $0x3f8] sm:$0xff] %v1732
        %1751 = vst [vmem:[#allocation2 + $0x400] sm:$0xff] %v1733
        %1752 = vst [vmem:[#allocation2 + $0x408] sm:$0xff] %v1734
        %1753 = vst [vmem:[#allocation2 + $0x410] sm:$0xff] %v1735
        %1754 = vst [vmem:[#allocation2 + $0x418] sm:$0xff] %v1736
        %1755 = vst [vmem:[#allocation2 + $0x420] sm:$0xff] %v1737
        %1756 = vst [vmem:[#allocation2 + $0x428] sm:$0xff] %v1738
        %1757 = vst [vmem:[#allocation2 + $0x430] sm:$0xff] %v1739
        %v1758 = vld [vmem:[%s279 + $0x8] sm:$0xff]
        %v1759 = vld [vmem:[%s279 + $0x10] sm:$0xff]
        %v1760 = vld [vmem:[%s279 + $0x18] sm:$0xff]
        %v1761 = vld [vmem:[%s279 + $0x20] sm:$0xff]
        %v1762 = vld [vmem:[%s279 + $0x28] sm:$0xff]
        %v1763 = vld [vmem:[%s279 + $0x40] sm:$0xff]
        %v1764 = vld [vmem:[%s279 + $0x48] sm:$0xff]
        %v1765 = vld [vmem:[%s279 + $0x50] sm:$0xff]
        %v1766 = vld [vmem:[%s279 + $0x58] sm:$0xff]
        %v1767 = vld [vmem:[%s279 + $0x60] sm:$0xff]
        %v1778 = vunpack.c.l.b16 %v1758
        %v1779 = vunpack.c.h.b16 %v1758
        %v1780 = vunpack.c.l.b16 %v1759
        %v1781 = vunpack.c.h.b16 %v1759
        %v1782 = vunpack.c.l.b16 %v1760
        %v1783 = vunpack.c.h.b16 %v1760
        %v1784 = vunpack.c.l.b16 %v1761
        %v1785 = vunpack.c.h.b16 %v1761
        %v1786 = vunpack.c.l.b16 %v1762
        %v1787 = vunpack.c.h.b16 %v1762
        %v1788 = vunpack.c.l.b16 %v1763
        %v1789 = vunpack.c.h.b16 %v1763
        %v1790 = vunpack.c.l.b16 %v1764
        %v1791 = vunpack.c.h.b16 %v1764
        %v1792 = vunpack.c.l.b16 %v1765
        %v1793 = vunpack.c.h.b16 %v1765
        %v1794 = vunpack.c.l.b16 %v1766
        %v1795 = vunpack.c.h.b16 %v1766
        %v1796 = vunpack.c.l.b16 %v1767
        %v1797 = vunpack.c.h.b16 %v1767
        %v1798 = vpack.c.b16 %v1788, %v1778
        %v1799 = vpack.c.b16 %v1789, %v1779
        %v1800 = vpack.c.b16 %v1790, %v1780
        %v1801 = vpack.c.b16 %v1791, %v1781
        %v1802 = vpack.c.b16 %v1792, %v1782
        %v1803 = vpack.c.b16 %v1793, %v1783
        %v1804 = vpack.c.b16 %v1794, %v1784
        %v1805 = vpack.c.b16 %v1795, %v1785
        %v1806 = vpack.c.b16 %v1796, %v1786
        %v1807 = vpack.c.b16 %v1797, %v1787
        %1808 = vrot.lane.b32.xlu0 %v1798, 48
        %v1809 = vpop.permute.xlu0 %1808
        %1810 = vrot.lane.b32.xlu0 %v1799, 48
        %v1811 = vpop.permute.xlu0 %1810
        %1812 = vrot.lane.b32.xlu0 %v1800, 48
        %v1813 = vpop.permute.xlu0 %1812
        %1814 = vrot.lane.b32.xlu0 %v1801, 48
        %v1815 = vpop.permute.xlu0 %1814
        %1816 = vrot.lane.b32.xlu0 %v1802, 48
        %v1817 = vpop.permute.xlu0 %1816
        %1818 = vrot.lane.b32.xlu0 %v1803, 48
        %v1819 = vpop.permute.xlu0 %1818
        %1820 = vrot.lane.b32.xlu0 %v1804, 48
        %v1821 = vpop.permute.xlu0 %1820
        %1822 = vrot.lane.b32.xlu0 %v1805, 48
        %v1823 = vpop.permute.xlu0 %1822
        %1824 = vrot.lane.b32.xlu0 %v1806, 48
        %v1825 = vpop.permute.xlu0 %1824
        %1826 = vrot.lane.b32.xlu0 %v1807, 48
        %v1827 = vpop.permute.xlu0 %1826
        %vm1828 = vcmask 392192
        %v1829 = vsel %vm1828, %v1809, %v1811
        %v1830 = vsel %vm1828, %v1811, %v1813
        %v1831 = vsel %vm1828, %v1813, %v1815
        %v1832 = vsel %vm1828, %v1815, %v1817
        %v1833 = vsel %vm1828, %v1817, %v1819
        %v1834 = vsel %vm1828, %v1819, %v1821
        %v1835 = vsel %vm1828, %v1821, %v1823
        %v1836 = vsel %vm1828, %v1823, %v1825
        %v1837 = vsel %vm1828, %v1825, %v1827
        %1847 = vst [vmem:[#allocation2 + $0x438] sm:$0xff] %v1829
        %1848 = vst [vmem:[#allocation2 + $0x440] sm:$0xff] %v1830
        %1849 = vst [vmem:[#allocation2 + $0x448] sm:$0xff] %v1831
        %1850 = vst [vmem:[#allocation2 + $0x450] sm:$0xff] %v1832
        %1851 = vst [vmem:[#allocation2 + $0x458] sm:$0xff] %v1833
        %1852 = vst [vmem:[#allocation2 + $0x460] sm:$0xff] %v1834
        %1853 = vst [vmem:[#allocation2 + $0x468] sm:$0xff] %v1835
        %1854 = vst [vmem:[#allocation2 + $0x470] sm:$0xff] %v1836
        %1855 = vst [vmem:[#allocation2 + $0x478] sm:$0xff] %v1837
        %v1856 = vld [vmem:[%s279 + $0x8] sm:$0xff]
        %v1857 = vld [vmem:[%s279 + $0x10] sm:$0xff]
        %v1858 = vld [vmem:[%s279 + $0x18] sm:$0xff]
        %v1859 = vld [vmem:[%s279 + $0x20] sm:$0xff]
        %v1860 = vld [vmem:[%s279 + $0x28] sm:$0xff]
        %v1861 = vld [vmem:[%s279 + $0x40] sm:$0xff]
        %v1862 = vld [vmem:[%s279 + $0x48] sm:$0xff]
        %v1863 = vld [vmem:[%s279 + $0x50] sm:$0xff]
        %v1864 = vld [vmem:[%s279 + $0x58] sm:$0xff]
        %v1865 = vld [vmem:[%s279 + $0x60] sm:$0xff]
        %v1876 = vunpack.c.l.b16 %v1856
        %v1877 = vunpack.c.h.b16 %v1856
        %v1878 = vunpack.c.l.b16 %v1857
        %v1879 = vunpack.c.h.b16 %v1857
        %v1880 = vunpack.c.l.b16 %v1858
        %v1881 = vunpack.c.h.b16 %v1858
        %v1882 = vunpack.c.l.b16 %v1859
        %v1883 = vunpack.c.h.b16 %v1859
        %v1884 = vunpack.c.l.b16 %v1860
        %v1885 = vunpack.c.h.b16 %v1860
        %v1886 = vunpack.c.l.b16 %v1861
        %v1887 = vunpack.c.h.b16 %v1861
        %v1888 = vunpack.c.l.b16 %v1862
        %v1889 = vunpack.c.h.b16 %v1862
        %v1890 = vunpack.c.l.b16 %v1863
        %v1891 = vunpack.c.h.b16 %v1863
        %v1892 = vunpack.c.l.b16 %v1864
        %v1893 = vunpack.c.h.b16 %v1864
        %v1894 = vunpack.c.l.b16 %v1865
        %v1895 = vunpack.c.h.b16 %v1865
        %v1896 = vpack.c.b16 %v1886, %v1876
        %v1897 = vpack.c.b16 %v1887, %v1877
        %v1898 = vpack.c.b16 %v1888, %v1878
        %v1899 = vpack.c.b16 %v1889, %v1879
        %v1900 = vpack.c.b16 %v1890, %v1880
        %v1901 = vpack.c.b16 %v1891, %v1881
        %v1902 = vpack.c.b16 %v1892, %v1882
        %v1903 = vpack.c.b16 %v1893, %v1883
        %v1904 = vpack.c.b16 %v1894, %v1884
        %v1905 = vpack.c.b16 %v1895, %v1885
        %1906 = vrot.lane.b32.xlu0 %v1896, 46
        %v1907 = vpop.permute.xlu0 %1906
        %1908 = vrot.lane.b32.xlu0 %v1897, 46
        %v1909 = vpop.permute.xlu0 %1908
        %1910 = vrot.lane.b32.xlu0 %v1898, 46
        %v1911 = vpop.permute.xlu0 %1910
        %1912 = vrot.lane.b32.xlu0 %v1899, 46
        %v1913 = vpop.permute.xlu0 %1912
        %1914 = vrot.lane.b32.xlu0 %v1900, 46
        %v1915 = vpop.permute.xlu0 %1914
        %1916 = vrot.lane.b32.xlu0 %v1901, 46
        %v1917 = vpop.permute.xlu0 %1916
        %1918 = vrot.lane.b32.xlu0 %v1902, 46
        %v1919 = vpop.permute.xlu0 %1918
        %1920 = vrot.lane.b32.xlu0 %v1903, 46
        %v1921 = vpop.permute.xlu0 %1920
        %1922 = vrot.lane.b32.xlu0 %v1904, 46
        %v1923 = vpop.permute.xlu0 %1922
        %1924 = vrot.lane.b32.xlu0 %v1905, 46
        %v1925 = vpop.permute.xlu0 %1924
        %vm1926 = vcmask 375808
        %v1927 = vsel %vm1926, %v1907, %v1909
        %v1928 = vsel %vm1926, %v1909, %v1911
        %v1929 = vsel %vm1926, %v1911, %v1913
        %v1930 = vsel %vm1926, %v1913, %v1915
        %v1931 = vsel %vm1926, %v1915, %v1917
        %v1932 = vsel %vm1926, %v1917, %v1919
        %v1933 = vsel %vm1926, %v1919, %v1921
        %v1934 = vsel %vm1926, %v1921, %v1923
        %v1935 = vsel %vm1926, %v1923, %v1925
        %1945 = vst [vmem:[#allocation2 + $0x480] sm:$0xff] %v1927
        %1946 = vst [vmem:[#allocation2 + $0x488] sm:$0xff] %v1928
        %1947 = vst [vmem:[#allocation2 + $0x490] sm:$0xff] %v1929
        %1948 = vst [vmem:[#allocation2 + $0x498] sm:$0xff] %v1930
        %1949 = vst [vmem:[#allocation2 + $0x4a0] sm:$0xff] %v1931
        %1950 = vst [vmem:[#allocation2 + $0x4a8] sm:$0xff] %v1932
        %1951 = vst [vmem:[#allocation2 + $0x4b0] sm:$0xff] %v1933
        %1952 = vst [vmem:[#allocation2 + $0x4b8] sm:$0xff] %v1934
        %1953 = vst [vmem:[#allocation2 + $0x4c0] sm:$0xff] %v1935
        %v1954 = vld [vmem:[%s279 + $0x8] sm:$0xff]
        %v1955 = vld [vmem:[%s279 + $0x10] sm:$0xff]
        %v1956 = vld [vmem:[%s279 + $0x18] sm:$0xff]
        %v1957 = vld [vmem:[%s279 + $0x20] sm:$0xff]
        %v1958 = vld [vmem:[%s279 + $0x28] sm:$0xff]
        %v1959 = vld [vmem:[%s279 + $0x40] sm:$0xff]
        %v1960 = vld [vmem:[%s279 + $0x48] sm:$0xff]
        %v1961 = vld [vmem:[%s279 + $0x50] sm:$0xff]
        %v1962 = vld [vmem:[%s279 + $0x58] sm:$0xff]
        %v1963 = vld [vmem:[%s279 + $0x60] sm:$0xff]
        %v1974 = vunpack.c.l.b16 %v1954
        %v1975 = vunpack.c.h.b16 %v1954
        %v1976 = vunpack.c.l.b16 %v1955
        %v1977 = vunpack.c.h.b16 %v1955
        %v1978 = vunpack.c.l.b16 %v1956
        %v1979 = vunpack.c.h.b16 %v1956
        %v1980 = vunpack.c.l.b16 %v1957
        %v1981 = vunpack.c.h.b16 %v1957
        %v1982 = vunpack.c.l.b16 %v1958
        %v1983 = vunpack.c.h.b16 %v1958
        %v1984 = vunpack.c.l.b16 %v1959
        %v1985 = vunpack.c.h.b16 %v1959
        %v1986 = vunpack.c.l.b16 %v1960
        %v1987 = vunpack.c.h.b16 %v1960
        %v1988 = vunpack.c.l.b16 %v1961
        %v1989 = vunpack.c.h.b16 %v1961
        %v1990 = vunpack.c.l.b16 %v1962
        %v1991 = vunpack.c.h.b16 %v1962
        %v1992 = vunpack.c.l.b16 %v1963
        %v1993 = vunpack.c.h.b16 %v1963
        %v1994 = vpack.c.b16 %v1984, %v1974
        %v1995 = vpack.c.b16 %v1985, %v1975
        %v1996 = vpack.c.b16 %v1986, %v1976
        %v1997 = vpack.c.b16 %v1987, %v1977
        %v1998 = vpack.c.b16 %v1988, %v1978
        %v1999 = vpack.c.b16 %v1989, %v1979
        %v2000 = vpack.c.b16 %v1990, %v1980
        %v2001 = vpack.c.b16 %v1991, %v1981
        %v2002 = vpack.c.b16 %v1992, %v1982
        %v2003 = vpack.c.b16 %v1993, %v1983
        %2004 = vrot.lane.b32.xlu0 %v1994, 44
        %v2005 = vpop.permute.xlu0 %2004
        %2006 = vrot.lane.b32.xlu0 %v1995, 44
        %v2007 = vpop.permute.xlu0 %2006
        %2008 = vrot.lane.b32.xlu0 %v1996, 44
        %v2009 = vpop.permute.xlu0 %2008
        %2010 = vrot.lane.b32.xlu0 %v1997, 44
        %v2011 = vpop.permute.xlu0 %2010
        %2012 = vrot.lane.b32.xlu0 %v1998, 44
        %v2013 = vpop.permute.xlu0 %2012
        %2014 = vrot.lane.b32.xlu0 %v1999, 44
        %v2015 = vpop.permute.xlu0 %2014
        %2016 = vrot.lane.b32.xlu0 %v2000, 44
        %v2017 = vpop.permute.xlu0 %2016
        %2018 = vrot.lane.b32.xlu0 %v2001, 44
        %v2019 = vpop.permute.xlu0 %2018
        %2020 = vrot.lane.b32.xlu0 %v2002, 44
        %v2021 = vpop.permute.xlu0 %2020
        %2022 = vrot.lane.b32.xlu0 %v2003, 44
        %v2023 = vpop.permute.xlu0 %2022
        %vm2024 = vcmask 359424
        %v2025 = vsel %vm2024, %v2005, %v2007
        %v2026 = vsel %vm2024, %v2007, %v2009
        %v2027 = vsel %vm2024, %v2009, %v2011
        %v2028 = vsel %vm2024, %v2011, %v2013
        %v2029 = vsel %vm2024, %v2013, %v2015
        %v2030 = vsel %vm2024, %v2015, %v2017
        %v2031 = vsel %vm2024, %v2017, %v2019
        %v2032 = vsel %vm2024, %v2019, %v2021
        %v2033 = vsel %vm2024, %v2021, %v2023
        %2043 = vst [vmem:[#allocation2 + $0x4c8] sm:$0xff] %v2025
        %2044 = vst [vmem:[#allocation2 + $0x4d0] sm:$0xff] %v2026
        %2045 = vst [vmem:[#allocation2 + $0x4d8] sm:$0xff] %v2027
        %2046 = vst [vmem:[#allocation2 + $0x4e0] sm:$0xff] %v2028
        %2047 = vst [vmem:[#allocation2 + $0x4e8] sm:$0xff] %v2029
        %2048 = vst [vmem:[#allocation2 + $0x4f0] sm:$0xff] %v2030
        %2049 = vst [vmem:[#allocation2 + $0x4f8] sm:$0xff] %v2031
        %2050 = vst [vmem:[#allocation2 + $0x500] sm:$0xff] %v2032
        %2051 = vst [vmem:[#allocation2 + $0x508] sm:$0xff] %v2033
        %v2052 = vld [vmem:[%s279 + $0x10] sm:$0xff]
        %v2053 = vld [vmem:[%s279 + $0x18] sm:$0xff]
        %v2054 = vld [vmem:[%s279 + $0x20] sm:$0xff]
        %v2055 = vld [vmem:[%s279 + $0x28] sm:$0xff]
        %v2056 = vld [vmem:[%s279 + $0x30] sm:$0xff]
        %v2057 = vld [vmem:[%s279 + $0x48] sm:$0xff]
        %v2058 = vld [vmem:[%s279 + $0x50] sm:$0xff]
        %v2059 = vld [vmem:[%s279 + $0x58] sm:$0xff]
        %v2060 = vld [vmem:[%s279 + $0x60] sm:$0xff]
        %v2061 = vld [vmem:[%s279 + $0x68] sm:$0xff]
        %v2072 = vunpack.c.l.b16 %v2052
        %v2073 = vunpack.c.h.b16 %v2052
        %v2074 = vunpack.c.l.b16 %v2053
        %v2075 = vunpack.c.h.b16 %v2053
        %v2076 = vunpack.c.l.b16 %v2054
        %v2077 = vunpack.c.h.b16 %v2054
        %v2078 = vunpack.c.l.b16 %v2055
        %v2079 = vunpack.c.h.b16 %v2055
        %v2080 = vunpack.c.l.b16 %v2056
        %v2081 = vunpack.c.h.b16 %v2056
        %v2082 = vunpack.c.l.b16 %v2057
        %v2083 = vunpack.c.h.b16 %v2057
        %v2084 = vunpack.c.l.b16 %v2058
        %v2085 = vunpack.c.h.b16 %v2058
        %v2086 = vunpack.c.l.b16 %v2059
        %v2087 = vunpack.c.h.b16 %v2059
        %v2088 = vunpack.c.l.b16 %v2060
        %v2089 = vunpack.c.h.b16 %v2060
        %v2090 = vunpack.c.l.b16 %v2061
        %v2091 = vunpack.c.h.b16 %v2061
        %v2092 = vpack.c.b16 %v2082, %v2072
        %v2093 = vpack.c.b16 %v2083, %v2073
        %v2094 = vpack.c.b16 %v2084, %v2074
        %v2095 = vpack.c.b16 %v2085, %v2075
        %v2096 = vpack.c.b16 %v2086, %v2076
        %v2097 = vpack.c.b16 %v2087, %v2077
        %v2098 = vpack.c.b16 %v2088, %v2078
        %v2099 = vpack.c.b16 %v2089, %v2079
        %v2100 = vpack.c.b16 %v2090, %v2080
        %v2101 = vpack.c.b16 %v2091, %v2081
        %2102 = vrot.lane.b32.xlu0 %v2092, 64
        %v2103 = vpop.permute.xlu0 %2102
        %2104 = vrot.lane.b32.xlu0 %v2093, 64
        %v2105 = vpop.permute.xlu0 %2104
        %2106 = vrot.lane.b32.xlu0 %v2094, 64
        %v2107 = vpop.permute.xlu0 %2106
        %2108 = vrot.lane.b32.xlu0 %v2095, 64
        %v2109 = vpop.permute.xlu0 %2108
        %2110 = vrot.lane.b32.xlu0 %v2096, 64
        %v2111 = vpop.permute.xlu0 %2110
        %2112 = vrot.lane.b32.xlu0 %v2097, 64
        %v2113 = vpop.permute.xlu0 %2112
        %2114 = vrot.lane.b32.xlu0 %v2098, 64
        %v2115 = vpop.permute.xlu0 %2114
        %2116 = vrot.lane.b32.xlu0 %v2099, 64
        %v2117 = vpop.permute.xlu0 %2116
        %2118 = vrot.lane.b32.xlu0 %v2100, 64
        %v2119 = vpop.permute.xlu0 %2118
        %2120 = vrot.lane.b32.xlu0 %v2101, 64
        %v2121 = vpop.permute.xlu0 %2120
        %vm2122 = vcmask 523264
        %v2123 = vsel %vm2122, %v2103, %v2105
        %v2124 = vsel %vm2122, %v2105, %v2107
        %v2125 = vsel %vm2122, %v2107, %v2109
        %v2126 = vsel %vm2122, %v2109, %v2111
        %v2127 = vsel %vm2122, %v2111, %v2113
        %v2128 = vsel %vm2122, %v2113, %v2115
        %v2129 = vsel %vm2122, %v2115, %v2117
        %v2130 = vsel %vm2122, %v2117, %v2119
        %v2131 = vsel %vm2122, %v2119, %v2121
        %2141 = vst [vmem:[#allocation2 + $0x510] sm:$0xff] %v2123
        %2142 = vst [vmem:[#allocation2 + $0x518] sm:$0xff] %v2124
        %2143 = vst [vmem:[#allocation2 + $0x520] sm:$0xff] %v2125
        %2144 = vst [vmem:[#allocation2 + $0x528] sm:$0xff] %v2126
        %2145 = vst [vmem:[#allocation2 + $0x530] sm:$0xff] %v2127
        %2146 = vst [vmem:[#allocation2 + $0x538] sm:$0xff] %v2128
        %2147 = vst [vmem:[#allocation2 + $0x540] sm:$0xff] %v2129
        %2148 = vst [vmem:[#allocation2 + $0x548] sm:$0xff] %v2130
        %2149 = vst [vmem:[#allocation2 + $0x550] sm:$0xff] %v2131
        %v2150 = vld [vmem:[%s279 + $0x10] sm:$0xff]
        %v2151 = vld [vmem:[%s279 + $0x18] sm:$0xff]
        %v2152 = vld [vmem:[%s279 + $0x20] sm:$0xff]
        %v2153 = vld [vmem:[%s279 + $0x28] sm:$0xff]
        %v2154 = vld [vmem:[%s279 + $0x30] sm:$0xff]
        %v2155 = vld [vmem:[%s279 + $0x48] sm:$0xff]
        %v2156 = vld [vmem:[%s279 + $0x50] sm:$0xff]
        %v2157 = vld [vmem:[%s279 + $0x58] sm:$0xff]
        %v2158 = vld [vmem:[%s279 + $0x60] sm:$0xff]
        %v2159 = vld [vmem:[%s279 + $0x68] sm:$0xff]
        %v2170 = vunpack.c.l.b16 %v2150
        %v2171 = vunpack.c.h.b16 %v2150
        %v2172 = vunpack.c.l.b16 %v2151
        %v2173 = vunpack.c.h.b16 %v2151
        %v2174 = vunpack.c.l.b16 %v2152
        %v2175 = vunpack.c.h.b16 %v2152
        %v2176 = vunpack.c.l.b16 %v2153
        %v2177 = vunpack.c.h.b16 %v2153
        %v2178 = vunpack.c.l.b16 %v2154
        %v2179 = vunpack.c.h.b16 %v2154
        %v2180 = vunpack.c.l.b16 %v2155
        %v2181 = vunpack.c.h.b16 %v2155
        %v2182 = vunpack.c.l.b16 %v2156
        %v2183 = vunpack.c.h.b16 %v2156
        %v2184 = vunpack.c.l.b16 %v2157
        %v2185 = vunpack.c.h.b16 %v2157
        %v2186 = vunpack.c.l.b16 %v2158
        %v2187 = vunpack.c.h.b16 %v2158
        %v2188 = vunpack.c.l.b16 %v2159
        %v2189 = vunpack.c.h.b16 %v2159
        %v2190 = vpack.c.b16 %v2180, %v2170
        %v2191 = vpack.c.b16 %v2181, %v2171
        %v2192 = vpack.c.b16 %v2182, %v2172
        %v2193 = vpack.c.b16 %v2183, %v2173
        %v2194 = vpack.c.b16 %v2184, %v2174
        %v2195 = vpack.c.b16 %v2185, %v2175
        %v2196 = vpack.c.b16 %v2186, %v2176
        %v2197 = vpack.c.b16 %v2187, %v2177
        %v2198 = vpack.c.b16 %v2188, %v2178
        %v2199 = vpack.c.b16 %v2189, %v2179
        %2200 = vrot.lane.b32.xlu0 %v2190, 62
        %v2201 = vpop.permute.xlu0 %2200
        %2202 = vrot.lane.b32.xlu0 %v2191, 62
        %v2203 = vpop.permute.xlu0 %2202
        %2204 = vrot.lane.b32.xlu0 %v2192, 62
        %v2205 = vpop.permute.xlu0 %2204
        %2206 = vrot.lane.b32.xlu0 %v2193, 62
        %v2207 = vpop.permute.xlu0 %2206
        %2208 = vrot.lane.b32.xlu0 %v2194, 62
        %v2209 = vpop.permute.xlu0 %2208
        %2210 = vrot.lane.b32.xlu0 %v2195, 62
        %v2211 = vpop.permute.xlu0 %2210
        %2212 = vrot.lane.b32.xlu0 %v2196, 62
        %v2213 = vpop.permute.xlu0 %2212
        %2214 = vrot.lane.b32.xlu0 %v2197, 62
        %v2215 = vpop.permute.xlu0 %2214
        %2216 = vrot.lane.b32.xlu0 %v2198, 62
        %v2217 = vpop.permute.xlu0 %2216
        %2218 = vrot.lane.b32.xlu0 %v2199, 62
        %v2219 = vpop.permute.xlu0 %2218
        %vm2220 = vcmask 506880
        %v2221 = vsel %vm2220, %v2201, %v2203
        %v2222 = vsel %vm2220, %v2203, %v2205
        %v2223 = vsel %vm2220, %v2205, %v2207
        %v2224 = vsel %vm2220, %v2207, %v2209
        %v2225 = vsel %vm2220, %v2209, %v2211
        %v2226 = vsel %vm2220, %v2211, %v2213
        %v2227 = vsel %vm2220, %v2213, %v2215
        %v2228 = vsel %vm2220, %v2215, %v2217
        %v2229 = vsel %vm2220, %v2217, %v2219
        %2239 = vst [vmem:[#allocation2 + $0x558] sm:$0xff] %v2221
        %2240 = vst [vmem:[#allocation2 + $0x560] sm:$0xff] %v2222
        %2241 = vst [vmem:[#allocation2 + $0x568] sm:$0xff] %v2223
        %2242 = vst [vmem:[#allocation2 + $0x570] sm:$0xff] %v2224
        %2243 = vst [vmem:[#allocation2 + $0x578] sm:$0xff] %v2225
        %2244 = vst [vmem:[#allocation2 + $0x580] sm:$0xff] %v2226
        %2245 = vst [vmem:[#allocation2 + $0x588] sm:$0xff] %v2227
        %2246 = vst [vmem:[#allocation2 + $0x590] sm:$0xff] %v2228
        %2247 = vst [vmem:[#allocation2 + $0x598] sm:$0xff] %v2229
        %v2248 = vld [vmem:[%s279 + $0x10] sm:$0xff]
        %v2249 = vld [vmem:[%s279 + $0x18] sm:$0xff]
        %v2250 = vld [vmem:[%s279 + $0x20] sm:$0xff]
        %v2251 = vld [vmem:[%s279 + $0x28] sm:$0xff]
        %v2252 = vld [vmem:[%s279 + $0x30] sm:$0xff]
        %v2253 = vld [vmem:[%s279 + $0x48] sm:$0xff]
        %v2254 = vld [vmem:[%s279 + $0x50] sm:$0xff]
        %v2255 = vld [vmem:[%s279 + $0x58] sm:$0xff]
        %v2256 = vld [vmem:[%s279 + $0x60] sm:$0xff]
        %v2257 = vld [vmem:[%s279 + $0x68] sm:$0xff]
        %v2268 = vunpack.c.l.b16 %v2248
        %v2269 = vunpack.c.h.b16 %v2248
        %v2270 = vunpack.c.l.b16 %v2249
        %v2271 = vunpack.c.h.b16 %v2249
        %v2272 = vunpack.c.l.b16 %v2250
        %v2273 = vunpack.c.h.b16 %v2250
        %v2274 = vunpack.c.l.b16 %v2251
        %v2275 = vunpack.c.h.b16 %v2251
        %v2276 = vunpack.c.l.b16 %v2252
        %v2277 = vunpack.c.h.b16 %v2252
        %v2278 = vunpack.c.l.b16 %v2253
        %v2279 = vunpack.c.h.b16 %v2253
        %v2280 = vunpack.c.l.b16 %v2254
        %v2281 = vunpack.c.h.b16 %v2254
        %v2282 = vunpack.c.l.b16 %v2255
        %v2283 = vunpack.c.h.b16 %v2255
        %v2284 = vunpack.c.l.b16 %v2256
        %v2285 = vunpack.c.h.b16 %v2256
        %v2286 = vunpack.c.l.b16 %v2257
        %v2287 = vunpack.c.h.b16 %v2257
        %v2288 = vpack.c.b16 %v2278, %v2268
        %v2289 = vpack.c.b16 %v2279, %v2269
        %v2290 = vpack.c.b16 %v2280, %v2270
        %v2291 = vpack.c.b16 %v2281, %v2271
        %v2292 = vpack.c.b16 %v2282, %v2272
        %v2293 = vpack.c.b16 %v2283, %v2273
        %v2294 = vpack.c.b16 %v2284, %v2274
        %v2295 = vpack.c.b16 %v2285, %v2275
        %v2296 = vpack.c.b16 %v2286, %v2276
        %v2297 = vpack.c.b16 %v2287, %v2277
        %2298 = vrot.lane.b32.xlu0 %v2288, 60
        %v2299 = vpop.permute.xlu0 %2298
        %2300 = vrot.lane.b32.xlu0 %v2289, 60
        %v2301 = vpop.permute.xlu0 %2300
        %2302 = vrot.lane.b32.xlu0 %v2290, 60
        %v2303 = vpop.permute.xlu0 %2302
        %2304 = vrot.lane.b32.xlu0 %v2291, 60
        %v2305 = vpop.permute.xlu0 %2304
        %2306 = vrot.lane.b32.xlu0 %v2292, 60
        %v2307 = vpop.permute.xlu0 %2306
        %2308 = vrot.lane.b32.xlu0 %v2293, 60
        %v2309 = vpop.permute.xlu0 %2308
        %2310 = vrot.lane.b32.xlu0 %v2294, 60
        %v2311 = vpop.permute.xlu0 %2310
        %2312 = vrot.lane.b32.xlu0 %v2295, 60
        %v2313 = vpop.permute.xlu0 %2312
        %2314 = vrot.lane.b32.xlu0 %v2296, 60
        %v2315 = vpop.permute.xlu0 %2314
        %2316 = vrot.lane.b32.xlu0 %v2297, 60
        %v2317 = vpop.permute.xlu0 %2316
        %vm2318 = vcmask 490496
        %v2319 = vsel %vm2318, %v2299, %v2301
        %v2320 = vsel %vm2318, %v2301, %v2303
        %v2321 = vsel %vm2318, %v2303, %v2305
        %v2322 = vsel %vm2318, %v2305, %v2307
        %v2323 = vsel %vm2318, %v2307, %v2309
        %v2324 = vsel %vm2318, %v2309, %v2311
        %v2325 = vsel %vm2318, %v2311, %v2313
        %v2326 = vsel %vm2318, %v2313, %v2315
        %v2327 = vsel %vm2318, %v2315, %v2317
        %2337 = vst [vmem:[#allocation2 + $0x5a0] sm:$0xff] %v2319
        %2338 = vst [vmem:[#allocation2 + $0x5a8] sm:$0xff] %v2320
        %2339 = vst [vmem:[#allocation2 + $0x5b0] sm:$0xff] %v2321
        %2340 = vst [vmem:[#allocation2 + $0x5b8] sm:$0xff] %v2322
        %2341 = vst [vmem:[#allocation2 + $0x5c0] sm:$0xff] %v2323
        %2342 = vst [vmem:[#allocation2 + $0x5c8] sm:$0xff] %v2324
        %2343 = vst [vmem:[#allocation2 + $0x5d0] sm:$0xff] %v2325
        %2344 = vst [vmem:[#allocation2 + $0x5d8] sm:$0xff] %v2326
        %2345 = vst [vmem:[#allocation2 + $0x5e0] sm:$0xff] %v2327
        %v2346 = vld [vmem:[%s279 + $0x10] sm:$0xff]
        %v2347 = vld [vmem:[%s279 + $0x18] sm:$0xff]
        %v2348 = vld [vmem:[%s279 + $0x20] sm:$0xff]
        %v2349 = vld [vmem:[%s279 + $0x28] sm:$0xff]
        %v2350 = vld [vmem:[%s279 + $0x30] sm:$0xff]
        %v2351 = vld [vmem:[%s279 + $0x48] sm:$0xff]
        %v2352 = vld [vmem:[%s279 + $0x50] sm:$0xff]
        %v2353 = vld [vmem:[%s279 + $0x58] sm:$0xff]
        %v2354 = vld [vmem:[%s279 + $0x60] sm:$0xff]
        %v2355 = vld [vmem:[%s279 + $0x68] sm:$0xff]
        %v2366 = vunpack.c.l.b16 %v2346
        %v2367 = vunpack.c.h.b16 %v2346
        %v2368 = vunpack.c.l.b16 %v2347
        %v2369 = vunpack.c.h.b16 %v2347
        %v2370 = vunpack.c.l.b16 %v2348
        %v2371 = vunpack.c.h.b16 %v2348
        %v2372 = vunpack.c.l.b16 %v2349
        %v2373 = vunpack.c.h.b16 %v2349
        %v2374 = vunpack.c.l.b16 %v2350
        %v2375 = vunpack.c.h.b16 %v2350
        %v2376 = vunpack.c.l.b16 %v2351
        %v2377 = vunpack.c.h.b16 %v2351
        %v2378 = vunpack.c.l.b16 %v2352
        %v2379 = vunpack.c.h.b16 %v2352
        %v2380 = vunpack.c.l.b16 %v2353
        %v2381 = vunpack.c.h.b16 %v2353
        %v2382 = vunpack.c.l.b16 %v2354
        %v2383 = vunpack.c.h.b16 %v2354
        %v2384 = vunpack.c.l.b16 %v2355
        %v2385 = vunpack.c.h.b16 %v2355
        %v2386 = vpack.c.b16 %v2376, %v2366
        %v2387 = vpack.c.b16 %v2377, %v2367
        %v2388 = vpack.c.b16 %v2378, %v2368
        %v2389 = vpack.c.b16 %v2379, %v2369
        %v2390 = vpack.c.b16 %v2380, %v2370
        %v2391 = vpack.c.b16 %v2381, %v2371
        %v2392 = vpack.c.b16 %v2382, %v2372
        %v2393 = vpack.c.b16 %v2383, %v2373
        %v2394 = vpack.c.b16 %v2384, %v2374
        %v2395 = vpack.c.b16 %v2385, %v2375
        %2396 = vrot.lane.b32.xlu0 %v2386, 40
        %v2397 = vpop.permute.xlu0 %2396
        %2398 = vrot.lane.b32.xlu0 %v2387, 40
        %v2399 = vpop.permute.xlu0 %2398
        %2400 = vrot.lane.b32.xlu0 %v2388, 40
        %v2401 = vpop.permute.xlu0 %2400
        %2402 = vrot.lane.b32.xlu0 %v2389, 40
        %v2403 = vpop.permute.xlu0 %2402
        %2404 = vrot.lane.b32.xlu0 %v2390, 40
        %v2405 = vpop.permute.xlu0 %2404
        %2406 = vrot.lane.b32.xlu0 %v2391, 40
        %v2407 = vpop.permute.xlu0 %2406
        %2408 = vrot.lane.b32.xlu0 %v2392, 40
        %v2409 = vpop.permute.xlu0 %2408
        %2410 = vrot.lane.b32.xlu0 %v2393, 40
        %v2411 = vpop.permute.xlu0 %2410
        %2412 = vrot.lane.b32.xlu0 %v2394, 40
        %v2413 = vpop.permute.xlu0 %2412
        %2414 = vrot.lane.b32.xlu0 %v2395, 40
        %v2415 = vpop.permute.xlu0 %2414
        %vm2416 = vcmask 326656
        %v2417 = vsel %vm2416, %v2397, %v2399
        %v2418 = vsel %vm2416, %v2399, %v2401
        %v2419 = vsel %vm2416, %v2401, %v2403
        %v2420 = vsel %vm2416, %v2403, %v2405
        %v2421 = vsel %vm2416, %v2405, %v2407
        %v2422 = vsel %vm2416, %v2407, %v2409
        %v2423 = vsel %vm2416, %v2409, %v2411
        %v2424 = vsel %vm2416, %v2411, %v2413
        %v2425 = vsel %vm2416, %v2413, %v2415
        %2435 = vst [vmem:[#allocation2 + $0x5e8] sm:$0xff] %v2417
        %2436 = vst [vmem:[#allocation2 + $0x5f0] sm:$0xff] %v2418
        %2437 = vst [vmem:[#allocation2 + $0x5f8] sm:$0xff] %v2419
        %2438 = vst [vmem:[#allocation2 + $0x600] sm:$0xff] %v2420
        %2439 = vst [vmem:[#allocation2 + $0x608] sm:$0xff] %v2421
        %2440 = vst [vmem:[#allocation2 + $0x610] sm:$0xff] %v2422
        %2441 = vst [vmem:[#allocation2 + $0x618] sm:$0xff] %v2423
        %2442 = vst [vmem:[#allocation2 + $0x620] sm:$0xff] %v2424
        %2443 = vst [vmem:[#allocation2 + $0x628] sm:$0xff] %v2425
        %v2444 = vld [vmem:[%s279 + $0x10] sm:$0xff]
        %v2445 = vld [vmem:[%s279 + $0x18] sm:$0xff]
        %v2446 = vld [vmem:[%s279 + $0x20] sm:$0xff]
        %v2447 = vld [vmem:[%s279 + $0x28] sm:$0xff]
        %v2448 = vld [vmem:[%s279 + $0x30] sm:$0xff]
        %v2449 = vld [vmem:[%s279 + $0x48] sm:$0xff]
        %v2450 = vld [vmem:[%s279 + $0x50] sm:$0xff]
        %v2451 = vld [vmem:[%s279 + $0x58] sm:$0xff]
        %v2452 = vld [vmem:[%s279 + $0x60] sm:$0xff]
        %v2453 = vld [vmem:[%s279 + $0x68] sm:$0xff]
        %v2464 = vunpack.c.l.b16 %v2444
        %v2465 = vunpack.c.h.b16 %v2444
        %v2466 = vunpack.c.l.b16 %v2445
        %v2467 = vunpack.c.h.b16 %v2445
        %v2468 = vunpack.c.l.b16 %v2446
        %v2469 = vunpack.c.h.b16 %v2446
        %v2470 = vunpack.c.l.b16 %v2447
        %v2471 = vunpack.c.h.b16 %v2447
        %v2472 = vunpack.c.l.b16 %v2448
        %v2473 = vunpack.c.h.b16 %v2448
        %v2474 = vunpack.c.l.b16 %v2449
        %v2475 = vunpack.c.h.b16 %v2449
        %v2476 = vunpack.c.l.b16 %v2450
        %v2477 = vunpack.c.h.b16 %v2450
        %v2478 = vunpack.c.l.b16 %v2451
        %v2479 = vunpack.c.h.b16 %v2451
        %v2480 = vunpack.c.l.b16 %v2452
        %v2481 = vunpack.c.h.b16 %v2452
        %v2482 = vunpack.c.l.b16 %v2453
        %v2483 = vunpack.c.h.b16 %v2453
        %v2484 = vpack.c.b16 %v2474, %v2464
        %v2485 = vpack.c.b16 %v2475, %v2465
        %v2486 = vpack.c.b16 %v2476, %v2466
        %v2487 = vpack.c.b16 %v2477, %v2467
        %v2488 = vpack.c.b16 %v2478, %v2468
        %v2489 = vpack.c.b16 %v2479, %v2469
        %v2490 = vpack.c.b16 %v2480, %v2470
        %v2491 = vpack.c.b16 %v2481, %v2471
        %v2492 = vpack.c.b16 %v2482, %v2472
        %v2493 = vpack.c.b16 %v2483, %v2473
        %2494 = vrot.lane.b32.xlu0 %v2484, 38
        %v2495 = vpop.permute.xlu0 %2494
        %2496 = vrot.lane.b32.xlu0 %v2485, 38
        %v2497 = vpop.permute.xlu0 %2496
        %2498 = vrot.lane.b32.xlu0 %v2486, 38
        %v2499 = vpop.permute.xlu0 %2498
        %2500 = vrot.lane.b32.xlu0 %v2487, 38
        %v2501 = vpop.permute.xlu0 %2500
        %2502 = vrot.lane.b32.xlu0 %v2488, 38
        %v2503 = vpop.permute.xlu0 %2502
        %2504 = vrot.lane.b32.xlu0 %v2489, 38
        %v2505 = vpop.permute.xlu0 %2504
        %2506 = vrot.lane.b32.xlu0 %v2490, 38
        %v2507 = vpop.permute.xlu0 %2506
        %2508 = vrot.lane.b32.xlu0 %v2491, 38
        %v2509 = vpop.permute.xlu0 %2508
        %2510 = vrot.lane.b32.xlu0 %v2492, 38
        %v2511 = vpop.permute.xlu0 %2510
        %2512 = vrot.lane.b32.xlu0 %v2493, 38
        %v2513 = vpop.permute.xlu0 %2512
        %vm2514 = vcmask 310272
        %v2515 = vsel %vm2514, %v2495, %v2497
        %v2516 = vsel %vm2514, %v2497, %v2499
        %v2517 = vsel %vm2514, %v2499, %v2501
        %v2518 = vsel %vm2514, %v2501, %v2503
        %v2519 = vsel %vm2514, %v2503, %v2505
        %v2520 = vsel %vm2514, %v2505, %v2507
        %v2521 = vsel %vm2514, %v2507, %v2509
        %v2522 = vsel %vm2514, %v2509, %v2511
        %v2523 = vsel %vm2514, %v2511, %v2513
        %2533 = vst [vmem:[#allocation2 + $0x630] sm:$0xff] %v2515
        %2534 = vst [vmem:[#allocation2 + $0x638] sm:$0xff] %v2516
        %2535 = vst [vmem:[#allocation2 + $0x640] sm:$0xff] %v2517
        %2536 = vst [vmem:[#allocation2 + $0x648] sm:$0xff] %v2518
        %2537 = vst [vmem:[#allocation2 + $0x650] sm:$0xff] %v2519
        %2538 = vst [vmem:[#allocation2 + $0x658] sm:$0xff] %v2520
        %2539 = vst [vmem:[#allocation2 + $0x660] sm:$0xff] %v2521
        %2540 = vst [vmem:[#allocation2 + $0x668] sm:$0xff] %v2522
        %2541 = vst [vmem:[#allocation2 + $0x670] sm:$0xff] %v2523
        %v2542 = vld [vmem:[%s279 + $0x10] sm:$0xff]
        %v2543 = vld [vmem:[%s279 + $0x18] sm:$0xff]
        %v2544 = vld [vmem:[%s279 + $0x20] sm:$0xff]
        %v2545 = vld [vmem:[%s279 + $0x28] sm:$0xff]
        %v2546 = vld [vmem:[%s279 + $0x30] sm:$0xff]
        %v2547 = vld [vmem:[%s279 + $0x48] sm:$0xff]
        %v2548 = vld [vmem:[%s279 + $0x50] sm:$0xff]
        %v2549 = vld [vmem:[%s279 + $0x58] sm:$0xff]
        %v2550 = vld [vmem:[%s279 + $0x60] sm:$0xff]
        %v2551 = vld [vmem:[%s279 + $0x68] sm:$0xff]
        %v2562 = vunpack.c.l.b16 %v2542
        %v2563 = vunpack.c.h.b16 %v2542
        %v2564 = vunpack.c.l.b16 %v2543
        %v2565 = vunpack.c.h.b16 %v2543
        %v2566 = vunpack.c.l.b16 %v2544
        %v2567 = vunpack.c.h.b16 %v2544
        %v2568 = vunpack.c.l.b16 %v2545
        %v2569 = vunpack.c.h.b16 %v2545
        %v2570 = vunpack.c.l.b16 %v2546
        %v2571 = vunpack.c.h.b16 %v2546
        %v2572 = vunpack.c.l.b16 %v2547
        %v2573 = vunpack.c.h.b16 %v2547
        %v2574 = vunpack.c.l.b16 %v2548
        %v2575 = vunpack.c.h.b16 %v2548
        %v2576 = vunpack.c.l.b16 %v2549
        %v2577 = vunpack.c.h.b16 %v2549
        %v2578 = vunpack.c.l.b16 %v2550
        %v2579 = vunpack.c.h.b16 %v2550
        %v2580 = vunpack.c.l.b16 %v2551
        %v2581 = vunpack.c.h.b16 %v2551
        %v2582 = vpack.c.b16 %v2572, %v2562
        %v2583 = vpack.c.b16 %v2573, %v2563
        %v2584 = vpack.c.b16 %v2574, %v2564
        %v2585 = vpack.c.b16 %v2575, %v2565
        %v2586 = vpack.c.b16 %v2576, %v2566
        %v2587 = vpack.c.b16 %v2577, %v2567
        %v2588 = vpack.c.b16 %v2578, %v2568
        %v2589 = vpack.c.b16 %v2579, %v2569
        %v2590 = vpack.c.b16 %v2580, %v2570
        %v2591 = vpack.c.b16 %v2581, %v2571
        %2592 = vrot.lane.b32.xlu0 %v2582, 36
        %v2593 = vpop.permute.xlu0 %2592
        %2594 = vrot.lane.b32.xlu0 %v2583, 36
        %v2595 = vpop.permute.xlu0 %2594
        %2596 = vrot.lane.b32.xlu0 %v2584, 36
        %v2597 = vpop.permute.xlu0 %2596
        %2598 = vrot.lane.b32.xlu0 %v2585, 36
        %v2599 = vpop.permute.xlu0 %2598
        %2600 = vrot.lane.b32.xlu0 %v2586, 36
        %v2601 = vpop.permute.xlu0 %2600
        %2602 = vrot.lane.b32.xlu0 %v2587, 36
        %v2603 = vpop.permute.xlu0 %2602
        %2604 = vrot.lane.b32.xlu0 %v2588, 36
        %v2605 = vpop.permute.xlu0 %2604
        %2606 = vrot.lane.b32.xlu0 %v2589, 36
        %v2607 = vpop.permute.xlu0 %2606
        %2608 = vrot.lane.b32.xlu0 %v2590, 36
        %v2609 = vpop.permute.xlu0 %2608
        %2610 = vrot.lane.b32.xlu0 %v2591, 36
        %v2611 = vpop.permute.xlu0 %2610
        %vm2612 = vcmask 293888
        %v2613 = vsel %vm2612, %v2593, %v2595
        %v2614 = vsel %vm2612, %v2595, %v2597
        %v2615 = vsel %vm2612, %v2597, %v2599
        %v2616 = vsel %vm2612, %v2599, %v2601
        %v2617 = vsel %vm2612, %v2601, %v2603
        %v2618 = vsel %vm2612, %v2603, %v2605
        %v2619 = vsel %vm2612, %v2605, %v2607
        %v2620 = vsel %vm2612, %v2607, %v2609
        %v2621 = vsel %vm2612, %v2609, %v2611
        %2631 = vst [vmem:[#allocation2 + $0x678] sm:$0xff] %v2613
        %2632 = vst [vmem:[#allocation2 + $0x680] sm:$0xff] %v2614
        %2633 = vst [vmem:[#allocation2 + $0x688] sm:$0xff] %v2615
        %2634 = vst [vmem:[#allocation2 + $0x690] sm:$0xff] %v2616
        %2635 = vst [vmem:[#allocation2 + $0x698] sm:$0xff] %v2617
        %2636 = vst [vmem:[#allocation2 + $0x6a0] sm:$0xff] %v2618
        %2637 = vst [vmem:[#allocation2 + $0x6a8] sm:$0xff] %v2619
        %2638 = vst [vmem:[#allocation2 + $0x6b0] sm:$0xff] %v2620
        %2639 = vst [vmem:[#allocation2 + $0x6b8] sm:$0xff] %v2621
        %v2640 = vld [vmem:[%s279 + $0x10] sm:$0xff]
        %v2641 = vld [vmem:[%s279 + $0x18] sm:$0xff]
        %v2642 = vld [vmem:[%s279 + $0x20] sm:$0xff]
        %v2643 = vld [vmem:[%s279 + $0x28] sm:$0xff]
        %v2644 = vld [vmem:[%s279 + $0x30] sm:$0xff]
        %v2645 = vld [vmem:[%s279 + $0x48] sm:$0xff]
        %v2646 = vld [vmem:[%s279 + $0x50] sm:$0xff]
        %v2647 = vld [vmem:[%s279 + $0x58] sm:$0xff]
        %v2648 = vld [vmem:[%s279 + $0x60] sm:$0xff]
        %v2649 = vld [vmem:[%s279 + $0x68] sm:$0xff]
        %v2660 = vunpack.c.l.b16 %v2640
        %v2661 = vunpack.c.h.b16 %v2640
        %v2662 = vunpack.c.l.b16 %v2641
        %v2663 = vunpack.c.h.b16 %v2641
        %v2664 = vunpack.c.l.b16 %v2642
        %v2665 = vunpack.c.h.b16 %v2642
        %v2666 = vunpack.c.l.b16 %v2643
        %v2667 = vunpack.c.h.b16 %v2643
        %v2668 = vunpack.c.l.b16 %v2644
        %v2669 = vunpack.c.h.b16 %v2644
        %v2670 = vunpack.c.l.b16 %v2645
        %v2671 = vunpack.c.h.b16 %v2645
        %v2672 = vunpack.c.l.b16 %v2646
        %v2673 = vunpack.c.h.b16 %v2646
        %v2674 = vunpack.c.l.b16 %v2647
        %v2675 = vunpack.c.h.b16 %v2647
        %v2676 = vunpack.c.l.b16 %v2648
        %v2677 = vunpack.c.h.b16 %v2648
        %v2678 = vunpack.c.l.b16 %v2649
        %v2679 = vunpack.c.h.b16 %v2649
        %v2680 = vpack.c.b16 %v2670, %v2660
        %v2681 = vpack.c.b16 %v2671, %v2661
        %v2682 = vpack.c.b16 %v2672, %v2662
        %v2683 = vpack.c.b16 %v2673, %v2663
        %v2684 = vpack.c.b16 %v2674, %v2664
        %v2685 = vpack.c.b16 %v2675, %v2665
        %v2686 = vpack.c.b16 %v2676, %v2666
        %v2687 = vpack.c.b16 %v2677, %v2667
        %v2688 = vpack.c.b16 %v2678, %v2668
        %v2689 = vpack.c.b16 %v2679, %v2669
        %2690 = vrot.lane.b32.xlu0 %v2680, 16
        %v2691 = vpop.permute.xlu0 %2690
        %2692 = vrot.lane.b32.xlu0 %v2681, 16
        %v2693 = vpop.permute.xlu0 %2692
        %2694 = vrot.lane.b32.xlu0 %v2682, 16
        %v2695 = vpop.permute.xlu0 %2694
        %2696 = vrot.lane.b32.xlu0 %v2683, 16
        %v2697 = vpop.permute.xlu0 %2696
        %2698 = vrot.lane.b32.xlu0 %v2684, 16
        %v2699 = vpop.permute.xlu0 %2698
        %2700 = vrot.lane.b32.xlu0 %v2685, 16
        %v2701 = vpop.permute.xlu0 %2700
        %2702 = vrot.lane.b32.xlu0 %v2686, 16
        %v2703 = vpop.permute.xlu0 %2702
        %2704 = vrot.lane.b32.xlu0 %v2687, 16
        %v2705 = vpop.permute.xlu0 %2704
        %2706 = vrot.lane.b32.xlu0 %v2688, 16
        %v2707 = vpop.permute.xlu0 %2706
        %2708 = vrot.lane.b32.xlu0 %v2689, 16
        %v2709 = vpop.permute.xlu0 %2708
        %vm2710 = vcmask 130048
        %v2711 = vsel %vm2710, %v2691, %v2693
        %v2712 = vsel %vm2710, %v2693, %v2695
        %v2713 = vsel %vm2710, %v2695, %v2697
        %v2714 = vsel %vm2710, %v2697, %v2699
        %v2715 = vsel %vm2710, %v2699, %v2701
        %v2716 = vsel %vm2710, %v2701, %v2703
        %v2717 = vsel %vm2710, %v2703, %v2705
        %v2718 = vsel %vm2710, %v2705, %v2707
        %v2719 = vsel %vm2710, %v2707, %v2709
        %2729 = vst [vmem:[#allocation2 + $0x6c0] sm:$0xff] %v2711
        %2730 = vst [vmem:[#allocation2 + $0x6c8] sm:$0xff] %v2712
        %2731 = vst [vmem:[#allocation2 + $0x6d0] sm:$0xff] %v2713
        %2732 = vst [vmem:[#allocation2 + $0x6d8] sm:$0xff] %v2714
        %2733 = vst [vmem:[#allocation2 + $0x6e0] sm:$0xff] %v2715
        %2734 = vst [vmem:[#allocation2 + $0x6e8] sm:$0xff] %v2716
        %2735 = vst [vmem:[#allocation2 + $0x6f0] sm:$0xff] %v2717
        %2736 = vst [vmem:[#allocation2 + $0x6f8] sm:$0xff] %v2718
        %2737 = vst [vmem:[#allocation2 + $0x700] sm:$0xff] %v2719
        %v2738 = vld [vmem:[%s279 + $0x10] sm:$0xff]
        %v2739 = vld [vmem:[%s279 + $0x18] sm:$0xff]
        %v2740 = vld [vmem:[%s279 + $0x20] sm:$0xff]
        %v2741 = vld [vmem:[%s279 + $0x28] sm:$0xff]
        %v2742 = vld [vmem:[%s279 + $0x30] sm:$0xff]
        %v2743 = vld [vmem:[%s279 + $0x48] sm:$0xff]
        %v2744 = vld [vmem:[%s279 + $0x50] sm:$0xff]
        %v2745 = vld [vmem:[%s279 + $0x58] sm:$0xff]
        %v2746 = vld [vmem:[%s279 + $0x60] sm:$0xff]
        %v2747 = vld [vmem:[%s279 + $0x68] sm:$0xff]
        %v2758 = vunpack.c.l.b16 %v2738
        %v2759 = vunpack.c.h.b16 %v2738
        %v2760 = vunpack.c.l.b16 %v2739
        %v2761 = vunpack.c.h.b16 %v2739
        %v2762 = vunpack.c.l.b16 %v2740
        %v2763 = vunpack.c.h.b16 %v2740
        %v2764 = vunpack.c.l.b16 %v2741
        %v2765 = vunpack.c.h.b16 %v2741
        %v2766 = vunpack.c.l.b16 %v2742
        %v2767 = vunpack.c.h.b16 %v2742
        %v2768 = vunpack.c.l.b16 %v2743
        %v2769 = vunpack.c.h.b16 %v2743
        %v2770 = vunpack.c.l.b16 %v2744
        %v2771 = vunpack.c.h.b16 %v2744
        %v2772 = vunpack.c.l.b16 %v2745
        %v2773 = vunpack.c.h.b16 %v2745
        %v2774 = vunpack.c.l.b16 %v2746
        %v2775 = vunpack.c.h.b16 %v2746
        %v2776 = vunpack.c.l.b16 %v2747
        %v2777 = vunpack.c.h.b16 %v2747
        %v2778 = vpack.c.b16 %v2768, %v2758
        %v2779 = vpack.c.b16 %v2769, %v2759
        %v2780 = vpack.c.b16 %v2770, %v2760
        %v2781 = vpack.c.b16 %v2771, %v2761
        %v2782 = vpack.c.b16 %v2772, %v2762
        %v2783 = vpack.c.b16 %v2773, %v2763
        %v2784 = vpack.c.b16 %v2774, %v2764
        %v2785 = vpack.c.b16 %v2775, %v2765
        %v2786 = vpack.c.b16 %v2776, %v2766
        %v2787 = vpack.c.b16 %v2777, %v2767
        %2788 = vrot.lane.b32.xlu0 %v2778, 14
        %v2789 = vpop.permute.xlu0 %2788
        %2790 = vrot.lane.b32.xlu0 %v2779, 14
        %v2791 = vpop.permute.xlu0 %2790
        %2792 = vrot.lane.b32.xlu0 %v2780, 14
        %v2793 = vpop.permute.xlu0 %2792
        %2794 = vrot.lane.b32.xlu0 %v2781, 14
        %v2795 = vpop.permute.xlu0 %2794
        %2796 = vrot.lane.b32.xlu0 %v2782, 14
        %v2797 = vpop.permute.xlu0 %2796
        %2798 = vrot.lane.b32.xlu0 %v2783, 14
        %v2799 = vpop.permute.xlu0 %2798
        %2800 = vrot.lane.b32.xlu0 %v2784, 14
        %v2801 = vpop.permute.xlu0 %2800
        %2802 = vrot.lane.b32.xlu0 %v2785, 14
        %v2803 = vpop.permute.xlu0 %2802
        %2804 = vrot.lane.b32.xlu0 %v2786, 14
        %v2805 = vpop.permute.xlu0 %2804
        %2806 = vrot.lane.b32.xlu0 %v2787, 14
        %v2807 = vpop.permute.xlu0 %2806
        %vm2808 = vcmask 113664
        %v2809 = vsel %vm2808, %v2789, %v2791
        %v2810 = vsel %vm2808, %v2791, %v2793
        %v2811 = vsel %vm2808, %v2793, %v2795
        %v2812 = vsel %vm2808, %v2795, %v2797
        %v2813 = vsel %vm2808, %v2797, %v2799
        %v2814 = vsel %vm2808, %v2799, %v2801
        %v2815 = vsel %vm2808, %v2801, %v2803
        %v2816 = vsel %vm2808, %v2803, %v2805
        %v2817 = vsel %vm2808, %v2805, %v2807
        %2827 = vst [vmem:[#allocation2 + $0x708] sm:$0xff] %v2809
        %2828 = vst [vmem:[#allocation2 + $0x710] sm:$0xff] %v2810
        %2829 = vst [vmem:[#allocation2 + $0x718] sm:$0xff] %v2811
        %2830 = vst [vmem:[#allocation2 + $0x720] sm:$0xff] %v2812
        %2831 = vst [vmem:[#allocation2 + $0x728] sm:$0xff] %v2813
        %2832 = vst [vmem:[#allocation2 + $0x730] sm:$0xff] %v2814
        %2833 = vst [vmem:[#allocation2 + $0x738] sm:$0xff] %v2815
        %2834 = vst [vmem:[#allocation2 + $0x740] sm:$0xff] %v2816
        %2835 = vst [vmem:[#allocation2 + $0x748] sm:$0xff] %v2817
        %v2836 = vld [vmem:[%s279 + $0x10] sm:$0xff]
        %v2837 = vld [vmem:[%s279 + $0x18] sm:$0xff]
        %v2838 = vld [vmem:[%s279 + $0x20] sm:$0xff]
        %v2839 = vld [vmem:[%s279 + $0x28] sm:$0xff]
        %v2840 = vld [vmem:[%s279 + $0x30] sm:$0xff]
        %v2841 = vld [vmem:[%s279 + $0x48] sm:$0xff]
        %v2842 = vld [vmem:[%s279 + $0x50] sm:$0xff]
        %v2843 = vld [vmem:[%s279 + $0x58] sm:$0xff]
        %v2844 = vld [vmem:[%s279 + $0x60] sm:$0xff]
        %v2845 = vld [vmem:[%s279 + $0x68] sm:$0xff]
        %v2856 = vunpack.c.l.b16 %v2836
        %v2857 = vunpack.c.h.b16 %v2836
        %v2858 = vunpack.c.l.b16 %v2837
        %v2859 = vunpack.c.h.b16 %v2837
        %v2860 = vunpack.c.l.b16 %v2838
        %v2861 = vunpack.c.h.b16 %v2838
        %v2862 = vunpack.c.l.b16 %v2839
        %v2863 = vunpack.c.h.b16 %v2839
        %v2864 = vunpack.c.l.b16 %v2840
        %v2865 = vunpack.c.h.b16 %v2840
        %v2866 = vunpack.c.l.b16 %v2841
        %v2867 = vunpack.c.h.b16 %v2841
        %v2868 = vunpack.c.l.b16 %v2842
        %v2869 = vunpack.c.h.b16 %v2842
        %v2870 = vunpack.c.l.b16 %v2843
        %v2871 = vunpack.c.h.b16 %v2843
        %v2872 = vunpack.c.l.b16 %v2844
        %v2873 = vunpack.c.h.b16 %v2844
        %v2874 = vunpack.c.l.b16 %v2845
        %v2875 = vunpack.c.h.b16 %v2845
        %v2876 = vpack.c.b16 %v2866, %v2856
        %v2877 = vpack.c.b16 %v2867, %v2857
        %v2878 = vpack.c.b16 %v2868, %v2858
        %v2879 = vpack.c.b16 %v2869, %v2859
        %v2880 = vpack.c.b16 %v2870, %v2860
        %v2881 = vpack.c.b16 %v2871, %v2861
        %v2882 = vpack.c.b16 %v2872, %v2862
        %v2883 = vpack.c.b16 %v2873, %v2863
        %v2884 = vpack.c.b16 %v2874, %v2864
        %v2885 = vpack.c.b16 %v2875, %v2865
        %2886 = vrot.lane.b32.xlu0 %v2876, 12
        %v2887 = vpop.permute.xlu0 %2886
        %2888 = vrot.lane.b32.xlu0 %v2877, 12
        %v2889 = vpop.permute.xlu0 %2888
        %2890 = vrot.lane.b32.xlu0 %v2878, 12
        %v2891 = vpop.permute.xlu0 %2890
        %2892 = vrot.lane.b32.xlu0 %v2879, 12
        %v2893 = vpop.permute.xlu0 %2892
        %2894 = vrot.lane.b32.xlu0 %v2880, 12
        %v2895 = vpop.permute.xlu0 %2894
        %2896 = vrot.lane.b32.xlu0 %v2881, 12
        %v2897 = vpop.permute.xlu0 %2896
        %2898 = vrot.lane.b32.xlu0 %v2882, 12
        %v2899 = vpop.permute.xlu0 %2898
        %2900 = vrot.lane.b32.xlu0 %v2883, 12
        %v2901 = vpop.permute.xlu0 %2900
        %2902 = vrot.lane.b32.xlu0 %v2884, 12
        %v2903 = vpop.permute.xlu0 %2902
        %2904 = vrot.lane.b32.xlu0 %v2885, 12
        %v2905 = vpop.permute.xlu0 %2904
        %vm2906 = vcmask 97280
        %v2907 = vsel %vm2906, %v2887, %v2889
        %v2908 = vsel %vm2906, %v2889, %v2891
        %v2909 = vsel %vm2906, %v2891, %v2893
        %v2910 = vsel %vm2906, %v2893, %v2895
        %v2911 = vsel %vm2906, %v2895, %v2897
        %v2912 = vsel %vm2906, %v2897, %v2899
        %v2913 = vsel %vm2906, %v2899, %v2901
        %v2914 = vsel %vm2906, %v2901, %v2903
        %v2915 = vsel %vm2906, %v2903, %v2905
        %2925 = vst [vmem:[#allocation2 + $0x750] sm:$0xff] %v2907
        %2926 = vst [vmem:[#allocation2 + $0x758] sm:$0xff] %v2908
        %2927 = vst [vmem:[#allocation2 + $0x760] sm:$0xff] %v2909
        %2928 = vst [vmem:[#allocation2 + $0x768] sm:$0xff] %v2910
        %2929 = vst [vmem:[#allocation2 + $0x770] sm:$0xff] %v2911
        %2930 = vst [vmem:[#allocation2 + $0x778] sm:$0xff] %v2912
        %2931 = vst [vmem:[#allocation2 + $0x780] sm:$0xff] %v2913
        %2932 = vst [vmem:[#allocation2 + $0x788] sm:$0xff] %v2914
        %2933 = vst [vmem:[#allocation2 + $0x790] sm:$0xff] %v2915
        %v2934 = vld [vmem:[%s1] sm:$0xff]
        %v2935 = vld [vmem:[%s1 + $0x8] sm:$0xff]
        %v2936 = vld [vmem:[%s1 + $0x10] sm:$0xff]
        %v2937 = vld [vmem:[%s1 + $0x18] sm:$0xff]
        %v2938 = vld [vmem:[#allocation2] sm:$0xff]
        %v2939 = vld [vmem:[#allocation2 + $0x8] sm:$0xff]
        %v2940 = vld [vmem:[#allocation2 + $0x10] sm:$0xff]
        %v2941 = vld [vmem:[#allocation2 + $0x18] sm:$0xff]
        %v2942 = vld [vmem:[#allocation2 + $0x20] sm:$0xff]
        %v2943 = vld [vmem:[#allocation2 + $0x28] sm:$0xff]
        %v2944 = vld [vmem:[#allocation2 + $0x30] sm:$0xff]
        %v2945 = vld [vmem:[#allocation2 + $0x38] sm:$0xff]
        %v2946 = vld [vmem:[#allocation2 + $0x40] sm:$0xff]
        %v2947 = vld [vmem:[#allocation2 + $0x48] sm:$0xff]
        %v2948 = vld [vmem:[#allocation2 + $0x50] sm:$0xff]
        %v2949 = vld [vmem:[#allocation2 + $0x58] sm:$0xff]
        %v2950 = vld [vmem:[#allocation2 + $0x60] sm:$0xff]
        %v2951 = vld [vmem:[#allocation2 + $0x68] sm:$0xff]
        %v2952 = vld [vmem:[#allocation2 + $0x70] sm:$0xff]
        %v2953 = vld [vmem:[#allocation2 + $0x78] sm:$0xff]
        %v2954 = vld [vmem:[#allocation2 + $0x80] sm:$0xff]
        %v2955 = vld [vmem:[#allocation2 + $0x88] sm:$0xff]
        %v2956 = vld [vmem:[#allocation2 + $0x90] sm:$0xff]
        %v2957 = vld [vmem:[#allocation2 + $0x98] sm:$0xff]
        %v2958 = vld [vmem:[#allocation2 + $0xa0] sm:$0xff]
        %v2959 = vld [vmem:[#allocation2 + $0xa8] sm:$0xff]
        %v2960 = vld [vmem:[#allocation2 + $0xb0] sm:$0xff]
        %v2961 = vld [vmem:[#allocation2 + $0xb8] sm:$0xff]
        %v2962 = vld [vmem:[#allocation2 + $0xc0] sm:$0xff]
        %v2963 = vld [vmem:[#allocation2 + $0xc8] sm:$0xff]
        %v2964 = vld [vmem:[#allocation2 + $0xd0] sm:$0xff]
        %v2965 = vld [vmem:[#allocation2 + $0xd8] sm:$0xff]
        %v2966 = vld [vmem:[#allocation2 + $0xe0] sm:$0xff]
        %v2967 = vld [vmem:[#allocation2 + $0xe8] sm:$0xff]
        %v2968 = vld [vmem:[#allocation2 + $0xf0] sm:$0xff]
        %v2969 = vld [vmem:[#allocation2 + $0xf8] sm:$0xff]
        %v2970 = vld [vmem:[#allocation2 + $0x100] sm:$0xff]
        %v2971 = vld [vmem:[#allocation2 + $0x108] sm:$0xff]
        %v2972 = vld [vmem:[#allocation2 + $0x110] sm:$0xff]
        %v2973 = vld [vmem:[#allocation2 + $0x118] sm:$0xff]
        %v2974 = vld [vmem:[#allocation2 + $0x120] sm:$0xff]
        %v2975 = vld [vmem:[#allocation2 + $0x128] sm:$0xff]
        %v2976 = vld [vmem:[#allocation2 + $0x130] sm:$0xff]
        %v2977 = vld [vmem:[#allocation2 + $0x138] sm:$0xff]
        %v2978 = vld [vmem:[#allocation2 + $0x140] sm:$0xff]
        %v2979 = vld [vmem:[#allocation2 + $0x148] sm:$0xff]
        %v2980 = vld [vmem:[#allocation2 + $0x150] sm:$0xff]
        %v2981 = vld [vmem:[#allocation2 + $0x158] sm:$0xff]
        %v2982 = vld [vmem:[#allocation2 + $0x160] sm:$0xff]
        %v2983 = vld [vmem:[#allocation2 + $0x168] sm:$0xff]
        %v2984 = vld [vmem:[#allocation2 + $0x170] sm:$0xff]
        %v2985 = vld [vmem:[#allocation2 + $0x178] sm:$0xff]
        %v2986 = vld [vmem:[#allocation2 + $0x180] sm:$0xff]
        %v2987 = vld [vmem:[#allocation2 + $0x188] sm:$0xff]
        %v2988 = vld [vmem:[#allocation2 + $0x190] sm:$0xff]
        %v2989 = vld [vmem:[#allocation2 + $0x198] sm:$0xff]
        %v2990 = vld [vmem:[#allocation2 + $0x1a0] sm:$0xff]
        %v2991 = vld [vmem:[#allocation2 + $0x1a8] sm:$0xff]
        %v2992 = vld [vmem:[#allocation2 + $0x1b0] sm:$0xff]
        %v2993 = vld [vmem:[#allocation2 + $0x1b8] sm:$0xff]
        %v2994 = vld [vmem:[#allocation2 + $0x1c0] sm:$0xff]
        %v2995 = vld [vmem:[#allocation2 + $0x1c8] sm:$0xff]
        %v2996 = vld [vmem:[#allocation2 + $0x1d0] sm:$0xff]
        %v2997 = vld [vmem:[#allocation2 + $0x1d8] sm:$0xff]
        %v2998 = vld [vmem:[#allocation2 + $0x1e0] sm:$0xff]
        %v2999 = vld [vmem:[#allocation2 + $0x1e8] sm:$0xff]
        %v3000 = vld [vmem:[#allocation2 + $0x1f0] sm:$0xff]
        %v3001 = vld [vmem:[#allocation2 + $0x1f8] sm:$0xff]
        %v3002 = vld [vmem:[#allocation2 + $0x200] sm:$0xff]
        %v3003 = vld [vmem:[#allocation2 + $0x208] sm:$0xff]
        %v3004 = vld [vmem:[#allocation2 + $0x210] sm:$0xff]
        %v3005 = vld [vmem:[#allocation2 + $0x218] sm:$0xff]
        %v3006 = vld [vmem:[#allocation2 + $0x220] sm:$0xff]
        %v3007 = vld [vmem:[#allocation2 + $0x228] sm:$0xff]
        %v3008 = vld [vmem:[#allocation2 + $0x230] sm:$0xff]
        %v3009 = vld [vmem:[#allocation2 + $0x238] sm:$0xff]
        %v3010 = vld [vmem:[#allocation2 + $0x240] sm:$0xff]
        %v3011 = vld [vmem:[#allocation2 + $0x248] sm:$0xff]
        %v3012 = vld [vmem:[#allocation2 + $0x250] sm:$0xff]
        %v3013 = vld [vmem:[#allocation2 + $0x258] sm:$0xff]
        %v3014 = vld [vmem:[#allocation2 + $0x260] sm:$0xff]
        %v3015 = vld [vmem:[#allocation2 + $0x268] sm:$0xff]
        %v3016 = vld [vmem:[#allocation2 + $0x270] sm:$0xff]
        %v3017 = vld [vmem:[#allocation2 + $0x278] sm:$0xff]
        %v3018 = vld [vmem:[#allocation2 + $0x280] sm:$0xff]
        %v3019 = vld [vmem:[#allocation2 + $0x288] sm:$0xff]
        %v3020 = vld [vmem:[#allocation2 + $0x290] sm:$0xff]
        %v3021 = vld [vmem:[#allocation2 + $0x298] sm:$0xff]
        %v3022 = vld [vmem:[#allocation2 + $0x2a0] sm:$0xff]
        %v3023 = vld [vmem:[#allocation2 + $0x2a8] sm:$0xff]
        %v3024 = vld [vmem:[#allocation2 + $0x2b0] sm:$0xff]
        %v3025 = vld [vmem:[#allocation2 + $0x2b8] sm:$0xff]
        %v3026 = vld [vmem:[#allocation2 + $0x2c0] sm:$0xff]
        %v3027 = vld [vmem:[#allocation2 + $0x2c8] sm:$0xff]
        %v3028 = vld [vmem:[#allocation2 + $0x2d0] sm:$0xff]
        %v3029 = vld [vmem:[#allocation2 + $0x2d8] sm:$0xff]
        %v3030 = vld [vmem:[#allocation2 + $0x2e0] sm:$0xff]
        %v3031 = vld [vmem:[#allocation2 + $0x2e8] sm:$0xff]
        %v3032 = vld [vmem:[#allocation2 + $0x2f0] sm:$0xff]
        %v3033 = vld [vmem:[#allocation2 + $0x2f8] sm:$0xff]
        %v3034 = vld [vmem:[#allocation2 + $0x300] sm:$0xff]
        %v3035 = vld [vmem:[#allocation2 + $0x308] sm:$0xff]
        %v3036 = vld [vmem:[#allocation2 + $0x310] sm:$0xff]
        %v3037 = vld [vmem:[#allocation2 + $0x318] sm:$0xff]
        %v3038 = vld [vmem:[#allocation2 + $0x320] sm:$0xff]
        %v3039 = vld [vmem:[#allocation2 + $0x328] sm:$0xff]
        %v3040 = vld [vmem:[#allocation2 + $0x330] sm:$0xff]
        %v3041 = vld [vmem:[#allocation2 + $0x338] sm:$0xff]
        %v3042 = vld [vmem:[#allocation2 + $0x340] sm:$0xff]
        %v3043 = vld [vmem:[#allocation2 + $0x348] sm:$0xff]
        %v3044 = vld [vmem:[#allocation2 + $0x350] sm:$0xff]
        %v3045 = vld [vmem:[#allocation2 + $0x358] sm:$0xff]
        %v3046 = vld [vmem:[#allocation2 + $0x360] sm:$0xff]
        %v3047 = vld [vmem:[#allocation2 + $0x368] sm:$0xff]
        %v3048 = vld [vmem:[#allocation2 + $0x370] sm:$0xff]
        %v3049 = vld [vmem:[#allocation2 + $0x378] sm:$0xff]
        %v3050 = vld [vmem:[#allocation2 + $0x380] sm:$0xff]
        %v3051 = vld [vmem:[#allocation2 + $0x388] sm:$0xff]
        %v3052 = vld [vmem:[#allocation2 + $0x390] sm:$0xff]
        %v3053 = vld [vmem:[#allocation2 + $0x398] sm:$0xff]
        %v3054 = vld [vmem:[#allocation2 + $0x3a0] sm:$0xff]
        %v3055 = vld [vmem:[#allocation2 + $0x3a8] sm:$0xff]
        %v3056 = vld [vmem:[#allocation2 + $0x3b0] sm:$0xff]
        %v3057 = vld [vmem:[#allocation2 + $0x3b8] sm:$0xff]
        %v3058 = vld [vmem:[#allocation2 + $0x3c0] sm:$0xff]
        %v3059 = vld [vmem:[#allocation2 + $0x3c8] sm:$0xff]
        %v3060 = vld [vmem:[#allocation2 + $0x3d0] sm:$0xff]
        %v3061 = vld [vmem:[#allocation2 + $0x3d8] sm:$0xff]
        %v3062 = vld [vmem:[#allocation2 + $0x3e0] sm:$0xff]
        %v3063 = vld [vmem:[#allocation2 + $0x3e8] sm:$0xff]
        %v3064 = vld [vmem:[#allocation2 + $0x3f0] sm:$0xff]
        %v3065 = vld [vmem:[#allocation2 + $0x3f8] sm:$0xff]
        %v3066 = vld [vmem:[#allocation2 + $0x400] sm:$0xff]
        %v3067 = vld [vmem:[#allocation2 + $0x408] sm:$0xff]
        %v3068 = vld [vmem:[#allocation2 + $0x410] sm:$0xff]
        %v3069 = vld [vmem:[#allocation2 + $0x418] sm:$0xff]
        %v3070 = vld [vmem:[#allocation2 + $0x420] sm:$0xff]
        %v3071 = vld [vmem:[#allocation2 + $0x428] sm:$0xff]
        %v3072 = vld [vmem:[#allocation2 + $0x430] sm:$0xff]
        %v3073 = vld [vmem:[#allocation2 + $0x438] sm:$0xff]
        %v3074 = vld [vmem:[#allocation2 + $0x440] sm:$0xff]
        %v3075 = vld [vmem:[#allocation2 + $0x448] sm:$0xff]
        %v3076 = vld [vmem:[#allocation2 + $0x450] sm:$0xff]
        %v3077 = vld [vmem:[#allocation2 + $0x458] sm:$0xff]
        %v3078 = vld [vmem:[#allocation2 + $0x460] sm:$0xff]
        %v3079 = vld [vmem:[#allocation2 + $0x468] sm:$0xff]
        %v3080 = vld [vmem:[#allocation2 + $0x470] sm:$0xff]
        %v3081 = vld [vmem:[#allocation2 + $0x478] sm:$0xff]
        %v3082 = vld [vmem:[#allocation2 + $0x480] sm:$0xff]
        %v3083 = vld [vmem:[#allocation2 + $0x488] sm:$0xff]
        %v3084 = vld [vmem:[#allocation2 + $0x490] sm:$0xff]
        %v3085 = vld [vmem:[#allocation2 + $0x498] sm:$0xff]
        %v3086 = vld [vmem:[#allocation2 + $0x4a0] sm:$0xff]
        %v3087 = vld [vmem:[#allocation2 + $0x4a8] sm:$0xff]
        %v3088 = vld [vmem:[#allocation2 + $0x4b0] sm:$0xff]
        %v3089 = vld [vmem:[#allocation2 + $0x4b8] sm:$0xff]
        %v3090 = vld [vmem:[#allocation2 + $0x4c0] sm:$0xff]
        %v3091 = vld [vmem:[#allocation2 + $0x4c8] sm:$0xff]
        %v3092 = vld [vmem:[#allocation2 + $0x4d0] sm:$0xff]
        %v3093 = vld [vmem:[#allocation2 + $0x4d8] sm:$0xff]
        %v3094 = vld [vmem:[#allocation2 + $0x4e0] sm:$0xff]
        %v3095 = vld [vmem:[#allocation2 + $0x4e8] sm:$0xff]
        %v3096 = vld [vmem:[#allocation2 + $0x4f0] sm:$0xff]
        %v3097 = vld [vmem:[#allocation2 + $0x4f8] sm:$0xff]
        %v3098 = vld [vmem:[#allocation2 + $0x500] sm:$0xff]
        %v3099 = vld [vmem:[#allocation2 + $0x508] sm:$0xff]
        %v3100 = vld [vmem:[#allocation2 + $0x510] sm:$0xff]
        %v3101 = vld [vmem:[#allocation2 + $0x518] sm:$0xff]
        %v3102 = vld [vmem:[#allocation2 + $0x520] sm:$0xff]
        %v3103 = vld [vmem:[#allocation2 + $0x528] sm:$0xff]
        %v3104 = vld [vmem:[#allocation2 + $0x530] sm:$0xff]
        %v3105 = vld [vmem:[#allocation2 + $0x538] sm:$0xff]
        %v3106 = vld [vmem:[#allocation2 + $0x540] sm:$0xff]
        %v3107 = vld [vmem:[#allocation2 + $0x548] sm:$0xff]
        %v3108 = vld [vmem:[#allocation2 + $0x550] sm:$0xff]
        %v3109 = vld [vmem:[#allocation2 + $0x558] sm:$0xff]
        %v3110 = vld [vmem:[#allocation2 + $0x560] sm:$0xff]
        %v3111 = vld [vmem:[#allocation2 + $0x568] sm:$0xff]
        %v3112 = vld [vmem:[#allocation2 + $0x570] sm:$0xff]
        %v3113 = vld [vmem:[#allocation2 + $0x578] sm:$0xff]
        %v3114 = vld [vmem:[#allocation2 + $0x580] sm:$0xff]
        %v3115 = vld [vmem:[#allocation2 + $0x588] sm:$0xff]
        %v3116 = vld [vmem:[#allocation2 + $0x590] sm:$0xff]
        %v3117 = vld [vmem:[#allocation2 + $0x598] sm:$0xff]
        %v3118 = vld [vmem:[#allocation2 + $0x5a0] sm:$0xff]
        %v3119 = vld [vmem:[#allocation2 + $0x5a8] sm:$0xff]
        %v3120 = vld [vmem:[#allocation2 + $0x5b0] sm:$0xff]
        %v3121 = vld [vmem:[#allocation2 + $0x5b8] sm:$0xff]
        %v3122 = vld [vmem:[#allocation2 + $0x5c0] sm:$0xff]
        %v3123 = vld [vmem:[#allocation2 + $0x5c8] sm:$0xff]
        %v3124 = vld [vmem:[#allocation2 + $0x5d0] sm:$0xff]
        %v3125 = vld [vmem:[#allocation2 + $0x5d8] sm:$0xff]
        %v3126 = vld [vmem:[#allocation2 + $0x5e0] sm:$0xff]
        %v3127 = vld [vmem:[#allocation2 + $0x5e8] sm:$0xff]
        %v3128 = vld [vmem:[#allocation2 + $0x5f0] sm:$0xff]
        %v3129 = vld [vmem:[#allocation2 + $0x5f8] sm:$0xff]
        %v3130 = vld [vmem:[#allocation2 + $0x600] sm:$0xff]
        %v3131 = vld [vmem:[#allocation2 + $0x608] sm:$0xff]
        %v3132 = vld [vmem:[#allocation2 + $0x610] sm:$0xff]
        %v3133 = vld [vmem:[#allocation2 + $0x618] sm:$0xff]
        %v3134 = vld [vmem:[#allocation2 + $0x620] sm:$0xff]
        %v3135 = vld [vmem:[#allocation2 + $0x628] sm:$0xff]
        %v3136 = vld [vmem:[#allocation2 + $0x630] sm:$0xff]
        %v3137 = vld [vmem:[#allocation2 + $0x638] sm:$0xff]
        %v3138 = vld [vmem:[#allocation2 + $0x640] sm:$0xff]
        %v3139 = vld [vmem:[#allocation2 + $0x648] sm:$0xff]
        %v3140 = vld [vmem:[#allocation2 + $0x650] sm:$0xff]
        %v3141 = vld [vmem:[#allocation2 + $0x658] sm:$0xff]
        %v3142 = vld [vmem:[#allocation2 + $0x660] sm:$0xff]
        %v3143 = vld [vmem:[#allocation2 + $0x668] sm:$0xff]
        %v3144 = vld [vmem:[#allocation2 + $0x670] sm:$0xff]
        %v3145 = vld [vmem:[#allocation2 + $0x678] sm:$0xff]
        %v3146 = vld [vmem:[#allocation2 + $0x680] sm:$0xff]
        %v3147 = vld [vmem:[#allocation2 + $0x688] sm:$0xff]
        %v3148 = vld [vmem:[#allocation2 + $0x690] sm:$0xff]
        %v3149 = vld [vmem:[#allocation2 + $0x698] sm:$0xff]
        %v3150 = vld [vmem:[#allocation2 + $0x6a0] sm:$0xff]
        %v3151 = vld [vmem:[#allocation2 + $0x6a8] sm:$0xff]
        %v3152 = vld [vmem:[#allocation2 + $0x6b0] sm:$0xff]
        %v3153 = vld [vmem:[#allocation2 + $0x6b8] sm:$0xff]
        %v3154 = vld [vmem:[#allocation2 + $0x6c0] sm:$0xff]
        %v3155 = vld [vmem:[#allocation2 + $0x6c8] sm:$0xff]
        %v3156 = vld [vmem:[#allocation2 + $0x6d0] sm:$0xff]
        %v3157 = vld [vmem:[#allocation2 + $0x6d8] sm:$0xff]
        %v3158 = vld [vmem:[#allocation2 + $0x6e0] sm:$0xff]
        %v3159 = vld [vmem:[#allocation2 + $0x6e8] sm:$0xff]
        %v3160 = vld [vmem:[#allocation2 + $0x6f0] sm:$0xff]
        %v3161 = vld [vmem:[#allocation2 + $0x6f8] sm:$0xff]
        %v3162 = vld [vmem:[#allocation2 + $0x700] sm:$0xff]
        %v3163 = vld [vmem:[#allocation2 + $0x708] sm:$0xff]
        %v3164 = vld [vmem:[#allocation2 + $0x710] sm:$0xff]
        %v3165 = vld [vmem:[#allocation2 + $0x718] sm:$0xff]
        %v3166 = vld [vmem:[#allocation2 + $0x720] sm:$0xff]
        %v3167 = vld [vmem:[#allocation2 + $0x728] sm:$0xff]
        %v3168 = vld [vmem:[#allocation2 + $0x730] sm:$0xff]
        %v3169 = vld [vmem:[#allocation2 + $0x738] sm:$0xff]
        %v3170 = vld [vmem:[#allocation2 + $0x740] sm:$0xff]
        %v3171 = vld [vmem:[#allocation2 + $0x748] sm:$0xff]
        %v3172 = vld [vmem:[#allocation2 + $0x750] sm:$0xff]
        %v3173 = vld [vmem:[#allocation2 + $0x758] sm:$0xff]
        %v3174 = vld [vmem:[#allocation2 + $0x760] sm:$0xff]
        %v3175 = vld [vmem:[#allocation2 + $0x768] sm:$0xff]
        %v3176 = vld [vmem:[#allocation2 + $0x770] sm:$0xff]
        %v3177 = vld [vmem:[#allocation2 + $0x778] sm:$0xff]
        %v3178 = vld [vmem:[#allocation2 + $0x780] sm:$0xff]
        %v3179 = vld [vmem:[#allocation2 + $0x788] sm:$0xff]
        %v3180 = vld [vmem:[#allocation2 + $0x790] sm:$0xff]
        %v3181 = vld [vmem:[%s2] sm:$0xff]
        %v3182 = vld [vmem:[%s2 + $0x8] sm:$0xff]
        %3184 = vset.pattern.permute.xlu0 0
        %3185 = vperm.xlu0 %3184, %v3181
        %v3186 = vpop.permute.xlu0 %3185
        %3189 = vset.pattern.permute.xlu0 0
        %3190 = vperm.xlu0 %3189, %v3182
        %v3191 = vpop.permute.xlu0 %3190
        %v3197 = vunpack.c.l.b16 %v2934
        %v3198 = vunpack.c.h.b16 %v2934
        %v3199 = vunpack.c.l.b16 %v2935
        %v3200 = vunpack.c.h.b16 %v2935
        %v3201 = vunpack.c.l.b16 %v2936
        %v3202 = vunpack.c.h.b16 %v2936
        %v3203 = vunpack.c.l.b16 %v2937
        %v3204 = vunpack.c.h.b16 %v2937
        %v3205 = vpack.c.b16 %v3201, %v3197
        %v3206 = vpack.c.b16 %v3202, %v3198
        %v3207 = vpack.c.b16 %v3203, %v3199
        %v3208 = vpack.c.b16 %v3204, %v3200
        %vm3212 = vcmask 392192
        %v3214 = vsel %vm3212, %v3208, 0
        %3216 = vmatprep.subr.bf16.mxu0 %v2939
        %3217 = vmatpush1.bf16.msra.mxu0 %v2938
        %3218 = vmatprep.subr.bf16.mxu0 %v2948
        %3219 = vmatpush1.bf16.msra.mxu0 %v2947
        %3220 = vmatprep.subr.bf16.mxu0 %v2957
        %3221 = vmatpush1.bf16.msra.mxu0 %v2956
        %3222 = vmatprep.subr.bf16.mxu0 %v2966
        %3223 = vmatpush1.bf16.msra.mxu0 %v2965
        %3224 = vmatprep.subr.bf16.mxu0 %v2975
        %3225 = vmatpush1.bf16.msra.mxu0 %v2974
        %3226 = vmatprep.subr.bf16.mxu0 %v2984
        %3227 = vmatpush1.bf16.msra.mxu0 %v2983
        %3228 = vmatprep.subr.bf16.mxu0 %v2993
        %3229 = vmatpush1.bf16.msra.mxu0 %v2992
        %3230 = vmatprep.subr.bf16.mxu0 %v3002
        %3231 = vmatpush1.bf16.msra.mxu0 %v3001
        %3232 = vmatprep.subr.bf16.mxu0 %v3011
        %3233 = vmatpush1.bf16.msra.mxu0 %v3010
        %3234 = vmatprep.subr.bf16.mxu0 %v3020
        %3235 = vmatpush1.bf16.msra.mxu0 %v3019
        %3236 = vmatprep.subr.bf16.mxu0 %v3029
        %3237 = vmatpush1.bf16.msra.mxu0 %v3028
        %3238 = vmatprep.subr.bf16.mxu0 %v3038
        %3239 = vmatpush1.bf16.msra.mxu0 %v3037
        %3240 = vmatprep.subr.bf16.mxu0 %v3047
        %3241 = vmatpush1.bf16.msra.mxu0 %v3046
        %3242 = vmatprep.subr.bf16.mxu0 %v3056
        %3243 = vmatpush1.bf16.msra.mxu0 %v3055
        %3244 = vmatprep.subr.bf16.mxu0 %v3065
        %3245 = vmatpush1.bf16.msra.mxu0 %v3064
        %3246 = vmatprep.subr.bf16.mxu0 %v3074
        %3247 = vmatpush1.bf16.msra.mxu0 %v3073
        %3248 = vmatprep.mubr.bf16.mxu0 %v3206
        %3249 = vmatmul.mubr.bf16.gmra.mrb[0].mxu0 %v3205
        %v3250 = vpop.f32.mrb[0].mxu0
        %v3251 = vadd.f32 %v3186, %v3250
        %v3252 = vpop.f32.mrb[0].mxu0
        %v3253 = vadd.f32 %v3186, %v3252
        %v3254 = vpop.f32.mrb[0].mxu0
        %v3255 = vadd.f32 %v3191, %v3254
        %v3256 = vpop.f32.mrb[0].mxu0
        %v3257 = vadd.f32 %v3191, %v3256
        %3258 = vdwg.mxu0
        %3259 = vmatprep.subr.bf16.mxu0 %v3083
        %3260 = vmatpush1.bf16.msra.mxu0 %v3082
        %3261 = vmatprep.subr.bf16.mxu0 %v3092
        %3262 = vmatpush1.bf16.msra.mxu0 %v3091
        %3263 = vmatprep.subr.bf16.mxu0 %v3101
        %3264 = vmatpush1.bf16.msra.mxu0 %v3100
        %3265 = vmatprep.subr.bf16.mxu0 %v3110
        %3266 = vmatpush1.bf16.msra.mxu0 %v3109
        %3267 = vmatprep.subr.bf16.mxu0 %v3119
        %3268 = vmatpush1.bf16.msra.mxu0 %v3118
        %3269 = vmatprep.subr.bf16.mxu0 %v3128
        %3270 = vmatpush1.bf16.msra.mxu0 %v3127
        %3271 = vmatprep.subr.bf16.mxu0 %v3137
        %3272 = vmatpush1.bf16.msra.mxu0 %v3136
        %3273 = vmatprep.subr.bf16.mxu0 %v3146
        %3274 = vmatpush1.bf16.msra.mxu0 %v3145
        %3275 = vmatprep.subr.bf16.mxu0 %v3155
        %3276 = vmatpush1.bf16.msra.mxu0 %v3154
        %3277 = vmatprep.subr.bf16.mxu0 %v3164
        %3278 = vmatpush1.bf16.msra.mxu0 %v3163
        %3279 = vmatprep.subr.bf16.mxu0 %v3173
        %3280 = vmatpush1.bf16.msra.mxu0 %v3172
        %3281 = vmatprep.subr.bf16.mxu0 0
        %3282 = vmatpush1.bf16.msra.mxu0 0
        %3283 = vmatprep.subr.bf16.mxu0 0
        %3284 = vmatpush1.bf16.msra.mxu0 0
        %3285 = vmatprep.subr.bf16.mxu0 0
        %3286 = vmatpush1.bf16.msra.mxu0 0
        %3287 = vmatprep.subr.bf16.mxu0 0
        %3288 = vmatpush1.bf16.msra.mxu0 0
        %3289 = vmatprep.subr.bf16.mxu0 0
        %3290 = vmatpush1.bf16.msra.mxu0 0
        %3291 = vmatprep.mubr.bf16.mxu0 %v3214
        %3292 = vmatmul.mubr.bf16.gmra.mrb[0].mxu0 %v3207
        %v3293 = vpop.f32.mrb[0].mxu0
        %v3294 = vadd.f32 %v3251, %v3293
        %v3295 = vpop.f32.mrb[0].mxu0
        %v3296 = vadd.f32 %v3253, %v3295
        %v3297 = vpop.f32.mrb[0].mxu0
        %v3298 = vadd.f32 %v3255, %v3297
        %v3299 = vpop.f32.mrb[0].mxu0
        %v3300 = vadd.f32 %v3257, %v3299
        %3301 = vdwg.mxu0
        %3302 = vmatprep.subr.bf16.mxu0 %v2941
        %3303 = vmatpush1.bf16.msra.mxu0 %v2940
        %3304 = vmatprep.subr.bf16.mxu0 %v2950
        %3305 = vmatpush1.bf16.msra.mxu0 %v2949
        %3306 = vmatprep.subr.bf16.mxu0 %v2959
        %3307 = vmatpush1.bf16.msra.mxu0 %v2958
        %3308 = vmatprep.subr.bf16.mxu0 %v2968
        %3309 = vmatpush1.bf16.msra.mxu0 %v2967
        %3310 = vmatprep.subr.bf16.mxu0 %v2977
        %3311 = vmatpush1.bf16.msra.mxu0 %v2976
        %3312 = vmatprep.subr.bf16.mxu0 %v2986
        %3313 = vmatpush1.bf16.msra.mxu0 %v2985
        %3314 = vmatprep.subr.bf16.mxu0 %v2995
        %3315 = vmatpush1.bf16.msra.mxu0 %v2994
        %3316 = vmatprep.subr.bf16.mxu0 %v3004
        %3317 = vmatpush1.bf16.msra.mxu0 %v3003
        %3318 = vmatprep.subr.bf16.mxu0 %v3013
        %3319 = vmatpush1.bf16.msra.mxu0 %v3012
        %3320 = vmatprep.subr.bf16.mxu0 %v3022
        %3321 = vmatpush1.bf16.msra.mxu0 %v3021
        %3322 = vmatprep.subr.bf16.mxu0 %v3031
        %3323 = vmatpush1.bf16.msra.mxu0 %v3030
        %3324 = vmatprep.subr.bf16.mxu0 %v3040
        %3325 = vmatpush1.bf16.msra.mxu0 %v3039
        %3326 = vmatprep.subr.bf16.mxu0 %v3049
        %3327 = vmatpush1.bf16.msra.mxu0 %v3048
        %3328 = vmatprep.subr.bf16.mxu0 %v3058
        %3329 = vmatpush1.bf16.msra.mxu0 %v3057
        %3330 = vmatprep.subr.bf16.mxu0 %v3067
        %3331 = vmatpush1.bf16.msra.mxu0 %v3066
        %3332 = vmatprep.subr.bf16.mxu0 %v3076
        %3333 = vmatpush1.bf16.msra.mxu0 %v3075
        %3334 = vmatprep.mubr.bf16.mxu0 %v3206
        %3335 = vmatmul.mubr.bf16.gmra.mrb[0].mxu0 %v3205
        %v3336 = vpop.f32.mrb[0].mxu0
        %v3337 = vadd.f32 %v3186, %v3336
        %v3338 = vpop.f32.mrb[0].mxu0
        %v3339 = vadd.f32 %v3186, %v3338
        %v3340 = vpop.f32.mrb[0].mxu0
        %v3341 = vadd.f32 %v3191, %v3340
        %v3342 = vpop.f32.mrb[0].mxu0
        %v3343 = vadd.f32 %v3191, %v3342
        %3344 = vdwg.mxu0
        %3345 = vmatprep.subr.bf16.mxu0 %v3085
        %3346 = vmatpush1.bf16.msra.mxu0 %v3084
        %3347 = vmatprep.subr.bf16.mxu0 %v3094
        %3348 = vmatpush1.bf16.msra.mxu0 %v3093
        %3349 = vmatprep.subr.bf16.mxu0 %v3103
        %3350 = vmatpush1.bf16.msra.mxu0 %v3102
        %3351 = vmatprep.subr.bf16.mxu0 %v3112
        %3352 = vmatpush1.bf16.msra.mxu0 %v3111
        %3353 = vmatprep.subr.bf16.mxu0 %v3121
        %3354 = vmatpush1.bf16.msra.mxu0 %v3120
        %3355 = vmatprep.subr.bf16.mxu0 %v3130
        %3356 = vmatpush1.bf16.msra.mxu0 %v3129
        %3357 = vmatprep.subr.bf16.mxu0 %v3139
        %3358 = vmatpush1.bf16.msra.mxu0 %v3138
        %3359 = vmatprep.subr.bf16.mxu0 %v3148
        %3360 = vmatpush1.bf16.msra.mxu0 %v3147
        %3361 = vmatprep.subr.bf16.mxu0 %v3157
        %3362 = vmatpush1.bf16.msra.mxu0 %v3156
        %3363 = vmatprep.subr.bf16.mxu0 %v3166
        %3364 = vmatpush1.bf16.msra.mxu0 %v3165
        %3365 = vmatprep.subr.bf16.mxu0 %v3175
        %3366 = vmatpush1.bf16.msra.mxu0 %v3174
        %3367 = vmatprep.subr.bf16.mxu0 0
        %3368 = vmatpush1.bf16.msra.mxu0 0
        %3369 = vmatprep.subr.bf16.mxu0 0
        %3370 = vmatpush1.bf16.msra.mxu0 0
        %3371 = vmatprep.subr.bf16.mxu0 0
        %3372 = vmatpush1.bf16.msra.mxu0 0
        %3373 = vmatprep.subr.bf16.mxu0 0
        %3374 = vmatpush1.bf16.msra.mxu0 0
        %3375 = vmatprep.subr.bf16.mxu0 0
        %3376 = vmatpush1.bf16.msra.mxu0 0
        %3377 = vmatprep.mubr.bf16.mxu0 %v3214
        %3378 = vmatmul.mubr.bf16.gmra.mrb[0].mxu0 %v3207
        %v3379 = vpop.f32.mrb[0].mxu0
        %v3380 = vadd.f32 %v3337, %v3379
        %v3381 = vpop.f32.mrb[0].mxu0
        %v3382 = vadd.f32 %v3339, %v3381
        %v3383 = vpop.f32.mrb[0].mxu0
        %v3384 = vadd.f32 %v3341, %v3383
        %v3385 = vpop.f32.mrb[0].mxu0
        %v3386 = vadd.f32 %v3343, %v3385
        %3387 = vdwg.mxu0
        %3388 = vmatprep.subr.bf16.mxu0 %v2943
        %3389 = vmatpush1.bf16.msra.mxu0 %v2942
        %3390 = vmatprep.subr.bf16.mxu0 %v2952
        %3391 = vmatpush1.bf16.msra.mxu0 %v2951
        %3392 = vmatprep.subr.bf16.mxu0 %v2961
        %3393 = vmatpush1.bf16.msra.mxu0 %v2960
        %3394 = vmatprep.subr.bf16.mxu0 %v2970
        %3395 = vmatpush1.bf16.msra.mxu0 %v2969
        %3396 = vmatprep.subr.bf16.mxu0 %v2979
        %3397 = vmatpush1.bf16.msra.mxu0 %v2978
        %3398 = vmatprep.subr.bf16.mxu0 %v2988
        %3399 = vmatpush1.bf16.msra.mxu0 %v2987
        %3400 = vmatprep.subr.bf16.mxu0 %v2997
        %3401 = vmatpush1.bf16.msra.mxu0 %v2996
        %3402 = vmatprep.subr.bf16.mxu0 %v3006
        %3403 = vmatpush1.bf16.msra.mxu0 %v3005
        %3404 = vmatprep.subr.bf16.mxu0 %v3015
        %3405 = vmatpush1.bf16.msra.mxu0 %v3014
        %3406 = vmatprep.subr.bf16.mxu0 %v3024
        %3407 = vmatpush1.bf16.msra.mxu0 %v3023
        %3408 = vmatprep.subr.bf16.mxu0 %v3033
        %3409 = vmatpush1.bf16.msra.mxu0 %v3032
        %3410 = vmatprep.subr.bf16.mxu0 %v3042
        %3411 = vmatpush1.bf16.msra.mxu0 %v3041
        %3412 = vmatprep.subr.bf16.mxu0 %v3051
        %3413 = vmatpush1.bf16.msra.mxu0 %v3050
        %3414 = vmatprep.subr.bf16.mxu0 %v3060
        %3415 = vmatpush1.bf16.msra.mxu0 %v3059
        %3416 = vmatprep.subr.bf16.mxu0 %v3069
        %3417 = vmatpush1.bf16.msra.mxu0 %v3068
        %3418 = vmatprep.subr.bf16.mxu0 %v3078
        %3419 = vmatpush1.bf16.msra.mxu0 %v3077
        %3420 = vmatprep.mubr.bf16.mxu0 %v3206
        %3421 = vmatmul.mubr.bf16.gmra.mrb[0].mxu0 %v3205
        %v3422 = vpop.f32.mrb[0].mxu0
        %v3423 = vadd.f32 %v3186, %v3422
        %v3424 = vpop.f32.mrb[0].mxu0
        %v3425 = vadd.f32 %v3186, %v3424
        %v3426 = vpop.f32.mrb[0].mxu0
        %v3427 = vadd.f32 %v3191, %v3426
        %v3428 = vpop.f32.mrb[0].mxu0
        %v3429 = vadd.f32 %v3191, %v3428
        %3430 = vdwg.mxu0
        %3431 = vmatprep.subr.bf16.mxu0 %v3087
        %3432 = vmatpush1.bf16.msra.mxu0 %v3086
        %3433 = vmatprep.subr.bf16.mxu0 %v3096
        %3434 = vmatpush1.bf16.msra.mxu0 %v3095
        %3435 = vmatprep.subr.bf16.mxu0 %v3105
        %3436 = vmatpush1.bf16.msra.mxu0 %v3104
        %3437 = vmatprep.subr.bf16.mxu0 %v3114
        %3438 = vmatpush1.bf16.msra.mxu0 %v3113
        %3439 = vmatprep.subr.bf16.mxu0 %v3123
        %3440 = vmatpush1.bf16.msra.mxu0 %v3122
        %3441 = vmatprep.subr.bf16.mxu0 %v3132
        %3442 = vmatpush1.bf16.msra.mxu0 %v3131
        %3443 = vmatprep.subr.bf16.mxu0 %v3141
        %3444 = vmatpush1.bf16.msra.mxu0 %v3140
        %3445 = vmatprep.subr.bf16.mxu0 %v3150
        %3446 = vmatpush1.bf16.msra.mxu0 %v3149
        %3447 = vmatprep.subr.bf16.mxu0 %v3159
        %3448 = vmatpush1.bf16.msra.mxu0 %v3158
        %3449 = vmatprep.subr.bf16.mxu0 %v3168
        %3450 = vmatpush1.bf16.msra.mxu0 %v3167
        %3451 = vmatprep.subr.bf16.mxu0 %v3177
        %3452 = vmatpush1.bf16.msra.mxu0 %v3176
        %3453 = vmatprep.subr.bf16.mxu0 0
        %3454 = vmatpush1.bf16.msra.mxu0 0
        %3455 = vmatprep.subr.bf16.mxu0 0
        %3456 = vmatpush1.bf16.msra.mxu0 0
        %3457 = vmatprep.subr.bf16.mxu0 0
        %3458 = vmatpush1.bf16.msra.mxu0 0
        %3459 = vmatprep.subr.bf16.mxu0 0
        %3460 = vmatpush1.bf16.msra.mxu0 0
        %3461 = vmatprep.subr.bf16.mxu0 0
        %3462 = vmatpush1.bf16.msra.mxu0 0
        %3463 = vmatprep.mubr.bf16.mxu0 %v3214
        %3464 = vmatmul.mubr.bf16.gmra.mrb[0].mxu0 %v3207
        %v3465 = vpop.f32.mrb[0].mxu0
        %v3466 = vadd.f32 %v3423, %v3465
        %v3467 = vpop.f32.mrb[0].mxu0
        %v3468 = vadd.f32 %v3425, %v3467
        %v3469 = vpop.f32.mrb[0].mxu0
        %v3470 = vadd.f32 %v3427, %v3469
        %v3471 = vpop.f32.mrb[0].mxu0
        %v3472 = vadd.f32 %v3429, %v3471
        %3473 = vdwg.mxu0
        %3474 = vmatprep.subr.bf16.mxu0 %v2945
        %3475 = vmatpush1.bf16.msra.mxu0 %v2944
        %3476 = vmatprep.subr.bf16.mxu0 %v2954
        %3477 = vmatpush1.bf16.msra.mxu0 %v2953
        %3478 = vmatprep.subr.bf16.mxu0 %v2963
        %3479 = vmatpush1.bf16.msra.mxu0 %v2962
        %3480 = vmatprep.subr.bf16.mxu0 %v2972
        %3481 = vmatpush1.bf16.msra.mxu0 %v2971
        %3482 = vmatprep.subr.bf16.mxu0 %v2981
        %3483 = vmatpush1.bf16.msra.mxu0 %v2980
        %3484 = vmatprep.subr.bf16.mxu0 %v2990
        %3485 = vmatpush1.bf16.msra.mxu0 %v2989
        %3486 = vmatprep.subr.bf16.mxu0 %v2999
        %3487 = vmatpush1.bf16.msra.mxu0 %v2998
        %3488 = vmatprep.subr.bf16.mxu0 %v3008
        %3489 = vmatpush1.bf16.msra.mxu0 %v3007
        %3490 = vmatprep.subr.bf16.mxu0 %v3017
        %3491 = vmatpush1.bf16.msra.mxu0 %v3016
        %3492 = vmatprep.subr.bf16.mxu0 %v3026
        %3493 = vmatpush1.bf16.msra.mxu0 %v3025
        %3494 = vmatprep.subr.bf16.mxu0 %v3035
        %3495 = vmatpush1.bf16.msra.mxu0 %v3034
        %3496 = vmatprep.subr.bf16.mxu0 %v3044
        %3497 = vmatpush1.bf16.msra.mxu0 %v3043
        %3498 = vmatprep.subr.bf16.mxu0 %v3053
        %3499 = vmatpush1.bf16.msra.mxu0 %v3052
        %3500 = vmatprep.subr.bf16.mxu0 %v3062
        %3501 = vmatpush1.bf16.msra.mxu0 %v3061
        %3502 = vmatprep.subr.bf16.mxu0 %v3071
        %3503 = vmatpush1.bf16.msra.mxu0 %v3070
        %3504 = vmatprep.subr.bf16.mxu0 %v3080
        %3505 = vmatpush1.bf16.msra.mxu0 %v3079
        %3506 = vmatprep.mubr.bf16.mxu0 %v3206
        %3507 = vmatmul.mubr.bf16.gmra.mrb[0].mxu0 %v3205
        %v3508 = vpop.f32.mrb[0].mxu0
        %v3509 = vadd.f32 %v3186, %v3508
        %v3510 = vpop.f32.mrb[0].mxu0
        %v3511 = vadd.f32 %v3186, %v3510
        %v3512 = vpop.f32.mrb[0].mxu0
        %v3513 = vadd.f32 %v3191, %v3512
        %v3514 = vpop.f32.mrb[0].mxu0
        %v3515 = vadd.f32 %v3191, %v3514
        %3516 = vdwg.mxu0
        %3517 = vmatprep.subr.bf16.mxu0 %v3089
        %3518 = vmatpush1.bf16.msra.mxu0 %v3088
        %3519 = vmatprep.subr.bf16.mxu0 %v3098
        %3520 = vmatpush1.bf16.msra.mxu0 %v3097
        %3521 = vmatprep.subr.bf16.mxu0 %v3107
        %3522 = vmatpush1.bf16.msra.mxu0 %v3106
        %3523 = vmatprep.subr.bf16.mxu0 %v3116
        %3524 = vmatpush1.bf16.msra.mxu0 %v3115
        %3525 = vmatprep.subr.bf16.mxu0 %v3125
        %3526 = vmatpush1.bf16.msra.mxu0 %v3124
        %3527 = vmatprep.subr.bf16.mxu0 %v3134
        %3528 = vmatpush1.bf16.msra.mxu0 %v3133
        %3529 = vmatprep.subr.bf16.mxu0 %v3143
        %3530 = vmatpush1.bf16.msra.mxu0 %v3142
        %3531 = vmatprep.subr.bf16.mxu0 %v3152
        %3532 = vmatpush1.bf16.msra.mxu0 %v3151
        %3533 = vmatprep.subr.bf16.mxu0 %v3161
        %3534 = vmatpush1.bf16.msra.mxu0 %v3160
        %3535 = vmatprep.subr.bf16.mxu0 %v3170
        %3536 = vmatpush1.bf16.msra.mxu0 %v3169
        %3537 = vmatprep.subr.bf16.mxu0 %v3179
        %3538 = vmatpush1.bf16.msra.mxu0 %v3178
        %3539 = vmatprep.subr.bf16.mxu0 0
        %3540 = vmatpush1.bf16.msra.mxu0 0
        %3541 = vmatprep.subr.bf16.mxu0 0
        %3542 = vmatpush1.bf16.msra.mxu0 0
        %3543 = vmatprep.subr.bf16.mxu0 0
        %3544 = vmatpush1.bf16.msra.mxu0 0
        %3545 = vmatprep.subr.bf16.mxu0 0
        %3546 = vmatpush1.bf16.msra.mxu0 0
        %3547 = vmatprep.subr.bf16.mxu0 0
        %3548 = vmatpush1.bf16.msra.mxu0 0
        %3549 = vmatprep.mubr.bf16.mxu0 %v3214
        %3550 = vmatmul.mubr.bf16.gmra.mrb[0].mxu0 %v3207
        %v3551 = vpop.f32.mrb[0].mxu0
        %v3552 = vadd.f32 %v3509, %v3551
        %v3553 = vpop.f32.mrb[0].mxu0
        %v3554 = vadd.f32 %v3511, %v3553
        %v3555 = vpop.f32.mrb[0].mxu0
        %v3556 = vadd.f32 %v3513, %v3555
        %v3557 = vpop.f32.mrb[0].mxu0
        %v3558 = vadd.f32 %v3515, %v3557
        %3559 = vdwg.mxu0
        %3560 = vmatprep.subr.bf16.mxu0 0
        %3561 = vmatpush1.bf16.msra.mxu0 %v2946
        %3562 = vmatprep.subr.bf16.mxu0 0
        %3563 = vmatpush1.bf16.msra.mxu0 %v2955
        %3564 = vmatprep.subr.bf16.mxu0 0
        %3565 = vmatpush1.bf16.msra.mxu0 %v2964
        %3566 = vmatprep.subr.bf16.mxu0 0
        %3567 = vmatpush1.bf16.msra.mxu0 %v2973
        %3568 = vmatprep.subr.bf16.mxu0 0
        %3569 = vmatpush1.bf16.msra.mxu0 %v2982
        %3570 = vmatprep.subr.bf16.mxu0 0
        %3571 = vmatpush1.bf16.msra.mxu0 %v2991
        %3572 = vmatprep.subr.bf16.mxu0 0
        %3573 = vmatpush1.bf16.msra.mxu0 %v3000
        %3574 = vmatprep.subr.bf16.mxu0 0
        %3575 = vmatpush1.bf16.msra.mxu0 %v3009
        %3576 = vmatprep.subr.bf16.mxu0 0
        %3577 = vmatpush1.bf16.msra.mxu0 %v3018
        %3578 = vmatprep.subr.bf16.mxu0 0
        %3579 = vmatpush1.bf16.msra.mxu0 %v3027
        %3580 = vmatprep.subr.bf16.mxu0 0
        %3581 = vmatpush1.bf16.msra.mxu0 %v3036
        %3582 = vmatprep.subr.bf16.mxu0 0
        %3583 = vmatpush1.bf16.msra.mxu0 %v3045
        %3584 = vmatprep.subr.bf16.mxu0 0
        %3585 = vmatpush1.bf16.msra.mxu0 %v3054
        %3586 = vmatprep.subr.bf16.mxu0 0
        %3587 = vmatpush1.bf16.msra.mxu0 %v3063
        %3588 = vmatprep.subr.bf16.mxu0 0
        %3589 = vmatpush1.bf16.msra.mxu0 %v3072
        %3590 = vmatprep.subr.bf16.mxu0 0
        %3591 = vmatpush1.bf16.msra.mxu0 %v3081
        %3592 = vmatprep.mubr.bf16.mxu0 %v3206
        %3593 = vmatmul.mubr.bf16.gmra.mrb[0].mxu0 %v3205
        %v3594 = vpop.f32.mrb[0].mxu0
        %v3595 = vadd.f32 %v3186, %v3594
        %v3596 = vpop.f32.mrb[0].mxu0
        %v3597 = vpop.f32.mrb[0].mxu0
        %v3598 = vadd.f32 %v3191, %v3597
        %v3599 = vpop.f32.mrb[0].mxu0
        %3600 = vdwg.mxu0
        %3601 = vmatprep.subr.bf16.mxu0 0
        %3602 = vmatpush1.bf16.msra.mxu0 %v3090
        %3603 = vmatprep.subr.bf16.mxu0 0
        %3604 = vmatpush1.bf16.msra.mxu0 %v3099
        %3605 = vmatprep.subr.bf16.mxu0 0
        %3606 = vmatpush1.bf16.msra.mxu0 %v3108
        %3607 = vmatprep.subr.bf16.mxu0 0
        %3608 = vmatpush1.bf16.msra.mxu0 %v3117
        %3609 = vmatprep.subr.bf16.mxu0 0
        %3610 = vmatpush1.bf16.msra.mxu0 %v3126
        %3611 = vmatprep.subr.bf16.mxu0 0
        %3612 = vmatpush1.bf16.msra.mxu0 %v3135
        %3613 = vmatprep.subr.bf16.mxu0 0
        %3614 = vmatpush1.bf16.msra.mxu0 %v3144
        %3615 = vmatprep.subr.bf16.mxu0 0
        %3616 = vmatpush1.bf16.msra.mxu0 %v3153
        %3617 = vmatprep.subr.bf16.mxu0 0
        %3618 = vmatpush1.bf16.msra.mxu0 %v3162
        %3619 = vmatprep.subr.bf16.mxu0 0
        %3620 = vmatpush1.bf16.msra.mxu0 %v3171
        %3621 = vmatprep.subr.bf16.mxu0 0
        %3622 = vmatpush1.bf16.msra.mxu0 %v3180
        %3623 = vmatprep.subr.bf16.mxu0 0
        %3624 = vmatpush1.bf16.msra.mxu0 0
        %3625 = vmatprep.subr.bf16.mxu0 0
        %3626 = vmatpush1.bf16.msra.mxu0 0
        %3627 = vmatprep.subr.bf16.mxu0 0
        %3628 = vmatpush1.bf16.msra.mxu0 0
        %3629 = vmatprep.subr.bf16.mxu0 0
        %3630 = vmatpush1.bf16.msra.mxu0 0
        %3631 = vmatprep.subr.bf16.mxu0 0
        %3632 = vmatpush1.bf16.msra.mxu0 0
        %3633 = vmatprep.mubr.bf16.mxu0 %v3214
        %3634 = vmatmul.mubr.bf16.gmra.mrb[0].mxu0 %v3207
        %v3635 = vpop.f32.mrb[0].mxu0
        %v3636 = vadd.f32 %v3595, %v3635
        %v3637 = vpop.f32.mrb[0].mxu0
        %v3638 = vpop.f32.mrb[0].mxu0
        %v3639 = vadd.f32 %v3598, %v3638
        %v3640 = vpop.f32.mrb[0].mxu0
        %3641 = vdwg.mxu0
        %v3642 = vmax.f32 %v3294, 0.0
        %v3643 = vmax.f32 %v3296, 0.0
        %v3644 = vmax.f32 %v3380, 0.0
        %v3645 = vmax.f32 %v3382, 0.0
        %v3646 = vmax.f32 %v3466, 0.0
        %v3647 = vmax.f32 %v3468, 0.0
        %v3648 = vmax.f32 %v3552, 0.0
        %v3649 = vmax.f32 %v3554, 0.0
        %v3650 = vmax.f32 %v3636, 0.0
        %v3651 = vmax.f32 %v3298, 0.0
        %v3652 = vmax.f32 %v3300, 0.0
        %v3653 = vmax.f32 %v3384, 0.0
        %v3654 = vmax.f32 %v3386, 0.0
        %v3655 = vmax.f32 %v3470, 0.0
        %v3656 = vmax.f32 %v3472, 0.0
        %v3657 = vmax.f32 %v3556, 0.0
        %v3658 = vmax.f32 %v3558, 0.0
        %v3659 = vmax.f32 %v3639, 0.0
        %v3660 = vld [vmem:[%s319] sm:$0xff]
        %v3661 = vld [vmem:[%s319 + $0x8] sm:$0x1]
        %vm3662 = vcmp.ne.f32.partialorder %v3660, 0.0
        %vm3663 = vcmp.ne.f32.partialorder %v3661, 0.0
        %v3664 = vsel %vm3662, 1, 0
        %v3665 = vsel %vm3663, 1, 0
        %v3666 = vlaneseq
        %v3667 = vshrl.u32 %v3666, 7
        %v3668 = vsub.s32 0, %v3667
        %v3669 = vrot.slane %v3664, %v3668
        %v3670 = vlaneseq
        %v3671 = vshrl.u32 %v3670, 7
        %v3672 = vsub.s32 1, %v3671
        %v3673 = vrot.slane %v3664, %v3672
        %v3674 = vlaneseq
        %v3675 = vshrl.u32 %v3674, 7
        %v3676 = vsub.s32 2, %v3675
        %v3677 = vrot.slane %v3664, %v3676
        %v3678 = vlaneseq
        %v3679 = vshrl.u32 %v3678, 7
        %v3680 = vsub.s32 3, %v3679
        %v3681 = vrot.slane %v3664, %v3680
        %v3682 = vlaneseq
        %v3683 = vshrl.u32 %v3682, 7
        %v3684 = vsub.s32 4, %v3683
        %v3685 = vrot.slane %v3664, %v3684
        %v3686 = vlaneseq
        %v3687 = vshrl.u32 %v3686, 7
        %v3688 = vsub.s32 5, %v3687
        %v3689 = vrot.slane %v3664, %v3688
        %v3690 = vlaneseq
        %v3691 = vshrl.u32 %v3690, 7
        %v3692 = vsub.s32 6, %v3691
        %v3693 = vrot.slane %v3664, %v3692
        %v3694 = vlaneseq
        %v3695 = vshrl.u32 %v3694, 7
        %v3696 = vsub.s32 7, %v3695
        %v3697 = vrot.slane %v3664, %v3696
        %v3698 = vlaneseq
        %v3699 = vshrl.u32 %v3698, 7
        %v3700 = vsub.s32 0, %v3699
        %v3701 = vrot.slane %v3665, %v3700
        %vm3702 = vcmp.eq.s32.totalorder %v3669, 1
        %vm3703 = vcmp.eq.s32.totalorder %v3673, 1
        %vm3704 = vcmp.eq.s32.totalorder %v3677, 1
        %vm3705 = vcmp.eq.s32.totalorder %v3681, 1
        %vm3706 = vcmp.eq.s32.totalorder %v3685, 1
        %vm3707 = vcmp.eq.s32.totalorder %v3689, 1
        %vm3708 = vcmp.eq.s32.totalorder %v3693, 1
        %vm3709 = vcmp.eq.s32.totalorder %v3697, 1
        %vm3710 = vcmp.eq.s32.totalorder %v3701, 1
        %v3711 = vsel %vm3702, %v3642, 0.0
        %v3712 = vsel %vm3703, %v3643, 0.0
        %v3713 = vsel %vm3704, %v3644, 0.0
        %v3714 = vsel %vm3705, %v3645, 0.0
        %v3715 = vsel %vm3706, %v3646, 0.0
        %v3716 = vsel %vm3707, %v3647, 0.0
        %v3717 = vsel %vm3708, %v3648, 0.0
        %v3718 = vsel %vm3709, %v3649, 0.0
        %v3719 = vsel %vm3710, %v3650, 0.0
        %v3720 = vsel %vm3702, %v3651, 0.0
        %v3721 = vsel %vm3703, %v3652, 0.0
        %v3722 = vsel %vm3704, %v3653, 0.0
        %v3723 = vsel %vm3705, %v3654, 0.0
        %v3724 = vsel %vm3706, %v3655, 0.0
        %v3725 = vsel %vm3707, %v3656, 0.0
        %v3726 = vsel %vm3708, %v3657, 0.0
        %v3727 = vsel %vm3709, %v3658, 0.0
        %v3728 = vsel %vm3710, %v3659, 0.0
        %3729 = vst [vmem:[#allocation3] sm:$0xff] 0
        %3730 = vst [vmem:[#allocation3 + $0x50] sm:$0xff] 0
        %v3731 = vpack.c.bf16 %v3720, %v3711
        %v3732 = vpack.c.bf16 %v3721, %v3712
        %v3733 = vpack.c.bf16 %v3722, %v3713
        %v3734 = vpack.c.bf16 %v3723, %v3714
        %v3735 = vpack.c.bf16 %v3724, %v3715
        %v3736 = vpack.c.bf16 %v3725, %v3716
        %v3737 = vpack.c.bf16 %v3726, %v3717
        %v3738 = vpack.c.bf16 %v3727, %v3718
        %v3739 = vpack.c.bf16 %v3728, %v3719
        %3740 = vst [vmem:[#allocation3 + $0x8] sm:$0xff] %v3731
        %3741 = vst [vmem:[#allocation3 + $0x10] sm:$0xff] %v3732
        %3742 = vst [vmem:[#allocation3 + $0x18] sm:$0xff] %v3733
        %3743 = vst [vmem:[#allocation3 + $0x20] sm:$0xff] %v3734
        %3744 = vst [vmem:[#allocation3 + $0x28] sm:$0xff] %v3735
        %3745 = vst [vmem:[#allocation3 + $0x30] sm:$0xff] %v3736
        %3746 = vst [vmem:[#allocation3 + $0x38] sm:$0xff] %v3737
        %3747 = vst [vmem:[#allocation3 + $0x40] sm:$0xff] %v3738
        %3748 = vst [vmem:[#allocation3 + $0x48] sm:$0xff] %v3739
        %v3749 = vld [vmem:[#allocation3] sm:$0xff]
        %v3750 = vld [vmem:[#allocation3 + $0x8] sm:$0xff]
        %v3751 = vld [vmem:[#allocation3 + $0x10] sm:$0xff]
        %v3752 = vld [vmem:[#allocation3 + $0x18] sm:$0xff]
        %v3753 = vld [vmem:[#allocation3 + $0x20] sm:$0xff]
        %v3754 = vld [vmem:[#allocation3 + $0x28] sm:$0xff]
        %3761 = vrot.lane.b32.xlu0 %v3749, 26
        %v3762 = vpop.permute.xlu0 %3761
        %3763 = vrot.lane.b32.xlu0 %v3750, 26
        %v3764 = vpop.permute.xlu0 %3763
        %3765 = vrot.lane.b32.xlu0 %v3751, 26
        %v3766 = vpop.permute.xlu0 %3765
        %3767 = vrot.lane.b32.xlu0 %v3752, 26
        %v3768 = vpop.permute.xlu0 %3767
        %3769 = vrot.lane.b32.xlu0 %v3753, 26
        %v3770 = vpop.permute.xlu0 %3769
        %3771 = vrot.lane.b32.xlu0 %v3754, 26
        %v3772 = vpop.permute.xlu0 %3771
        %vm3773 = vcmask 211968
        %v3774 = vsel %vm3773, %v3762, %v3764
        %v3775 = vsel %vm3773, %v3764, %v3766
        %v3776 = vsel %vm3773, %v3766, %v3768
        %v3777 = vsel %vm3773, %v3768, %v3770
        %v3778 = vsel %vm3773, %v3770, %v3772
        %3784 = vst [vmem:[#allocation2] sm:$0xff] %v3774
        %3785 = vst [vmem:[#allocation2 + $0x8] sm:$0xff] %v3775
        %3786 = vst [vmem:[#allocation2 + $0x10] sm:$0xff] %v3776
        %3787 = vst [vmem:[#allocation2 + $0x18] sm:$0xff] %v3777
        %3788 = vst [vmem:[#allocation2 + $0x20] sm:$0xff] %v3778
        %v3789 = vld [vmem:[#allocation3] sm:$0xff]
        %v3790 = vld [vmem:[#allocation3 + $0x8] sm:$0xff]
        %v3791 = vld [vmem:[#allocation3 + $0x10] sm:$0xff]
        %v3792 = vld [vmem:[#allocation3 + $0x18] sm:$0xff]
        %v3793 = vld [vmem:[#allocation3 + $0x20] sm:$0xff]
        %v3794 = vld [vmem:[#allocation3 + $0x28] sm:$0xff]
        %3801 = vrot.lane.b32.xlu0 %v3789, 24
        %v3802 = vpop.permute.xlu0 %3801
        %3803 = vrot.lane.b32.xlu0 %v3790, 24
        %v3804 = vpop.permute.xlu0 %3803
        %3805 = vrot.lane.b32.xlu0 %v3791, 24
        %v3806 = vpop.permute.xlu0 %3805
        %3807 = vrot.lane.b32.xlu0 %v3792, 24
        %v3808 = vpop.permute.xlu0 %3807
        %3809 = vrot.lane.b32.xlu0 %v3793, 24
        %v3810 = vpop.permute.xlu0 %3809
        %3811 = vrot.lane.b32.xlu0 %v3794, 24
        %v3812 = vpop.permute.xlu0 %3811
        %vm3813 = vcmask 195584
        %v3814 = vsel %vm3813, %v3802, %v3804
        %v3815 = vsel %vm3813, %v3804, %v3806
        %v3816 = vsel %vm3813, %v3806, %v3808
        %v3817 = vsel %vm3813, %v3808, %v3810
        %v3818 = vsel %vm3813, %v3810, %v3812
        %3824 = vst [vmem:[#allocation2 + $0x48] sm:$0xff] %v3814
        %3825 = vst [vmem:[#allocation2 + $0x50] sm:$0xff] %v3815
        %3826 = vst [vmem:[#allocation2 + $0x58] sm:$0xff] %v3816
        %3827 = vst [vmem:[#allocation2 + $0x60] sm:$0xff] %v3817
        %3828 = vst [vmem:[#allocation2 + $0x68] sm:$0xff] %v3818
        %v3829 = vld [vmem:[#allocation3] sm:$0xff]
        %v3830 = vld [vmem:[#allocation3 + $0x8] sm:$0xff]
        %v3831 = vld [vmem:[#allocation3 + $0x10] sm:$0xff]
        %v3832 = vld [vmem:[#allocation3 + $0x18] sm:$0xff]
        %v3833 = vld [vmem:[#allocation3 + $0x20] sm:$0xff]
        %v3834 = vld [vmem:[#allocation3 + $0x28] sm:$0xff]
        %3841 = vrot.lane.b32.xlu0 %v3829, 22
        %v3842 = vpop.permute.xlu0 %3841
        %3843 = vrot.lane.b32.xlu0 %v3830, 22
        %v3844 = vpop.permute.xlu0 %3843
        %3845 = vrot.lane.b32.xlu0 %v3831, 22
        %v3846 = vpop.permute.xlu0 %3845
        %3847 = vrot.lane.b32.xlu0 %v3832, 22
        %v3848 = vpop.permute.xlu0 %3847
        %3849 = vrot.lane.b32.xlu0 %v3833, 22
        %v3850 = vpop.permute.xlu0 %3849
        %3851 = vrot.lane.b32.xlu0 %v3834, 22
        %v3852 = vpop.permute.xlu0 %3851
        %vm3853 = vcmask 179200
        %v3854 = vsel %vm3853, %v3842, %v3844
        %v3855 = vsel %vm3853, %v3844, %v3846
        %v3856 = vsel %vm3853, %v3846, %v3848
        %v3857 = vsel %vm3853, %v3848, %v3850
        %v3858 = vsel %vm3853, %v3850, %v3852
        %3864 = vst [vmem:[#allocation2 + $0x90] sm:$0xff] %v3854
        %3865 = vst [vmem:[#allocation2 + $0x98] sm:$0xff] %v3855
        %3866 = vst [vmem:[#allocation2 + $0xa0] sm:$0xff] %v3856
        %3867 = vst [vmem:[#allocation2 + $0xa8] sm:$0xff] %v3857
        %3868 = vst [vmem:[#allocation2 + $0xb0] sm:$0xff] %v3858
        %v3869 = vld [vmem:[#allocation3] sm:$0xff]
        %v3870 = vld [vmem:[#allocation3 + $0x8] sm:$0xff]
        %v3871 = vld [vmem:[#allocation3 + $0x10] sm:$0xff]
        %v3872 = vld [vmem:[#allocation3 + $0x18] sm:$0xff]
        %v3873 = vld [vmem:[#allocation3 + $0x20] sm:$0xff]
        %v3874 = vld [vmem:[#allocation3 + $0x28] sm:$0xff]
        %3881 = vrot.lane.b32.xlu0 %v3869, 2
        %v3882 = vpop.permute.xlu0 %3881
        %3883 = vrot.lane.b32.xlu0 %v3870, 2
        %v3884 = vpop.permute.xlu0 %3883
        %3885 = vrot.lane.b32.xlu0 %v3871, 2
        %v3886 = vpop.permute.xlu0 %3885
        %3887 = vrot.lane.b32.xlu0 %v3872, 2
        %v3888 = vpop.permute.xlu0 %3887
        %3889 = vrot.lane.b32.xlu0 %v3873, 2
        %v3890 = vpop.permute.xlu0 %3889
        %3891 = vrot.lane.b32.xlu0 %v3874, 2
        %v3892 = vpop.permute.xlu0 %3891
        %vm3893 = vcmask 15360
        %v3894 = vsel %vm3893, %v3882, %v3884
        %v3895 = vsel %vm3893, %v3884, %v3886
        %v3896 = vsel %vm3893, %v3886, %v3888
        %v3897 = vsel %vm3893, %v3888, %v3890
        %v3898 = vsel %vm3893, %v3890, %v3892
        %3904 = vst [vmem:[#allocation2 + $0xd8] sm:$0xff] %v3894
        %3905 = vst [vmem:[#allocation2 + $0xe0] sm:$0xff] %v3895
        %3906 = vst [vmem:[#allocation2 + $0xe8] sm:$0xff] %v3896
        %3907 = vst [vmem:[#allocation2 + $0xf0] sm:$0xff] %v3897
        %3908 = vst [vmem:[#allocation2 + $0xf8] sm:$0xff] %v3898
        %v3909 = vld [vmem:[#allocation3 + $0x8] sm:$0xff]
        %v3910 = vld [vmem:[#allocation3 + $0x10] sm:$0xff]
        %v3911 = vld [vmem:[#allocation3 + $0x18] sm:$0xff]
        %v3912 = vld [vmem:[#allocation3 + $0x20] sm:$0xff]
        %v3913 = vld [vmem:[#allocation3 + $0x28] sm:$0xff]
        %3914 = vst [vmem:[#allocation2 + $0x120] sm:$0xff] %v3909
        %3915 = vst [vmem:[#allocation2 + $0x128] sm:$0xff] %v3910
        %3916 = vst [vmem:[#allocation2 + $0x130] sm:$0xff] %v3911
        %3917 = vst [vmem:[#allocation2 + $0x138] sm:$0xff] %v3912
        %3918 = vst [vmem:[#allocation2 + $0x140] sm:$0xff] %v3913
        %v3919 = vld [vmem:[#allocation3 + $0x8] sm:$0xff]
        %v3920 = vld [vmem:[#allocation3 + $0x10] sm:$0xff]
        %v3921 = vld [vmem:[#allocation3 + $0x18] sm:$0xff]
        %v3922 = vld [vmem:[#allocation3 + $0x20] sm:$0xff]
        %v3923 = vld [vmem:[#allocation3 + $0x28] sm:$0xff]
        %v3924 = vld [vmem:[#allocation3 + $0x30] sm:$0xff]
        %3931 = vrot.lane.b32.xlu0 %v3919, 126
        %v3932 = vpop.permute.xlu0 %3931
        %3933 = vrot.lane.b32.xlu0 %v3920, 126
        %v3934 = vpop.permute.xlu0 %3933
        %3935 = vrot.lane.b32.xlu0 %v3921, 126
        %v3936 = vpop.permute.xlu0 %3935
        %3937 = vrot.lane.b32.xlu0 %v3922, 126
        %v3938 = vpop.permute.xlu0 %3937
        %3939 = vrot.lane.b32.xlu0 %v3923, 126
        %v3940 = vpop.permute.xlu0 %3939
        %3941 = vrot.lane.b32.xlu0 %v3924, 126
        %v3942 = vpop.permute.xlu0 %3941
        %v3943 = vsel %vm456, %v3932, %v3934
        %v3944 = vsel %vm456, %v3934, %v3936
        %v3945 = vsel %vm456, %v3936, %v3938
        %v3946 = vsel %vm456, %v3938, %v3940
        %v3947 = vsel %vm456, %v3940, %v3942
        %3953 = vst [vmem:[#allocation2 + $0x168] sm:$0xff] %v3943
        %3954 = vst [vmem:[#allocation2 + $0x170] sm:$0xff] %v3944
        %3955 = vst [vmem:[#allocation2 + $0x178] sm:$0xff] %v3945
        %3956 = vst [vmem:[#allocation2 + $0x180] sm:$0xff] %v3946
        %3957 = vst [vmem:[#allocation2 + $0x188] sm:$0xff] %v3947
        %v3958 = vld [vmem:[#allocation3 + $0x8] sm:$0xff]
        %v3959 = vld [vmem:[#allocation3 + $0x10] sm:$0xff]
        %v3960 = vld [vmem:[#allocation3 + $0x18] sm:$0xff]
        %v3961 = vld [vmem:[#allocation3 + $0x20] sm:$0xff]
        %v3962 = vld [vmem:[#allocation3 + $0x28] sm:$0xff]
        %v3963 = vld [vmem:[#allocation3 + $0x30] sm:$0xff]
        %3970 = vrot.lane.b32.xlu0 %v3958, 106
        %v3971 = vpop.permute.xlu0 %3970
        %3972 = vrot.lane.b32.xlu0 %v3959, 106
        %v3973 = vpop.permute.xlu0 %3972
        %3974 = vrot.lane.b32.xlu0 %v3960, 106
        %v3975 = vpop.permute.xlu0 %3974
        %3976 = vrot.lane.b32.xlu0 %v3961, 106
        %v3977 = vpop.permute.xlu0 %3976
        %3978 = vrot.lane.b32.xlu0 %v3962, 106
        %v3979 = vpop.permute.xlu0 %3978
        %3980 = vrot.lane.b32.xlu0 %v3963, 106
        %v3981 = vpop.permute.xlu0 %3980
        %vm3982 = vcmask 867328
        %v3983 = vsel %vm3982, %v3971, %v3973
        %v3984 = vsel %vm3982, %v3973, %v3975
        %v3985 = vsel %vm3982, %v3975, %v3977
        %v3986 = vsel %vm3982, %v3977, %v3979
        %v3987 = vsel %vm3982, %v3979, %v3981
        %3993 = vst [vmem:[#allocation2 + $0x1b0] sm:$0xff] %v3983
        %3994 = vst [vmem:[#allocation2 + $0x1b8] sm:$0xff] %v3984
        %3995 = vst [vmem:[#allocation2 + $0x1c0] sm:$0xff] %v3985
        %3996 = vst [vmem:[#allocation2 + $0x1c8] sm:$0xff] %v3986
        %3997 = vst [vmem:[#allocation2 + $0x1d0] sm:$0xff] %v3987
        %v3998 = vld [vmem:[#allocation3 + $0x8] sm:$0xff]
        %v3999 = vld [vmem:[#allocation3 + $0x10] sm:$0xff]
        %v4000 = vld [vmem:[#allocation3 + $0x18] sm:$0xff]
        %v4001 = vld [vmem:[#allocation3 + $0x20] sm:$0xff]
        %v4002 = vld [vmem:[#allocation3 + $0x28] sm:$0xff]
        %v4003 = vld [vmem:[#allocation3 + $0x30] sm:$0xff]
        %4010 = vrot.lane.b32.xlu0 %v3998, 104
        %v4011 = vpop.permute.xlu0 %4010
        %4012 = vrot.lane.b32.xlu0 %v3999, 104
        %v4013 = vpop.permute.xlu0 %4012
        %4014 = vrot.lane.b32.xlu0 %v4000, 104
        %v4015 = vpop.permute.xlu0 %4014
        %4016 = vrot.lane.b32.xlu0 %v4001, 104
        %v4017 = vpop.permute.xlu0 %4016
        %4018 = vrot.lane.b32.xlu0 %v4002, 104
        %v4019 = vpop.permute.xlu0 %4018
        %4020 = vrot.lane.b32.xlu0 %v4003, 104
        %v4021 = vpop.permute.xlu0 %4020
        %v4022 = vsel %vm652, %v4011, %v4013
        %v4023 = vsel %vm652, %v4013, %v4015
        %v4024 = vsel %vm652, %v4015, %v4017
        %v4025 = vsel %vm652, %v4017, %v4019
        %v4026 = vsel %vm652, %v4019, %v4021
        %4032 = vst [vmem:[#allocation2 + $0x1f8] sm:$0xff] %v4022
        %4033 = vst [vmem:[#allocation2 + $0x200] sm:$0xff] %v4023
        %4034 = vst [vmem:[#allocation2 + $0x208] sm:$0xff] %v4024
        %4035 = vst [vmem:[#allocation2 + $0x210] sm:$0xff] %v4025
        %4036 = vst [vmem:[#allocation2 + $0x218] sm:$0xff] %v4026
        %v4037 = vld [vmem:[#allocation3 + $0x8] sm:$0xff]
        %v4038 = vld [vmem:[#allocation3 + $0x10] sm:$0xff]
        %v4039 = vld [vmem:[#allocation3 + $0x18] sm:$0xff]
        %v4040 = vld [vmem:[#allocation3 + $0x20] sm:$0xff]
        %v4041 = vld [vmem:[#allocation3 + $0x28] sm:$0xff]
        %v4042 = vld [vmem:[#allocation3 + $0x30] sm:$0xff]
        %4049 = vrot.lane.b32.xlu0 %v4037, 102
        %v4050 = vpop.permute.xlu0 %4049
        %4051 = vrot.lane.b32.xlu0 %v4038, 102
        %v4052 = vpop.permute.xlu0 %4051
        %4053 = vrot.lane.b32.xlu0 %v4039, 102
        %v4054 = vpop.permute.xlu0 %4053
        %4055 = vrot.lane.b32.xlu0 %v4040, 102
        %v4056 = vpop.permute.xlu0 %4055
        %4057 = vrot.lane.b32.xlu0 %v4041, 102
        %v4058 = vpop.permute.xlu0 %4057
        %4059 = vrot.lane.b32.xlu0 %v4042, 102
        %v4060 = vpop.permute.xlu0 %4059
        %v4061 = vsel %vm750, %v4050, %v4052
        %v4062 = vsel %vm750, %v4052, %v4054
        %v4063 = vsel %vm750, %v4054, %v4056
        %v4064 = vsel %vm750, %v4056, %v4058
        %v4065 = vsel %vm750, %v4058, %v4060
        %4071 = vst [vmem:[#allocation2 + $0x240] sm:$0xff] %v4061
        %4072 = vst [vmem:[#allocation2 + $0x248] sm:$0xff] %v4062
        %4073 = vst [vmem:[#allocation2 + $0x250] sm:$0xff] %v4063
        %4074 = vst [vmem:[#allocation2 + $0x258] sm:$0xff] %v4064
        %4075 = vst [vmem:[#allocation2 + $0x260] sm:$0xff] %v4065
        %v4076 = vld [vmem:[#allocation3 + $0x18] sm:$0xff]
        %v4077 = vld [vmem:[#allocation3 + $0x20] sm:$0xff]
        %v4078 = vld [vmem:[#allocation3 + $0x28] sm:$0xff]
        %v4079 = vld [vmem:[#allocation3 + $0x30] sm:$0xff]
        %v4080 = vld [vmem:[#allocation3 + $0x38] sm:$0xff]
        %v4081 = vld [vmem:[#allocation3 + $0x40] sm:$0xff]
        %4088 = vrot.lane.b32.xlu0 %v4076, 122
        %v4089 = vpop.permute.xlu0 %4088
        %4090 = vrot.lane.b32.xlu0 %v4077, 122
        %v4091 = vpop.permute.xlu0 %4090
        %4092 = vrot.lane.b32.xlu0 %v4078, 122
        %v4093 = vpop.permute.xlu0 %4092
        %4094 = vrot.lane.b32.xlu0 %v4079, 122
        %v4095 = vpop.permute.xlu0 %4094
        %4096 = vrot.lane.b32.xlu0 %v4080, 122
        %v4097 = vpop.permute.xlu0 %4096
        %4098 = vrot.lane.b32.xlu0 %v4081, 122
        %v4099 = vpop.permute.xlu0 %4098
        %vm4100 = vcmask 998400
        %v4101 = vsel %vm4100, %v4089, %v4091
        %v4102 = vsel %vm4100, %v4091, %v4093
        %v4103 = vsel %vm4100, %v4093, %v4095
        %v4104 = vsel %vm4100, %v4095, %v4097
        %v4105 = vsel %vm4100, %v4097, %v4099
        %4111 = vst [vmem:[#allocation2 + $0x288] sm:$0xff] %v4101
        %4112 = vst [vmem:[#allocation2 + $0x290] sm:$0xff] %v4102
        %4113 = vst [vmem:[#allocation2 + $0x298] sm:$0xff] %v4103
        %4114 = vst [vmem:[#allocation2 + $0x2a0] sm:$0xff] %v4104
        %4115 = vst [vmem:[#allocation2 + $0x2a8] sm:$0xff] %v4105
        %v4116 = vld [vmem:[#allocation3 + $0x18] sm:$0xff]
        %v4117 = vld [vmem:[#allocation3 + $0x20] sm:$0xff]
        %v4118 = vld [vmem:[#allocation3 + $0x28] sm:$0xff]
        %v4119 = vld [vmem:[#allocation3 + $0x30] sm:$0xff]
        %v4120 = vld [vmem:[#allocation3 + $0x38] sm:$0xff]
        %v4121 = vld [vmem:[#allocation3 + $0x40] sm:$0xff]
        %4128 = vrot.lane.b32.xlu0 %v4116, 120
        %v4129 = vpop.permute.xlu0 %4128
        %4130 = vrot.lane.b32.xlu0 %v4117, 120
        %v4131 = vpop.permute.xlu0 %4130
        %4132 = vrot.lane.b32.xlu0 %v4118, 120
        %v4133 = vpop.permute.xlu0 %4132
        %4134 = vrot.lane.b32.xlu0 %v4119, 120
        %v4135 = vpop.permute.xlu0 %4134
        %4136 = vrot.lane.b32.xlu0 %v4120, 120
        %v4137 = vpop.permute.xlu0 %4136
        %4138 = vrot.lane.b32.xlu0 %v4121, 120
        %v4139 = vpop.permute.xlu0 %4138
        %vm4140 = vcmask 982016
        %v4141 = vsel %vm4140, %v4129, %v4131
        %v4142 = vsel %vm4140, %v4131, %v4133
        %v4143 = vsel %vm4140, %v4133, %v4135
        %v4144 = vsel %vm4140, %v4135, %v4137
        %v4145 = vsel %vm4140, %v4137, %v4139
        %4151 = vst [vmem:[#allocation2 + $0x2d0] sm:$0xff] %v4141
        %4152 = vst [vmem:[#allocation2 + $0x2d8] sm:$0xff] %v4142
        %4153 = vst [vmem:[#allocation2 + $0x2e0] sm:$0xff] %v4143
        %4154 = vst [vmem:[#allocation2 + $0x2e8] sm:$0xff] %v4144
        %4155 = vst [vmem:[#allocation2 + $0x2f0] sm:$0xff] %v4145
        %v4156 = vld [vmem:[#allocation3 + $0x18] sm:$0xff]
        %v4157 = vld [vmem:[#allocation3 + $0x20] sm:$0xff]
        %v4158 = vld [vmem:[#allocation3 + $0x28] sm:$0xff]
        %v4159 = vld [vmem:[#allocation3 + $0x30] sm:$0xff]
        %v4160 = vld [vmem:[#allocation3 + $0x38] sm:$0xff]
        %v4161 = vld [vmem:[#allocation3 + $0x40] sm:$0xff]
        %4168 = vrot.lane.b32.xlu0 %v4156, 118
        %v4169 = vpop.permute.xlu0 %4168
        %4170 = vrot.lane.b32.xlu0 %v4157, 118
        %v4171 = vpop.permute.xlu0 %4170
        %4172 = vrot.lane.b32.xlu0 %v4158, 118
        %v4173 = vpop.permute.xlu0 %4172
        %4174 = vrot.lane.b32.xlu0 %v4159, 118
        %v4175 = vpop.permute.xlu0 %4174
        %4176 = vrot.lane.b32.xlu0 %v4160, 118
        %v4177 = vpop.permute.xlu0 %4176
        %4178 = vrot.lane.b32.xlu0 %v4161, 118
        %v4179 = vpop.permute.xlu0 %4178
        %vm4180 = vcmask 965632
        %v4181 = vsel %vm4180, %v4169, %v4171
        %v4182 = vsel %vm4180, %v4171, %v4173
        %v4183 = vsel %vm4180, %v4173, %v4175
        %v4184 = vsel %vm4180, %v4175, %v4177
        %v4185 = vsel %vm4180, %v4177, %v4179
        %4191 = vst [vmem:[#allocation2 + $0x318] sm:$0xff] %v4181
        %4192 = vst [vmem:[#allocation2 + $0x320] sm:$0xff] %v4182
        %4193 = vst [vmem:[#allocation2 + $0x328] sm:$0xff] %v4183
        %4194 = vst [vmem:[#allocation2 + $0x330] sm:$0xff] %v4184
        %4195 = vst [vmem:[#allocation2 + $0x338] sm:$0xff] %v4185
        %v4196 = vld [vmem:[#allocation3 + $0x18] sm:$0xff]
        %v4197 = vld [vmem:[#allocation3 + $0x20] sm:$0xff]
        %v4198 = vld [vmem:[#allocation3 + $0x28] sm:$0xff]
        %v4199 = vld [vmem:[#allocation3 + $0x30] sm:$0xff]
        %v4200 = vld [vmem:[#allocation3 + $0x38] sm:$0xff]
        %v4201 = vld [vmem:[#allocation3 + $0x40] sm:$0xff]
        %4208 = vrot.lane.b32.xlu0 %v4196, 98
        %v4209 = vpop.permute.xlu0 %4208
        %4210 = vrot.lane.b32.xlu0 %v4197, 98
        %v4211 = vpop.permute.xlu0 %4210
        %4212 = vrot.lane.b32.xlu0 %v4198, 98
        %v4213 = vpop.permute.xlu0 %4212
        %4214 = vrot.lane.b32.xlu0 %v4199, 98
        %v4215 = vpop.permute.xlu0 %4214
        %4216 = vrot.lane.b32.xlu0 %v4200, 98
        %v4217 = vpop.permute.xlu0 %4216
        %4218 = vrot.lane.b32.xlu0 %v4201, 98
        %v4219 = vpop.permute.xlu0 %4218
        %vm4220 = vcmask 801792
        %v4221 = vsel %vm4220, %v4209, %v4211
        %v4222 = vsel %vm4220, %v4211, %v4213
        %v4223 = vsel %vm4220, %v4213, %v4215
        %v4224 = vsel %vm4220, %v4215, %v4217
        %v4225 = vsel %vm4220, %v4217, %v4219
        %4231 = vst [vmem:[#allocation2 + $0x360] sm:$0xff] %v4221
        %4232 = vst [vmem:[#allocation2 + $0x368] sm:$0xff] %v4222
        %4233 = vst [vmem:[#allocation2 + $0x370] sm:$0xff] %v4223
        %4234 = vst [vmem:[#allocation2 + $0x378] sm:$0xff] %v4224
        %4235 = vst [vmem:[#allocation2 + $0x380] sm:$0xff] %v4225
        %v4236 = vld [vmem:[#allocation3 + $0x18] sm:$0xff]
        %v4237 = vld [vmem:[#allocation3 + $0x20] sm:$0xff]
        %v4238 = vld [vmem:[#allocation3 + $0x28] sm:$0xff]
        %v4239 = vld [vmem:[#allocation3 + $0x30] sm:$0xff]
        %v4240 = vld [vmem:[#allocation3 + $0x38] sm:$0xff]
        %v4241 = vld [vmem:[#allocation3 + $0x40] sm:$0xff]
        %4248 = vrot.lane.b32.xlu0 %v4236, 96
        %v4249 = vpop.permute.xlu0 %4248
        %4250 = vrot.lane.b32.xlu0 %v4237, 96
        %v4251 = vpop.permute.xlu0 %4250
        %4252 = vrot.lane.b32.xlu0 %v4238, 96
        %v4253 = vpop.permute.xlu0 %4252
        %4254 = vrot.lane.b32.xlu0 %v4239, 96
        %v4255 = vpop.permute.xlu0 %4254
        %4256 = vrot.lane.b32.xlu0 %v4240, 96
        %v4257 = vpop.permute.xlu0 %4256
        %4258 = vrot.lane.b32.xlu0 %v4241, 96
        %v4259 = vpop.permute.xlu0 %4258
        %v4260 = vsel %vm1240, %v4249, %v4251
        %v4261 = vsel %vm1240, %v4251, %v4253
        %v4262 = vsel %vm1240, %v4253, %v4255
        %v4263 = vsel %vm1240, %v4255, %v4257
        %v4264 = vsel %vm1240, %v4257, %v4259
        %4270 = vst [vmem:[#allocation2 + $0x3a8] sm:$0xff] %v4260
        %4271 = vst [vmem:[#allocation2 + $0x3b0] sm:$0xff] %v4261
        %4272 = vst [vmem:[#allocation2 + $0x3b8] sm:$0xff] %v4262
        %4273 = vst [vmem:[#allocation2 + $0x3c0] sm:$0xff] %v4263
        %4274 = vst [vmem:[#allocation2 + $0x3c8] sm:$0xff] %v4264
        %v4275 = vld [vmem:[#allocation3 + $0x18] sm:$0xff]
        %v4276 = vld [vmem:[#allocation3 + $0x20] sm:$0xff]
        %v4277 = vld [vmem:[#allocation3 + $0x28] sm:$0xff]
        %v4278 = vld [vmem:[#allocation3 + $0x30] sm:$0xff]
        %v4279 = vld [vmem:[#allocation3 + $0x38] sm:$0xff]
        %v4280 = vld [vmem:[#allocation3 + $0x40] sm:$0xff]
        %4287 = vrot.lane.b32.xlu0 %v4275, 94
        %v4288 = vpop.permute.xlu0 %4287
        %4289 = vrot.lane.b32.xlu0 %v4276, 94
        %v4290 = vpop.permute.xlu0 %4289
        %4291 = vrot.lane.b32.xlu0 %v4277, 94
        %v4292 = vpop.permute.xlu0 %4291
        %4293 = vrot.lane.b32.xlu0 %v4278, 94
        %v4294 = vpop.permute.xlu0 %4293
        %4295 = vrot.lane.b32.xlu0 %v4279, 94
        %v4296 = vpop.permute.xlu0 %4295
        %4297 = vrot.lane.b32.xlu0 %v4280, 94
        %v4298 = vpop.permute.xlu0 %4297
        %v4299 = vsel %vm1338, %v4288, %v4290
        %v4300 = vsel %vm1338, %v4290, %v4292
        %v4301 = vsel %vm1338, %v4292, %v4294
        %v4302 = vsel %vm1338, %v4294, %v4296
        %v4303 = vsel %vm1338, %v4296, %v4298
        %4309 = vst [vmem:[#allocation2 + $0x3f0] sm:$0xff] %v4299
        %4310 = vst [vmem:[#allocation2 + $0x3f8] sm:$0xff] %v4300
        %4311 = vst [vmem:[#allocation2 + $0x400] sm:$0xff] %v4301
        %4312 = vst [vmem:[#allocation2 + $0x408] sm:$0xff] %v4302
        %4313 = vst [vmem:[#allocation2 + $0x410] sm:$0xff] %v4303
        %v4314 = vld [vmem:[#allocation3 + $0x18] sm:$0xff]
        %v4315 = vld [vmem:[#allocation3 + $0x20] sm:$0xff]
        %v4316 = vld [vmem:[#allocation3 + $0x28] sm:$0xff]
        %v4317 = vld [vmem:[#allocation3 + $0x30] sm:$0xff]
        %v4318 = vld [vmem:[#allocation3 + $0x38] sm:$0xff]
        %v4319 = vld [vmem:[#allocation3 + $0x40] sm:$0xff]
        %4326 = vrot.lane.b32.xlu0 %v4314, 74
        %v4327 = vpop.permute.xlu0 %4326
        %4328 = vrot.lane.b32.xlu0 %v4315, 74
        %v4329 = vpop.permute.xlu0 %4328
        %4330 = vrot.lane.b32.xlu0 %v4316, 74
        %v4331 = vpop.permute.xlu0 %4330
        %4332 = vrot.lane.b32.xlu0 %v4317, 74
        %v4333 = vpop.permute.xlu0 %4332
        %4334 = vrot.lane.b32.xlu0 %v4318, 74
        %v4335 = vpop.permute.xlu0 %4334
        %4336 = vrot.lane.b32.xlu0 %v4319, 74
        %v4337 = vpop.permute.xlu0 %4336
        %vm4338 = vcmask 605184
        %v4339 = vsel %vm4338, %v4327, %v4329
        %v4340 = vsel %vm4338, %v4329, %v4331
        %v4341 = vsel %vm4338, %v4331, %v4333
        %v4342 = vsel %vm4338, %v4333, %v4335
        %v4343 = vsel %vm4338, %v4335, %v4337
        %4349 = vst [vmem:[#allocation2 + $0x438] sm:$0xff] %v4339
        %4350 = vst [vmem:[#allocation2 + $0x440] sm:$0xff] %v4340
        %4351 = vst [vmem:[#allocation2 + $0x448] sm:$0xff] %v4341
        %4352 = vst [vmem:[#allocation2 + $0x450] sm:$0xff] %v4342
        %4353 = vst [vmem:[#allocation2 + $0x458] sm:$0xff] %v4343
        %v4354 = vld [vmem:[#allocation3 + $0x18] sm:$0xff]
        %v4355 = vld [vmem:[#allocation3 + $0x20] sm:$0xff]
        %v4356 = vld [vmem:[#allocation3 + $0x28] sm:$0xff]
        %v4357 = vld [vmem:[#allocation3 + $0x30] sm:$0xff]
        %v4358 = vld [vmem:[#allocation3 + $0x38] sm:$0xff]
        %v4359 = vld [vmem:[#allocation3 + $0x40] sm:$0xff]
        %4366 = vrot.lane.b32.xlu0 %v4354, 72
        %v4367 = vpop.permute.xlu0 %4366
        %4368 = vrot.lane.b32.xlu0 %v4355, 72
        %v4369 = vpop.permute.xlu0 %4368
        %4370 = vrot.lane.b32.xlu0 %v4356, 72
        %v4371 = vpop.permute.xlu0 %4370
        %4372 = vrot.lane.b32.xlu0 %v4357, 72
        %v4373 = vpop.permute.xlu0 %4372
        %4374 = vrot.lane.b32.xlu0 %v4358, 72
        %v4375 = vpop.permute.xlu0 %4374
        %4376 = vrot.lane.b32.xlu0 %v4359, 72
        %v4377 = vpop.permute.xlu0 %4376
        %v4378 = vsel %vm1534, %v4367, %v4369
        %v4379 = vsel %vm1534, %v4369, %v4371
        %v4380 = vsel %vm1534, %v4371, %v4373
        %v4381 = vsel %vm1534, %v4373, %v4375
        %v4382 = vsel %vm1534, %v4375, %v4377
        %4388 = vst [vmem:[#allocation2 + $0x480] sm:$0xff] %v4378
        %4389 = vst [vmem:[#allocation2 + $0x488] sm:$0xff] %v4379
        %4390 = vst [vmem:[#allocation2 + $0x490] sm:$0xff] %v4380
        %4391 = vst [vmem:[#allocation2 + $0x498] sm:$0xff] %v4381
        %4392 = vst [vmem:[#allocation2 + $0x4a0] sm:$0xff] %v4382
        %v4393 = vld [vmem:[#allocation3 + $0x18] sm:$0xff]
        %v4394 = vld [vmem:[#allocation3 + $0x20] sm:$0xff]
        %v4395 = vld [vmem:[#allocation3 + $0x28] sm:$0xff]
        %v4396 = vld [vmem:[#allocation3 + $0x30] sm:$0xff]
        %v4397 = vld [vmem:[#allocation3 + $0x38] sm:$0xff]
        %v4398 = vld [vmem:[#allocation3 + $0x40] sm:$0xff]
        %4405 = vrot.lane.b32.xlu0 %v4393, 70
        %v4406 = vpop.permute.xlu0 %4405
        %4407 = vrot.lane.b32.xlu0 %v4394, 70
        %v4408 = vpop.permute.xlu0 %4407
        %4409 = vrot.lane.b32.xlu0 %v4395, 70
        %v4410 = vpop.permute.xlu0 %4409
        %4411 = vrot.lane.b32.xlu0 %v4396, 70
        %v4412 = vpop.permute.xlu0 %4411
        %4413 = vrot.lane.b32.xlu0 %v4397, 70
        %v4414 = vpop.permute.xlu0 %4413
        %4415 = vrot.lane.b32.xlu0 %v4398, 70
        %v4416 = vpop.permute.xlu0 %4415
        %v4417 = vsel %vm1632, %v4406, %v4408
        %v4418 = vsel %vm1632, %v4408, %v4410
        %v4419 = vsel %vm1632, %v4410, %v4412
        %v4420 = vsel %vm1632, %v4412, %v4414
        %v4421 = vsel %vm1632, %v4414, %v4416
        %4427 = vst [vmem:[#allocation2 + $0x4c8] sm:$0xff] %v4417
        %4428 = vst [vmem:[#allocation2 + $0x4d0] sm:$0xff] %v4418
        %4429 = vst [vmem:[#allocation2 + $0x4d8] sm:$0xff] %v4419
        %4430 = vst [vmem:[#allocation2 + $0x4e0] sm:$0xff] %v4420
        %4431 = vst [vmem:[#allocation2 + $0x4e8] sm:$0xff] %v4421
        %v4432 = vld [vmem:[#allocation3 + $0x28] sm:$0xff]
        %v4433 = vld [vmem:[#allocation3 + $0x30] sm:$0xff]
        %v4434 = vld [vmem:[#allocation3 + $0x38] sm:$0xff]
        %v4435 = vld [vmem:[#allocation3 + $0x40] sm:$0xff]
        %v4436 = vld [vmem:[#allocation3 + $0x48] sm:$0xff]
        %v4437 = vld [vmem:[#allocation3 + $0x50] sm:$0xff]
        %4444 = vrot.lane.b32.xlu0 %v4432, 90
        %v4445 = vpop.permute.xlu0 %4444
        %4446 = vrot.lane.b32.xlu0 %v4433, 90
        %v4447 = vpop.permute.xlu0 %4446
        %4448 = vrot.lane.b32.xlu0 %v4434, 90
        %v4449 = vpop.permute.xlu0 %4448
        %4450 = vrot.lane.b32.xlu0 %v4435, 90
        %v4451 = vpop.permute.xlu0 %4450
        %4452 = vrot.lane.b32.xlu0 %v4436, 90
        %v4453 = vpop.permute.xlu0 %4452
        %4454 = vrot.lane.b32.xlu0 %v4437, 90
        %v4455 = vpop.permute.xlu0 %4454
        %vm4456 = vcmask 736256
        %v4457 = vsel %vm4456, %v4445, %v4447
        %v4458 = vsel %vm4456, %v4447, %v4449
        %v4459 = vsel %vm4456, %v4449, %v4451
        %v4460 = vsel %vm4456, %v4451, %v4453
        %v4461 = vsel %vm4456, %v4453, %v4455
        %4467 = vst [vmem:[#allocation2 + $0x510] sm:$0xff] %v4457
        %4468 = vst [vmem:[#allocation2 + $0x518] sm:$0xff] %v4458
        %4469 = vst [vmem:[#allocation2 + $0x520] sm:$0xff] %v4459
        %4470 = vst [vmem:[#allocation2 + $0x528] sm:$0xff] %v4460
        %4471 = vst [vmem:[#allocation2 + $0x530] sm:$0xff] %v4461
        %v4472 = vld [vmem:[#allocation3 + $0x28] sm:$0xff]
        %v4473 = vld [vmem:[#allocation3 + $0x30] sm:$0xff]
        %v4474 = vld [vmem:[#allocation3 + $0x38] sm:$0xff]
        %v4475 = vld [vmem:[#allocation3 + $0x40] sm:$0xff]
        %v4476 = vld [vmem:[#allocation3 + $0x48] sm:$0xff]
        %v4477 = vld [vmem:[#allocation3 + $0x50] sm:$0xff]
        %4484 = vrot.lane.b32.xlu0 %v4472, 88
        %v4485 = vpop.permute.xlu0 %4484
        %4486 = vrot.lane.b32.xlu0 %v4473, 88
        %v4487 = vpop.permute.xlu0 %4486
        %4488 = vrot.lane.b32.xlu0 %v4474, 88
        %v4489 = vpop.permute.xlu0 %4488
        %4490 = vrot.lane.b32.xlu0 %v4475, 88
        %v4491 = vpop.permute.xlu0 %4490
        %4492 = vrot.lane.b32.xlu0 %v4476, 88
        %v4493 = vpop.permute.xlu0 %4492
        %4494 = vrot.lane.b32.xlu0 %v4477, 88
        %v4495 = vpop.permute.xlu0 %4494
        %vm4496 = vcmask 719872
        %v4497 = vsel %vm4496, %v4485, %v4487
        %v4498 = vsel %vm4496, %v4487, %v4489
        %v4499 = vsel %vm4496, %v4489, %v4491
        %v4500 = vsel %vm4496, %v4491, %v4493
        %v4501 = vsel %vm4496, %v4493, %v4495
        %4507 = vst [vmem:[#allocation2 + $0x558] sm:$0xff] %v4497
        %4508 = vst [vmem:[#allocation2 + $0x560] sm:$0xff] %v4498
        %4509 = vst [vmem:[#allocation2 + $0x568] sm:$0xff] %v4499
        %4510 = vst [vmem:[#allocation2 + $0x570] sm:$0xff] %v4500
        %4511 = vst [vmem:[#allocation2 + $0x578] sm:$0xff] %v4501
        %v4512 = vld [vmem:[#allocation3 + $0x28] sm:$0xff]
        %v4513 = vld [vmem:[#allocation3 + $0x30] sm:$0xff]
        %v4514 = vld [vmem:[#allocation3 + $0x38] sm:$0xff]
        %v4515 = vld [vmem:[#allocation3 + $0x40] sm:$0xff]
        %v4516 = vld [vmem:[#allocation3 + $0x48] sm:$0xff]
        %v4517 = vld [vmem:[#allocation3 + $0x50] sm:$0xff]
        %4524 = vrot.lane.b32.xlu0 %v4512, 86
        %v4525 = vpop.permute.xlu0 %4524
        %4526 = vrot.lane.b32.xlu0 %v4513, 86
        %v4527 = vpop.permute.xlu0 %4526
        %4528 = vrot.lane.b32.xlu0 %v4514, 86
        %v4529 = vpop.permute.xlu0 %4528
        %4530 = vrot.lane.b32.xlu0 %v4515, 86
        %v4531 = vpop.permute.xlu0 %4530
        %4532 = vrot.lane.b32.xlu0 %v4516, 86
        %v4533 = vpop.permute.xlu0 %4532
        %4534 = vrot.lane.b32.xlu0 %v4517, 86
        %v4535 = vpop.permute.xlu0 %4534
        %vm4536 = vcmask 703488
        %v4537 = vsel %vm4536, %v4525, %v4527
        %v4538 = vsel %vm4536, %v4527, %v4529
        %v4539 = vsel %vm4536, %v4529, %v4531
        %v4540 = vsel %vm4536, %v4531, %v4533
        %v4541 = vsel %vm4536, %v4533, %v4535
        %4547 = vst [vmem:[#allocation2 + $0x5a0] sm:$0xff] %v4537
        %4548 = vst [vmem:[#allocation2 + $0x5a8] sm:$0xff] %v4538
        %4549 = vst [vmem:[#allocation2 + $0x5b0] sm:$0xff] %v4539
        %4550 = vst [vmem:[#allocation2 + $0x5b8] sm:$0xff] %v4540
        %4551 = vst [vmem:[#allocation2 + $0x5c0] sm:$0xff] %v4541
        %v4552 = vld [vmem:[#allocation3 + $0x28] sm:$0xff]
        %v4553 = vld [vmem:[#allocation3 + $0x30] sm:$0xff]
        %v4554 = vld [vmem:[#allocation3 + $0x38] sm:$0xff]
        %v4555 = vld [vmem:[#allocation3 + $0x40] sm:$0xff]
        %v4556 = vld [vmem:[#allocation3 + $0x48] sm:$0xff]
        %v4557 = vld [vmem:[#allocation3 + $0x50] sm:$0xff]
        %4564 = vrot.lane.b32.xlu0 %v4552, 66
        %v4565 = vpop.permute.xlu0 %4564
        %4566 = vrot.lane.b32.xlu0 %v4553, 66
        %v4567 = vpop.permute.xlu0 %4566
        %4568 = vrot.lane.b32.xlu0 %v4554, 66
        %v4569 = vpop.permute.xlu0 %4568
        %4570 = vrot.lane.b32.xlu0 %v4555, 66
        %v4571 = vpop.permute.xlu0 %4570
        %4572 = vrot.lane.b32.xlu0 %v4556, 66
        %v4573 = vpop.permute.xlu0 %4572
        %4574 = vrot.lane.b32.xlu0 %v4557, 66
        %v4575 = vpop.permute.xlu0 %4574
        %vm4576 = vcmask 539648
        %v4577 = vsel %vm4576, %v4565, %v4567
        %v4578 = vsel %vm4576, %v4567, %v4569
        %v4579 = vsel %vm4576, %v4569, %v4571
        %v4580 = vsel %vm4576, %v4571, %v4573
        %v4581 = vsel %vm4576, %v4573, %v4575
        %4587 = vst [vmem:[#allocation2 + $0x5e8] sm:$0xff] %v4577
        %4588 = vst [vmem:[#allocation2 + $0x5f0] sm:$0xff] %v4578
        %4589 = vst [vmem:[#allocation2 + $0x5f8] sm:$0xff] %v4579
        %4590 = vst [vmem:[#allocation2 + $0x600] sm:$0xff] %v4580
        %4591 = vst [vmem:[#allocation2 + $0x608] sm:$0xff] %v4581
        %v4592 = vld [vmem:[#allocation3 + $0x28] sm:$0xff]
        %v4593 = vld [vmem:[#allocation3 + $0x30] sm:$0xff]
        %v4594 = vld [vmem:[#allocation3 + $0x38] sm:$0xff]
        %v4595 = vld [vmem:[#allocation3 + $0x40] sm:$0xff]
        %v4596 = vld [vmem:[#allocation3 + $0x48] sm:$0xff]
        %v4597 = vld [vmem:[#allocation3 + $0x50] sm:$0xff]
        %4604 = vrot.lane.b32.xlu0 %v4592, 64
        %v4605 = vpop.permute.xlu0 %4604
        %4606 = vrot.lane.b32.xlu0 %v4593, 64
        %v4607 = vpop.permute.xlu0 %4606
        %4608 = vrot.lane.b32.xlu0 %v4594, 64
        %v4609 = vpop.permute.xlu0 %4608
        %4610 = vrot.lane.b32.xlu0 %v4595, 64
        %v4611 = vpop.permute.xlu0 %4610
        %4612 = vrot.lane.b32.xlu0 %v4596, 64
        %v4613 = vpop.permute.xlu0 %4612
        %4614 = vrot.lane.b32.xlu0 %v4597, 64
        %v4615 = vpop.permute.xlu0 %4614
        %v4616 = vsel %vm2122, %v4605, %v4607
        %v4617 = vsel %vm2122, %v4607, %v4609
        %v4618 = vsel %vm2122, %v4609, %v4611
        %v4619 = vsel %vm2122, %v4611, %v4613
        %v4620 = vsel %vm2122, %v4613, %v4615
        %4626 = vst [vmem:[#allocation2 + $0x630] sm:$0xff] %v4616
        %4627 = vst [vmem:[#allocation2 + $0x638] sm:$0xff] %v4617
        %4628 = vst [vmem:[#allocation2 + $0x640] sm:$0xff] %v4618
        %4629 = vst [vmem:[#allocation2 + $0x648] sm:$0xff] %v4619
        %4630 = vst [vmem:[#allocation2 + $0x650] sm:$0xff] %v4620
        %v4631 = vld [vmem:[#allocation3 + $0x28] sm:$0xff]
        %v4632 = vld [vmem:[#allocation3 + $0x30] sm:$0xff]
        %v4633 = vld [vmem:[#allocation3 + $0x38] sm:$0xff]
        %v4634 = vld [vmem:[#allocation3 + $0x40] sm:$0xff]
        %v4635 = vld [vmem:[#allocation3 + $0x48] sm:$0xff]
        %v4636 = vld [vmem:[#allocation3 + $0x50] sm:$0xff]
        %4643 = vrot.lane.b32.xlu0 %v4631, 62
        %v4644 = vpop.permute.xlu0 %4643
        %4645 = vrot.lane.b32.xlu0 %v4632, 62
        %v4646 = vpop.permute.xlu0 %4645
        %4647 = vrot.lane.b32.xlu0 %v4633, 62
        %v4648 = vpop.permute.xlu0 %4647
        %4649 = vrot.lane.b32.xlu0 %v4634, 62
        %v4650 = vpop.permute.xlu0 %4649
        %4651 = vrot.lane.b32.xlu0 %v4635, 62
        %v4652 = vpop.permute.xlu0 %4651
        %4653 = vrot.lane.b32.xlu0 %v4636, 62
        %v4654 = vpop.permute.xlu0 %4653
        %v4655 = vsel %vm2220, %v4644, %v4646
        %v4656 = vsel %vm2220, %v4646, %v4648
        %v4657 = vsel %vm2220, %v4648, %v4650
        %v4658 = vsel %vm2220, %v4650, %v4652
        %v4659 = vsel %vm2220, %v4652, %v4654
        %4665 = vst [vmem:[#allocation2 + $0x678] sm:$0xff] %v4655
        %4666 = vst [vmem:[#allocation2 + $0x680] sm:$0xff] %v4656
        %4667 = vst [vmem:[#allocation2 + $0x688] sm:$0xff] %v4657
        %4668 = vst [vmem:[#allocation2 + $0x690] sm:$0xff] %v4658
        %4669 = vst [vmem:[#allocation2 + $0x698] sm:$0xff] %v4659
        %v4670 = vld [vmem:[#allocation3 + $0x28] sm:$0xff]
        %v4671 = vld [vmem:[#allocation3 + $0x30] sm:$0xff]
        %v4672 = vld [vmem:[#allocation3 + $0x38] sm:$0xff]
        %v4673 = vld [vmem:[#allocation3 + $0x40] sm:$0xff]
        %v4674 = vld [vmem:[#allocation3 + $0x48] sm:$0xff]
        %v4675 = vld [vmem:[#allocation3 + $0x50] sm:$0xff]
        %4682 = vrot.lane.b32.xlu0 %v4670, 42
        %v4683 = vpop.permute.xlu0 %4682
        %4684 = vrot.lane.b32.xlu0 %v4671, 42
        %v4685 = vpop.permute.xlu0 %4684
        %4686 = vrot.lane.b32.xlu0 %v4672, 42
        %v4687 = vpop.permute.xlu0 %4686
        %4688 = vrot.lane.b32.xlu0 %v4673, 42
        %v4689 = vpop.permute.xlu0 %4688
        %4690 = vrot.lane.b32.xlu0 %v4674, 42
        %v4691 = vpop.permute.xlu0 %4690
        %4692 = vrot.lane.b32.xlu0 %v4675, 42
        %v4693 = vpop.permute.xlu0 %4692
        %vm4694 = vcmask 343040
        %v4695 = vsel %vm4694, %v4683, %v4685
        %v4696 = vsel %vm4694, %v4685, %v4687
        %v4697 = vsel %vm4694, %v4687, %v4689
        %v4698 = vsel %vm4694, %v4689, %v4691
        %v4699 = vsel %vm4694, %v4691, %v4693
        %4705 = vst [vmem:[#allocation2 + $0x6c0] sm:$0xff] %v4695
        %4706 = vst [vmem:[#allocation2 + $0x6c8] sm:$0xff] %v4696
        %4707 = vst [vmem:[#allocation2 + $0x6d0] sm:$0xff] %v4697
        %4708 = vst [vmem:[#allocation2 + $0x6d8] sm:$0xff] %v4698
        %4709 = vst [vmem:[#allocation2 + $0x6e0] sm:$0xff] %v4699
        %v4710 = vld [vmem:[#allocation3 + $0x28] sm:$0xff]
        %v4711 = vld [vmem:[#allocation3 + $0x30] sm:$0xff]
        %v4712 = vld [vmem:[#allocation3 + $0x38] sm:$0xff]
        %v4713 = vld [vmem:[#allocation3 + $0x40] sm:$0xff]
        %v4714 = vld [vmem:[#allocation3 + $0x48] sm:$0xff]
        %v4715 = vld [vmem:[#allocation3 + $0x50] sm:$0xff]
        %4722 = vrot.lane.b32.xlu0 %v4710, 40
        %v4723 = vpop.permute.xlu0 %4722
        %4724 = vrot.lane.b32.xlu0 %v4711, 40
        %v4725 = vpop.permute.xlu0 %4724
        %4726 = vrot.lane.b32.xlu0 %v4712, 40
        %v4727 = vpop.permute.xlu0 %4726
        %4728 = vrot.lane.b32.xlu0 %v4713, 40
        %v4729 = vpop.permute.xlu0 %4728
        %4730 = vrot.lane.b32.xlu0 %v4714, 40
        %v4731 = vpop.permute.xlu0 %4730
        %4732 = vrot.lane.b32.xlu0 %v4715, 40
        %v4733 = vpop.permute.xlu0 %4732
        %v4734 = vsel %vm2416, %v4723, %v4725
        %v4735 = vsel %vm2416, %v4725, %v4727
        %v4736 = vsel %vm2416, %v4727, %v4729
        %v4737 = vsel %vm2416, %v4729, %v4731
        %v4738 = vsel %vm2416, %v4731, %v4733
        %4744 = vst [vmem:[#allocation2 + $0x708] sm:$0xff] %v4734
        %4745 = vst [vmem:[#allocation2 + $0x710] sm:$0xff] %v4735
        %4746 = vst [vmem:[#allocation2 + $0x718] sm:$0xff] %v4736
        %4747 = vst [vmem:[#allocation2 + $0x720] sm:$0xff] %v4737
        %4748 = vst [vmem:[#allocation2 + $0x728] sm:$0xff] %v4738
        %v4749 = vld [vmem:[#allocation3 + $0x28] sm:$0xff]
        %v4750 = vld [vmem:[#allocation3 + $0x30] sm:$0xff]
        %v4751 = vld [vmem:[#allocation3 + $0x38] sm:$0xff]
        %v4752 = vld [vmem:[#allocation3 + $0x40] sm:$0xff]
        %v4753 = vld [vmem:[#allocation3 + $0x48] sm:$0xff]
        %v4754 = vld [vmem:[#allocation3 + $0x50] sm:$0xff]
        %4761 = vrot.lane.b32.xlu0 %v4749, 38
        %v4762 = vpop.permute.xlu0 %4761
        %4763 = vrot.lane.b32.xlu0 %v4750, 38
        %v4764 = vpop.permute.xlu0 %4763
        %4765 = vrot.lane.b32.xlu0 %v4751, 38
        %v4766 = vpop.permute.xlu0 %4765
        %4767 = vrot.lane.b32.xlu0 %v4752, 38
        %v4768 = vpop.permute.xlu0 %4767
        %4769 = vrot.lane.b32.xlu0 %v4753, 38
        %v4770 = vpop.permute.xlu0 %4769
        %4771 = vrot.lane.b32.xlu0 %v4754, 38
        %v4772 = vpop.permute.xlu0 %4771
        %v4773 = vsel %vm2514, %v4762, %v4764
        %v4774 = vsel %vm2514, %v4764, %v4766
        %v4775 = vsel %vm2514, %v4766, %v4768
        %v4776 = vsel %vm2514, %v4768, %v4770
        %v4777 = vsel %vm2514, %v4770, %v4772
        %4783 = vst [vmem:[#allocation2 + $0x750] sm:$0xff] %v4773
        %4784 = vst [vmem:[#allocation2 + $0x758] sm:$0xff] %v4774
        %4785 = vst [vmem:[#allocation2 + $0x760] sm:$0xff] %v4775
        %4786 = vst [vmem:[#allocation2 + $0x768] sm:$0xff] %v4776
        %4787 = vst [vmem:[#allocation2 + $0x770] sm:$0xff] %v4777
        %v4788 = vld [vmem:[#allocation7] sm:$0xff]
        %v4789 = vld [vmem:[#allocation7 + $0x8] sm:$0xff]
        %v4790 = vld [vmem:[#allocation7 + $0x10] sm:$0xff]
        %v4791 = vld [vmem:[#allocation7 + $0x18] sm:$0xff]
        %v4792 = vld [vmem:[#allocation2] sm:$0xff]
        %v4793 = vld [vmem:[#allocation2 + $0x8] sm:$0xff]
        %v4794 = vld [vmem:[#allocation2 + $0x10] sm:$0xff]
        %v4795 = vld [vmem:[#allocation2 + $0x18] sm:$0xff]
        %v4796 = vld [vmem:[#allocation2 + $0x20] sm:$0xff]
        %v4797 = vld [vmem:[#allocation2 + $0x48] sm:$0xff]
        %v4798 = vld [vmem:[#allocation2 + $0x50] sm:$0xff]
        %v4799 = vld [vmem:[#allocation2 + $0x58] sm:$0xff]
        %v4800 = vld [vmem:[#allocation2 + $0x60] sm:$0xff]
        %v4801 = vld [vmem:[#allocation2 + $0x68] sm:$0xff]
        %v4802 = vld [vmem:[#allocation2 + $0x90] sm:$0xff]
        %v4803 = vld [vmem:[#allocation2 + $0x98] sm:$0xff]
        %v4804 = vld [vmem:[#allocation2 + $0xa0] sm:$0xff]
        %v4805 = vld [vmem:[#allocation2 + $0xa8] sm:$0xff]
        %v4806 = vld [vmem:[#allocation2 + $0xb0] sm:$0xff]
        %v4807 = vld [vmem:[#allocation2 + $0xd8] sm:$0xff]
        %v4808 = vld [vmem:[#allocation2 + $0xe0] sm:$0xff]
        %v4809 = vld [vmem:[#allocation2 + $0xe8] sm:$0xff]
        %v4810 = vld [vmem:[#allocation2 + $0xf0] sm:$0xff]
        %v4811 = vld [vmem:[#allocation2 + $0xf8] sm:$0xff]
        %v4812 = vld [vmem:[#allocation2 + $0x120] sm:$0xff]
        %v4813 = vld [vmem:[#allocation2 + $0x128] sm:$0xff]
        %v4814 = vld [vmem:[#allocation2 + $0x130] sm:$0xff]
        %v4815 = vld [vmem:[#allocation2 + $0x138] sm:$0xff]
        %v4816 = vld [vmem:[#allocation2 + $0x140] sm:$0xff]
        %v4817 = vld [vmem:[#allocation2 + $0x168] sm:$0xff]
        %v4818 = vld [vmem:[#allocation2 + $0x170] sm:$0xff]
        %v4819 = vld [vmem:[#allocation2 + $0x178] sm:$0xff]
        %v4820 = vld [vmem:[#allocation2 + $0x180] sm:$0xff]
        %v4821 = vld [vmem:[#allocation2 + $0x188] sm:$0xff]
        %v4822 = vld [vmem:[#allocation2 + $0x1b0] sm:$0xff]
        %v4823 = vld [vmem:[#allocation2 + $0x1b8] sm:$0xff]
        %v4824 = vld [vmem:[#allocation2 + $0x1c0] sm:$0xff]
        %v4825 = vld [vmem:[#allocation2 + $0x1c8] sm:$0xff]
        %v4826 = vld [vmem:[#allocation2 + $0x1d0] sm:$0xff]
        %v4827 = vld [vmem:[#allocation2 + $0x1f8] sm:$0xff]
        %v4828 = vld [vmem:[#allocation2 + $0x200] sm:$0xff]
        %v4829 = vld [vmem:[#allocation2 + $0x208] sm:$0xff]
        %v4830 = vld [vmem:[#allocation2 + $0x210] sm:$0xff]
        %v4831 = vld [vmem:[#allocation2 + $0x218] sm:$0xff]
        %v4832 = vld [vmem:[#allocation2 + $0x240] sm:$0xff]
        %v4833 = vld [vmem:[#allocation2 + $0x248] sm:$0xff]
        %v4834 = vld [vmem:[#allocation2 + $0x250] sm:$0xff]
        %v4835 = vld [vmem:[#allocation2 + $0x258] sm:$0xff]
        %v4836 = vld [vmem:[#allocation2 + $0x260] sm:$0xff]
        %v4837 = vld [vmem:[#allocation2 + $0x288] sm:$0xff]
        %v4838 = vld [vmem:[#allocation2 + $0x290] sm:$0xff]
        %v4839 = vld [vmem:[#allocation2 + $0x298] sm:$0xff]
        %v4840 = vld [vmem:[#allocation2 + $0x2a0] sm:$0xff]
        %v4841 = vld [vmem:[#allocation2 + $0x2a8] sm:$0xff]
        %v4842 = vld [vmem:[#allocation2 + $0x2d0] sm:$0xff]
        %v4843 = vld [vmem:[#allocation2 + $0x2d8] sm:$0xff]
        %v4844 = vld [vmem:[#allocation2 + $0x2e0] sm:$0xff]
        %v4845 = vld [vmem:[#allocation2 + $0x2e8] sm:$0xff]
        %v4846 = vld [vmem:[#allocation2 + $0x2f0] sm:$0xff]
        %v4847 = vld [vmem:[#allocation2 + $0x318] sm:$0xff]
        %v4848 = vld [vmem:[#allocation2 + $0x320] sm:$0xff]
        %v4849 = vld [vmem:[#allocation2 + $0x328] sm:$0xff]
        %v4850 = vld [vmem:[#allocation2 + $0x330] sm:$0xff]
        %v4851 = vld [vmem:[#allocation2 + $0x338] sm:$0xff]
        %v4852 = vld [vmem:[#allocation2 + $0x360] sm:$0xff]
        %v4853 = vld [vmem:[#allocation2 + $0x368] sm:$0xff]
        %v4854 = vld [vmem:[#allocation2 + $0x370] sm:$0xff]
        %v4855 = vld [vmem:[#allocation2 + $0x378] sm:$0xff]
        %v4856 = vld [vmem:[#allocation2 + $0x380] sm:$0xff]
        %v4857 = vld [vmem:[#allocation2 + $0x3a8] sm:$0xff]
        %v4858 = vld [vmem:[#allocation2 + $0x3b0] sm:$0xff]
        %v4859 = vld [vmem:[#allocation2 + $0x3b8] sm:$0xff]
        %v4860 = vld [vmem:[#allocation2 + $0x3c0] sm:$0xff]
        %v4861 = vld [vmem:[#allocation2 + $0x3c8] sm:$0xff]
        %v4862 = vld [vmem:[#allocation2 + $0x3f0] sm:$0xff]
        %v4863 = vld [vmem:[#allocation2 + $0x3f8] sm:$0xff]
        %v4864 = vld [vmem:[#allocation2 + $0x400] sm:$0xff]
        %v4865 = vld [vmem:[#allocation2 + $0x408] sm:$0xff]
        %v4866 = vld [vmem:[#allocation2 + $0x410] sm:$0xff]
        %v4867 = vld [vmem:[#allocation2 + $0x438] sm:$0xff]
        %v4868 = vld [vmem:[#allocation2 + $0x440] sm:$0xff]
        %v4869 = vld [vmem:[#allocation2 + $0x448] sm:$0xff]
        %v4870 = vld [vmem:[#allocation2 + $0x450] sm:$0xff]
        %v4871 = vld [vmem:[#allocation2 + $0x458] sm:$0xff]
        %v4872 = vld [vmem:[#allocation2 + $0x480] sm:$0xff]
        %v4873 = vld [vmem:[#allocation2 + $0x488] sm:$0xff]
        %v4874 = vld [vmem:[#allocation2 + $0x490] sm:$0xff]
        %v4875 = vld [vmem:[#allocation2 + $0x498] sm:$0xff]
        %v4876 = vld [vmem:[#allocation2 + $0x4a0] sm:$0xff]
        %v4877 = vld [vmem:[#allocation2 + $0x4c8] sm:$0xff]
        %v4878 = vld [vmem:[#allocation2 + $0x4d0] sm:$0xff]
        %v4879 = vld [vmem:[#allocation2 + $0x4d8] sm:$0xff]
        %v4880 = vld [vmem:[#allocation2 + $0x4e0] sm:$0xff]
        %v4881 = vld [vmem:[#allocation2 + $0x4e8] sm:$0xff]
        %v4882 = vld [vmem:[#allocation2 + $0x510] sm:$0xff]
        %v4883 = vld [vmem:[#allocation2 + $0x518] sm:$0xff]
        %v4884 = vld [vmem:[#allocation2 + $0x520] sm:$0xff]
        %v4885 = vld [vmem:[#allocation2 + $0x528] sm:$0xff]
        %v4886 = vld [vmem:[#allocation2 + $0x530] sm:$0xff]
        %v4887 = vld [vmem:[#allocation2 + $0x558] sm:$0xff]
        %v4888 = vld [vmem:[#allocation2 + $0x560] sm:$0xff]
        %v4889 = vld [vmem:[#allocation2 + $0x568] sm:$0xff]
        %v4890 = vld [vmem:[#allocation2 + $0x570] sm:$0xff]
        %v4891 = vld [vmem:[#allocation2 + $0x578] sm:$0xff]
        %v4892 = vld [vmem:[#allocation2 + $0x5a0] sm:$0xff]
        %v4893 = vld [vmem:[#allocation2 + $0x5a8] sm:$0xff]
        %v4894 = vld [vmem:[#allocation2 + $0x5b0] sm:$0xff]
        %v4895 = vld [vmem:[#allocation2 + $0x5b8] sm:$0xff]
        %v4896 = vld [vmem:[#allocation2 + $0x5c0] sm:$0xff]
        %v4897 = vld [vmem:[#allocation2 + $0x5e8] sm:$0xff]
        %v4898 = vld [vmem:[#allocation2 + $0x5f0] sm:$0xff]
        %v4899 = vld [vmem:[#allocation2 + $0x5f8] sm:$0xff]
        %v4900 = vld [vmem:[#allocation2 + $0x600] sm:$0xff]
        %v4901 = vld [vmem:[#allocation2 + $0x608] sm:$0xff]
        %v4902 = vld [vmem:[#allocation2 + $0x630] sm:$0xff]
        %v4903 = vld [vmem:[#allocation2 + $0x638] sm:$0xff]
        %v4904 = vld [vmem:[#allocation2 + $0x640] sm:$0xff]
        %v4905 = vld [vmem:[#allocation2 + $0x648] sm:$0xff]
        %v4906 = vld [vmem:[#allocation2 + $0x650] sm:$0xff]
        %v4907 = vld [vmem:[#allocation2 + $0x678] sm:$0xff]
        %v4908 = vld [vmem:[#allocation2 + $0x680] sm:$0xff]
        %v4909 = vld [vmem:[#allocation2 + $0x688] sm:$0xff]
        %v4910 = vld [vmem:[#allocation2 + $0x690] sm:$0xff]
        %v4911 = vld [vmem:[#allocation2 + $0x698] sm:$0xff]
        %v4912 = vld [vmem:[#allocation2 + $0x6c0] sm:$0xff]
        %v4913 = vld [vmem:[#allocation2 + $0x6c8] sm:$0xff]
        %v4914 = vld [vmem:[#allocation2 + $0x6d0] sm:$0xff]
        %v4915 = vld [vmem:[#allocation2 + $0x6d8] sm:$0xff]
        %v4916 = vld [vmem:[#allocation2 + $0x6e0] sm:$0xff]
        %v4917 = vld [vmem:[#allocation2 + $0x708] sm:$0xff]
        %v4918 = vld [vmem:[#allocation2 + $0x710] sm:$0xff]
        %v4919 = vld [vmem:[#allocation2 + $0x718] sm:$0xff]
        %v4920 = vld [vmem:[#allocation2 + $0x720] sm:$0xff]
        %v4921 = vld [vmem:[#allocation2 + $0x728] sm:$0xff]
        %v4922 = vld [vmem:[#allocation2 + $0x750] sm:$0xff]
        %v4923 = vld [vmem:[#allocation2 + $0x758] sm:$0xff]
        %v4924 = vld [vmem:[#allocation2 + $0x760] sm:$0xff]
        %v4925 = vld [vmem:[#allocation2 + $0x768] sm:$0xff]
        %v4926 = vld [vmem:[#allocation2 + $0x770] sm:$0xff]
        %v4927 = vld [vmem:[%s4] sm:$0xff]
        %v4928 = vld [vmem:[%s4 + $0x8] sm:$0xff]
        %4930 = vset.pattern.permute.xlu0 0
        %4931 = vperm.xlu0 %4930, %v4927
        %v4932 = vpop.permute.xlu0 %4931
        %4935 = vset.pattern.permute.xlu0 0
        %4936 = vperm.xlu0 %4935, %v4928
        %v4937 = vpop.permute.xlu0 %4936
        %v4943 = vunpack.c.l.b16 %v4788
        %v4944 = vunpack.c.h.b16 %v4788
        %v4945 = vunpack.c.l.b16 %v4789
        %v4946 = vunpack.c.h.b16 %v4789
        %v4947 = vunpack.c.l.b16 %v4790
        %v4948 = vunpack.c.h.b16 %v4790
        %v4949 = vunpack.c.l.b16 %v4791
        %v4950 = vunpack.c.h.b16 %v4791
        %v4951 = vpack.c.b16 %v4947, %v4943
        %v4952 = vpack.c.b16 %v4948, %v4944
        %v4953 = vpack.c.b16 %v4949, %v4945
        %v4954 = vpack.c.b16 %v4950, %v4946
        %v4959 = vsel %vm3212, %v4954, 0
        %4961 = vmatprep.subr.bf16.mxu0 %v4793
        %4962 = vmatpush1.bf16.msra.mxu0 %v4792
        %4963 = vmatprep.subr.bf16.mxu0 %v4798
        %4964 = vmatpush1.bf16.msra.mxu0 %v4797
        %4965 = vmatprep.subr.bf16.mxu0 %v4803
        %4966 = vmatpush1.bf16.msra.mxu0 %v4802
        %4967 = vmatprep.subr.bf16.mxu0 %v4808
        %4968 = vmatpush1.bf16.msra.mxu0 %v4807
        %4969 = vmatprep.subr.bf16.mxu0 %v4813
        %4970 = vmatpush1.bf16.msra.mxu0 %v4812
        %4971 = vmatprep.subr.bf16.mxu0 %v4818
        %4972 = vmatpush1.bf16.msra.mxu0 %v4817
        %4973 = vmatprep.subr.bf16.mxu0 %v4823
        %4974 = vmatpush1.bf16.msra.mxu0 %v4822
        %4975 = vmatprep.subr.bf16.mxu0 %v4828
        %4976 = vmatpush1.bf16.msra.mxu0 %v4827
        %4977 = vmatprep.subr.bf16.mxu0 %v4833
        %4978 = vmatpush1.bf16.msra.mxu0 %v4832
        %4979 = vmatprep.subr.bf16.mxu0 %v4838
        %4980 = vmatpush1.bf16.msra.mxu0 %v4837
        %4981 = vmatprep.subr.bf16.mxu0 %v4843
        %4982 = vmatpush1.bf16.msra.mxu0 %v4842
        %4983 = vmatprep.subr.bf16.mxu0 %v4848
        %4984 = vmatpush1.bf16.msra.mxu0 %v4847
        %4985 = vmatprep.subr.bf16.mxu0 %v4853
        %4986 = vmatpush1.bf16.msra.mxu0 %v4852
        %4987 = vmatprep.subr.bf16.mxu0 %v4858
        %4988 = vmatpush1.bf16.msra.mxu0 %v4857
        %4989 = vmatprep.subr.bf16.mxu0 %v4863
        %4990 = vmatpush1.bf16.msra.mxu0 %v4862
        %4991 = vmatprep.subr.bf16.mxu0 %v4868
        %4992 = vmatpush1.bf16.msra.mxu0 %v4867
        %4993 = vmatprep.mubr.bf16.mxu0 %v4952
        %4994 = vmatmul.mubr.bf16.gmra.mrb[0].mxu0 %v4951
        %v4995 = vpop.f32.mrb[0].mxu0
        %v4996 = vadd.f32 %v4932, %v4995
        %v4997 = vpop.f32.mrb[0].mxu0
        %v4998 = vadd.f32 %v4932, %v4997
        %v4999 = vpop.f32.mrb[0].mxu0
        %v5000 = vadd.f32 %v4937, %v4999
        %v5001 = vpop.f32.mrb[0].mxu0
        %v5002 = vadd.f32 %v4937, %v5001
        %5003 = vdwg.mxu0
        %5004 = vmatprep.subr.bf16.mxu0 %v4873
        %5005 = vmatpush1.bf16.msra.mxu0 %v4872
        %5006 = vmatprep.subr.bf16.mxu0 %v4878
        %5007 = vmatpush1.bf16.msra.mxu0 %v4877
        %5008 = vmatprep.subr.bf16.mxu0 %v4883
        %5009 = vmatpush1.bf16.msra.mxu0 %v4882
        %5010 = vmatprep.subr.bf16.mxu0 %v4888
        %5011 = vmatpush1.bf16.msra.mxu0 %v4887
        %5012 = vmatprep.subr.bf16.mxu0 %v4893
        %5013 = vmatpush1.bf16.msra.mxu0 %v4892
        %5014 = vmatprep.subr.bf16.mxu0 %v4898
        %5015 = vmatpush1.bf16.msra.mxu0 %v4897
        %5016 = vmatprep.subr.bf16.mxu0 %v4903
        %5017 = vmatpush1.bf16.msra.mxu0 %v4902
        %5018 = vmatprep.subr.bf16.mxu0 %v4908
        %5019 = vmatpush1.bf16.msra.mxu0 %v4907
        %5020 = vmatprep.subr.bf16.mxu0 %v4913
        %5021 = vmatpush1.bf16.msra.mxu0 %v4912
        %5022 = vmatprep.subr.bf16.mxu0 %v4918
        %5023 = vmatpush1.bf16.msra.mxu0 %v4917
        %5024 = vmatprep.subr.bf16.mxu0 %v4923
        %5025 = vmatpush1.bf16.msra.mxu0 %v4922
        %5026 = vmatprep.subr.bf16.mxu0 0
        %5027 = vmatpush1.bf16.msra.mxu0 0
        %5028 = vmatprep.subr.bf16.mxu0 0
        %5029 = vmatpush1.bf16.msra.mxu0 0
        %5030 = vmatprep.subr.bf16.mxu0 0
        %5031 = vmatpush1.bf16.msra.mxu0 0
        %5032 = vmatprep.subr.bf16.mxu0 0
        %5033 = vmatpush1.bf16.msra.mxu0 0
        %5034 = vmatprep.subr.bf16.mxu0 0
        %5035 = vmatpush1.bf16.msra.mxu0 0
        %5036 = vmatprep.mubr.bf16.mxu0 %v4959
        %5037 = vmatmul.mubr.bf16.gmra.mrb[0].mxu0 %v4953
        %v5038 = vpop.f32.mrb[0].mxu0
        %v5039 = vadd.f32 %v4996, %v5038
        %v5040 = vpop.f32.mrb[0].mxu0
        %v5041 = vadd.f32 %v4998, %v5040
        %v5042 = vpop.f32.mrb[0].mxu0
        %v5043 = vadd.f32 %v5000, %v5042
        %v5044 = vpop.f32.mrb[0].mxu0
        %v5045 = vadd.f32 %v5002, %v5044
        %5046 = vdwg.mxu0
        %5047 = vmatprep.subr.bf16.mxu0 %v4795
        %5048 = vmatpush1.bf16.msra.mxu0 %v4794
        %5049 = vmatprep.subr.bf16.mxu0 %v4800
        %5050 = vmatpush1.bf16.msra.mxu0 %v4799
        %5051 = vmatprep.subr.bf16.mxu0 %v4805
        %5052 = vmatpush1.bf16.msra.mxu0 %v4804
        %5053 = vmatprep.subr.bf16.mxu0 %v4810
        %5054 = vmatpush1.bf16.msra.mxu0 %v4809
        %5055 = vmatprep.subr.bf16.mxu0 %v4815
        %5056 = vmatpush1.bf16.msra.mxu0 %v4814
        %5057 = vmatprep.subr.bf16.mxu0 %v4820
        %5058 = vmatpush1.bf16.msra.mxu0 %v4819
        %5059 = vmatprep.subr.bf16.mxu0 %v4825
        %5060 = vmatpush1.bf16.msra.mxu0 %v4824
        %5061 = vmatprep.subr.bf16.mxu0 %v4830
        %5062 = vmatpush1.bf16.msra.mxu0 %v4829
        %5063 = vmatprep.subr.bf16.mxu0 %v4835
        %5064 = vmatpush1.bf16.msra.mxu0 %v4834
        %5065 = vmatprep.subr.bf16.mxu0 %v4840
        %5066 = vmatpush1.bf16.msra.mxu0 %v4839
        %5067 = vmatprep.subr.bf16.mxu0 %v4845
        %5068 = vmatpush1.bf16.msra.mxu0 %v4844
        %5069 = vmatprep.subr.bf16.mxu0 %v4850
        %5070 = vmatpush1.bf16.msra.mxu0 %v4849
        %5071 = vmatprep.subr.bf16.mxu0 %v4855
        %5072 = vmatpush1.bf16.msra.mxu0 %v4854
        %5073 = vmatprep.subr.bf16.mxu0 %v4860
        %5074 = vmatpush1.bf16.msra.mxu0 %v4859
        %5075 = vmatprep.subr.bf16.mxu0 %v4865
        %5076 = vmatpush1.bf16.msra.mxu0 %v4864
        %5077 = vmatprep.subr.bf16.mxu0 %v4870
        %5078 = vmatpush1.bf16.msra.mxu0 %v4869
        %5079 = vmatprep.mubr.bf16.mxu0 %v4952
        %5080 = vmatmul.mubr.bf16.gmra.mrb[0].mxu0 %v4951
        %v5081 = vpop.f32.mrb[0].mxu0
        %v5082 = vadd.f32 %v4932, %v5081
        %v5083 = vpop.f32.mrb[0].mxu0
        %v5084 = vadd.f32 %v4932, %v5083
        %v5085 = vpop.f32.mrb[0].mxu0
        %v5086 = vadd.f32 %v4937, %v5085
        %v5087 = vpop.f32.mrb[0].mxu0
        %v5088 = vadd.f32 %v4937, %v5087
        %5089 = vdwg.mxu0
        %5090 = vmatprep.subr.bf16.mxu0 %v4875
        %5091 = vmatpush1.bf16.msra.mxu0 %v4874
        %5092 = vmatprep.subr.bf16.mxu0 %v4880
        %5093 = vmatpush1.bf16.msra.mxu0 %v4879
        %5094 = vmatprep.subr.bf16.mxu0 %v4885
        %5095 = vmatpush1.bf16.msra.mxu0 %v4884
        %5096 = vmatprep.subr.bf16.mxu0 %v4890
        %5097 = vmatpush1.bf16.msra.mxu0 %v4889
        %5098 = vmatprep.subr.bf16.mxu0 %v4895
        %5099 = vmatpush1.bf16.msra.mxu0 %v4894
        %5100 = vmatprep.subr.bf16.mxu0 %v4900
        %5101 = vmatpush1.bf16.msra.mxu0 %v4899
        %5102 = vmatprep.subr.bf16.mxu0 %v4905
        %5103 = vmatpush1.bf16.msra.mxu0 %v4904
        %5104 = vmatprep.subr.bf16.mxu0 %v4910
        %5105 = vmatpush1.bf16.msra.mxu0 %v4909
        %5106 = vmatprep.subr.bf16.mxu0 %v4915
        %5107 = vmatpush1.bf16.msra.mxu0 %v4914
        %5108 = vmatprep.subr.bf16.mxu0 %v4920
        %5109 = vmatpush1.bf16.msra.mxu0 %v4919
        %5110 = vmatprep.subr.bf16.mxu0 %v4925
        %5111 = vmatpush1.bf16.msra.mxu0 %v4924
        %5112 = vmatprep.subr.bf16.mxu0 0
        %5113 = vmatpush1.bf16.msra.mxu0 0
        %5114 = vmatprep.subr.bf16.mxu0 0
        %5115 = vmatpush1.bf16.msra.mxu0 0
        %5116 = vmatprep.subr.bf16.mxu0 0
        %5117 = vmatpush1.bf16.msra.mxu0 0
        %5118 = vmatprep.subr.bf16.mxu0 0
        %5119 = vmatpush1.bf16.msra.mxu0 0
        %5120 = vmatprep.subr.bf16.mxu0 0
        %5121 = vmatpush1.bf16.msra.mxu0 0
        %5122 = vmatprep.mubr.bf16.mxu0 %v4959
        %5123 = vmatmul.mubr.bf16.gmra.mrb[0].mxu0 %v4953
        %v5124 = vpop.f32.mrb[0].mxu0
        %v5125 = vadd.f32 %v5082, %v5124
        %v5126 = vpop.f32.mrb[0].mxu0
        %v5127 = vadd.f32 %v5084, %v5126
        %v5128 = vpop.f32.mrb[0].mxu0
        %v5129 = vadd.f32 %v5086, %v5128
        %v5130 = vpop.f32.mrb[0].mxu0
        %v5131 = vadd.f32 %v5088, %v5130
        %5132 = vdwg.mxu0
        %5133 = vmatprep.subr.bf16.mxu0 0
        %5134 = vmatpush1.bf16.msra.mxu0 %v4796
        %5135 = vmatprep.subr.bf16.mxu0 0
        %5136 = vmatpush1.bf16.msra.mxu0 %v4801
        %5137 = vmatprep.subr.bf16.mxu0 0
        %5138 = vmatpush1.bf16.msra.mxu0 %v4806
        %5139 = vmatprep.subr.bf16.mxu0 0
        %5140 = vmatpush1.bf16.msra.mxu0 %v4811
        %5141 = vmatprep.subr.bf16.mxu0 0
        %5142 = vmatpush1.bf16.msra.mxu0 %v4816
        %5143 = vmatprep.subr.bf16.mxu0 0
        %5144 = vmatpush1.bf16.msra.mxu0 %v4821
        %5145 = vmatprep.subr.bf16.mxu0 0
        %5146 = vmatpush1.bf16.msra.mxu0 %v4826
        %5147 = vmatprep.subr.bf16.mxu0 0
        %5148 = vmatpush1.bf16.msra.mxu0 %v4831
        %5149 = vmatprep.subr.bf16.mxu0 0
        %5150 = vmatpush1.bf16.msra.mxu0 %v4836
        %5151 = vmatprep.subr.bf16.mxu0 0
        %5152 = vmatpush1.bf16.msra.mxu0 %v4841
        %5153 = vmatprep.subr.bf16.mxu0 0
        %5154 = vmatpush1.bf16.msra.mxu0 %v4846
        %5155 = vmatprep.subr.bf16.mxu0 0
        %5156 = vmatpush1.bf16.msra.mxu0 %v4851
        %5157 = vmatprep.subr.bf16.mxu0 0
        %5158 = vmatpush1.bf16.msra.mxu0 %v4856
        %5159 = vmatprep.subr.bf16.mxu0 0
        %5160 = vmatpush1.bf16.msra.mxu0 %v4861
        %5161 = vmatprep.subr.bf16.mxu0 0
        %5162 = vmatpush1.bf16.msra.mxu0 %v4866
        %5163 = vmatprep.subr.bf16.mxu0 0
        %5164 = vmatpush1.bf16.msra.mxu0 %v4871
        %5165 = vmatprep.mubr.bf16.mxu0 %v4952
        %5166 = vmatmul.mubr.bf16.gmra.mrb[0].mxu0 %v4951
        %v5167 = vpop.f32.mrb[0].mxu0
        %v5168 = vadd.f32 %v4932, %v5167
        %v5169 = vpop.f32.mrb[0].mxu0
        %v5170 = vpop.f32.mrb[0].mxu0
        %v5171 = vadd.f32 %v4937, %v5170
        %v5172 = vpop.f32.mrb[0].mxu0
        %5173 = vdwg.mxu0
        %5174 = vmatprep.subr.bf16.mxu0 0
        %5175 = vmatpush1.bf16.msra.mxu0 %v4876
        %5176 = vmatprep.subr.bf16.mxu0 0
        %5177 = vmatpush1.bf16.msra.mxu0 %v4881
        %5178 = vmatprep.subr.bf16.mxu0 0
        %5179 = vmatpush1.bf16.msra.mxu0 %v4886
        %5180 = vmatprep.subr.bf16.mxu0 0
        %5181 = vmatpush1.bf16.msra.mxu0 %v4891
        %5182 = vmatprep.subr.bf16.mxu0 0
        %5183 = vmatpush1.bf16.msra.mxu0 %v4896
        %5184 = vmatprep.subr.bf16.mxu0 0
        %5185 = vmatpush1.bf16.msra.mxu0 %v4901
        %5186 = vmatprep.subr.bf16.mxu0 0
        %5187 = vmatpush1.bf16.msra.mxu0 %v4906
        %5188 = vmatprep.subr.bf16.mxu0 0
        %5189 = vmatpush1.bf16.msra.mxu0 %v4911
        %5190 = vmatprep.subr.bf16.mxu0 0
        %5191 = vmatpush1.bf16.msra.mxu0 %v4916
        %5192 = vmatprep.subr.bf16.mxu0 0
        %5193 = vmatpush1.bf16.msra.mxu0 %v4921
        %5194 = vmatprep.subr.bf16.mxu0 0
        %5195 = vmatpush1.bf16.msra.mxu0 %v4926
        %5196 = vmatprep.subr.bf16.mxu0 0
        %5197 = vmatpush1.bf16.msra.mxu0 0
        %5198 = vmatprep.subr.bf16.mxu0 0
        %5199 = vmatpush1.bf16.msra.mxu0 0
        %5200 = vmatprep.subr.bf16.mxu0 0
        %5201 = vmatpush1.bf16.msra.mxu0 0
        %5202 = vmatprep.subr.bf16.mxu0 0
        %5203 = vmatpush1.bf16.msra.mxu0 0
        %5204 = vmatprep.subr.bf16.mxu0 0
        %5205 = vmatpush1.bf16.msra.mxu0 0
        %5206 = vmatprep.mubr.bf16.mxu0 %v4959
        %5207 = vmatmul.mubr.bf16.gmra.mrb[0].mxu0 %v4953
        %v5208 = vpop.f32.mrb[0].mxu0
        %v5209 = vadd.f32 %v5168, %v5208
        %v5210 = vpop.f32.mrb[0].mxu0
        %v5211 = vpop.f32.mrb[0].mxu0
        %v5212 = vadd.f32 %v5171, %v5211
        %v5213 = vpop.f32.mrb[0].mxu0
        %5214 = vdwg.mxu0
        %v5215 = vmax.f32 %v5039, 0.0
        %v5216 = vmax.f32 %v5041, 0.0
        %v5217 = vmax.f32 %v5125, 0.0
        %v5218 = vmax.f32 %v5127, 0.0
        %v5219 = vmax.f32 %v5209, 0.0
        %v5220 = vmax.f32 %v5043, 0.0
        %v5221 = vmax.f32 %v5045, 0.0
        %v5222 = vmax.f32 %v5129, 0.0
        %v5223 = vmax.f32 %v5131, 0.0
        %v5224 = vmax.f32 %v5212, 0.0
        %5225 = vst [vmem:[%s315] sm:$0xff] %v5215
        %5226 = vst [vmem:[%s315 + $0x8] sm:$0xff] %v5216
        %5227 = vst [vmem:[%s315 + $0x10] sm:$0xff] %v5217
        %5228 = vst [vmem:[%s315 + $0x18] sm:$0xff] %v5218
        %5229 = vst [vmem:[%s315 + $0x20] sm:$0xff] %v5219
        %5230 = vst [vmem:[%s315 + $0x28] sm:$0xff] %v5220
        %5231 = vst [vmem:[%s315 + $0x30] sm:$0xff] %v5221
        %5232 = vst [vmem:[%s315 + $0x38] sm:$0xff] %v5222
        %5233 = vst [vmem:[%s315 + $0x40] sm:$0xff] %v5223
        %5234 = vst [vmem:[%s315 + $0x48] sm:$0xff] %v5224
        %s5235 = sand.u32 %s184, 1
        %s5236 = scalar_lea.sflag [#allocation6], %s5235
        %s5237 = sand.u32 %s184, 1
        %s5238 = smul.addr %s5237, 80
        %s5239 = scalar_lea.vmem [#allocation9], %s5238
        // Predicated region
        $region53: #{tpu_custom_call.1} parent=43 // pred_check
          %p5240 = pneg %p194
        $region54: #{tpu_custom_call.1} parent=43 // pred_check_branch
          %5242 = sbr.rel (%p5240) target = $region56
        $region55: #{tpu_custom_call.1} parent=43 // pred_region
          %s5244 = ssub.s32 1280, 1280
          %5245 = vsyncadd %s5236, %s5244
          %s5246 = smul.addr %s29, 10
          %s5247 = smul.addr %s28, 20
          %s5248 = sadd.s32 %s5246, %s5247
          %s5249 = smul.addr %s5248, 128
          %s5250 = scalar_lea.hbm %s6, %s5249
          %s5251 = sshll.u32 %s5239, 4
          %s5252 = int_to_ptr.vmem [resolvable:$true] %s5251
          %5257 = dma.vmem_to_hbm [thread:$0]  %s5252, 1280, %s5250, %s5236, 640, 640, 40
        $region56: #{tpu_custom_call.1} parent=43 // pred_fallthru
          _
      $region44: #{tpu_custom_call.1} parent=5 // pred_fallthru
        _
      %p5258 = scmp.le.s32.totalorder 2, %s19
      // Predicated region
      $region57: #{tpu_custom_call.1} parent=5 // pred_check
        %p5259 = pneg %p5258
      $region58: #{tpu_custom_call.1} parent=5 // pred_check_branch
        %5261 = sbr.rel (%p5259) target = $region60
      $region59: #{tpu_custom_call.1} parent=5 // pred_region
        %s5262 = ssub.s32 %s19, 2
        // Predicated region
        $region61: #{tpu_custom_call.1} parent=59 // pred_check
          %p5263 = pneg %p200
        $region62: #{tpu_custom_call.1} parent=59 // pred_check_branch
          %5265 = sbr.rel (%p5263) target = $region64
        $region63: #{tpu_custom_call.1} parent=59 // pred_region
          %s5266 = sand.u32 %s185, 1
          %s5267 = scalar_lea.sflag [#allocation6], %s5266
          %s5268 = sand.u32 %s185, 1
          %s5269 = smul.addr %s5268, 80
          %s5270 = scalar_lea.vmem [#allocation9], %s5269
          %5271 = dma.done %s5267, 1280
        $region64: #{tpu_custom_call.1} parent=59 // pred_fallthru
          _
      $region60: #{tpu_custom_call.1} parent=5 // pred_fallthru
        _
    $region6: #{tpu_custom_call.1} parent=1 // loop_footer
      %s23 = sadd.s32 1, %s19
    $region7: #{tpu_custom_call.1} parent=1 // loop_footer_branch
      %18 = sbr.rel target = $region3
    $region8: #{tpu_custom_call.1} parent=1 // loop_exit
      _
    %5272 = vsyncpa [#allocation5], 1
    %s5273 = scalar_lea.sflag [#allocation5], 1
    %5274 = vsyncpa %s5273, 1
    %5275 = vsyncpa [#allocation8], 1
    %5276 = vsyncpa [#allocation6], 1
    %s5277 = scalar_lea.sflag [#allocation6], 1
    %5278 = vsyncpa %s5277, 1

</llo_original>
